<compile_context>
chip_gen: v5e
topology: v5e:2x2
jax: 0.10.0
libtpu: 0.0.40
codegen_flags: <defaults>
</compile_context>

<pallas_src>
import jax
import jax.numpy as jnp
from jax.experimental import pallas as pl
from jax.experimental.pallas import tpu as pltpu


def _ceil_to(x, m):
    return -(-x // m) * m


def _vmem():
    # full array resident in VMEM, no tiling (all shapes here are tiny)
    return pl.BlockSpec(memory_space=pltpu.MemorySpace.VMEM)


def listening_agent_forward(params, message, msg_mask3, cand_onehot, cand_mask):
    T, B, Vm = message.shape
    C, _, L, Vc = cand_onehot.shape
    H = params['E_msg'].shape[1]

    BP = _ceil_to(B, 8)                 # batch padded to one sublane tile
    LP = _ceil_to(L, 8)                 # candidate length padded to one sublane tile
    VP = _ceil_to(max(Vm, Vc), 8)       # common (padded) one-hot width
    LANE = 128
    SLAB_W = max(LANE, 4 * H)           # param slab lane width (4H == 128 for H = 32)
    G4 = 4 * H

    TB = T * BP                         # message token rows
    N = C * BP * LP                     # candidate token rows
    CB = C * BP                         # candidate groups (C folded into padded batch)

    # ----------------- wrapper-side layout plumbing (free, outside kernel) -----------------
    def _pad_to(a, shape):
        return jnp.pad(a, [(0, s - d) for d, s in zip(a.shape, shape)])

    msg_p = _pad_to(message.astype(jnp.float32), (T, BP, VP)).reshape(TB, VP)
    coh_p = _pad_to(cand_onehot.astype(jnp.float32), (C, BP, LP, VP)).reshape(N, VP)
    tok = jnp.concatenate([msg_p, coh_p], axis=0)                       # (TB + N, VP)

    mmask_p = _pad_to(msg_mask3.astype(jnp.float32), (T, BP, 1)).reshape(TB, 1)
    cmask_p = _pad_to(cand_mask.astype(jnp.float32), (C, BP, LP)).reshape(N, 1)
    msk = jnp.concatenate([mmask_p, cmask_p], axis=0)                   # (TB + N, 1)

    # one 128-lane parameter slab: each tensor at a static, 8-row-aligned offset
    blocks = []
    ofs = {}

    def _add(name, a, rows=None):
        a = a.astype(jnp.float32)
        r = rows if rows is not None else _ceil_to(a.shape[0], 8)
        blk = jnp.zeros((r, SLAB_W), jnp.float32).at[:a.shape[0], :a.shape[1]].set(a)
        ofs[name] = sum(b.shape[0] for b in blocks)
        blocks.append(blk)

    _add('E_msg', params['E_msg'], rows=VP)   # (Vm, H) padded to (VP, H)
    _add('Wx', params['Wx'])                  # (H, 4H)
    _add('Wh', params['Wh'])                  # (H, 4H)
    _add('b', params['b_lstm'])               # (1, 4H)
    _add('E_voc', params['E_voc'], rows=VP)   # (Vc, H) padded to (VP, H)
    _add('Wa', params['Wa'])                  # (H, H)
    _add('ba', params['ba'])                  # (1, H)
    _add('va', params['va'])                  # (H, 1)
    _add('Wo', params['Wo'])                  # (H, H)
    _add('bo', params['bo'])                  # (1, H)
    slab = jnp.concatenate(blocks, axis=0)    # (R_total, SLAB_W)

    def kernel(tok_ref, msk_ref, par_ref, out_ref):
        f32 = jnp.float32

        # static, sublane-aligned slices out of the packed parameter slab
        emsg = par_ref[ofs['E_msg']:ofs['E_msg'] + VP, 0:H]
        wx = par_ref[ofs['Wx']:ofs['Wx'] + H, 0:G4]
        wh = par_ref[ofs['Wh']:ofs['Wh'] + H, 0:G4]
        b_l = par_ref[ofs['b']:ofs['b'] + 1, 0:G4]
        evoc = par_ref[ofs['E_voc']:ofs['E_voc'] + VP, 0:H]
        wa = par_ref[ofs['Wa']:ofs['Wa'] + H, 0:H]
        ba = par_ref[ofs['ba']:ofs['ba'] + 1, 0:H]
        va = par_ref[ofs['va']:ofs['va'] + H, 0:1]
        wo = par_ref[ofs['Wo']:ofs['Wo'] + H, 0:H]
        bo = par_ref[ofs['bo']:ofs['bo'] + 1, 0:H]

        # ---------------- message path: relu-embed + masked LSTM (SeqEncoder) ----------------
        # Hoisted input projection (bias folded in); recurrence only does h @ Wh + gate math.
        msg_tok = tok_ref[0:TB, :]                                           # (T*BP, VP)
        xe = jnp.maximum(jnp.dot(msg_tok, emsg, preferred_element_type=f32), 0.0)
        xp = jnp.dot(xe, wx, preferred_element_type=f32) + b_l               # (T*BP, 4H)

        h = jnp.zeros((BP, H), f32)
        c = jnp.zeros((BP, H), f32)
        # Fully unrolled (T static & small); all slices are (8, *) sublane-tile aligned.
        for t in range(T):
            gates = xp[t * BP:(t + 1) * BP, :] + jnp.dot(h, wh,
                                                         preferred_element_type=f32)
            sig = jax.nn.sigmoid(gates)      # one EUP pass over the full 128-lane vreg
            th = jnp.tanh(gates)             # one EUP pass over the full 128-lane vreg
            i_g = sig[:, 0 * H:1 * H]
            f_g = sig[:, 1 * H:2 * H]
            g_g = th[:, 2 * H:3 * H]
            o_g = sig[:, 3 * H:4 * H]
            c_new = f_g * c + i_g * g_g
            h_new = o_g * jnp.tanh(c_new)
            m = msk_ref[t * BP:(t + 1) * BP, :]                              # (BP, 1)
            h = m * h_new + (1.0 - m) * h
            c = m * c_new + (1.0 - m) * c
        msg_hidden = h                                                       # (BP, H)

        # ------------- candidate path: embed + masked attention pool (SetEncoder) ------------
        cand_tok = tok_ref[TB:TB + N, :]                                     # (N, VP)
        cmask = msk_ref[TB:TB + N, :]                                        # (N, 1)
        emb = jnp.dot(cand_tok, evoc, preferred_element_type=f32)            # (N, H)
        feat = jnp.tanh(jnp.dot(emb, wa, preferred_element_type=f32) + ba)   # (N, H)
        scores = jnp.dot(feat, va, preferred_element_type=f32)               # (N, 1)

        s = jnp.where(cmask > 0.0, scores, jnp.float32(-1e30))               # (N, 1)
        # Sublane-aligned segment reduction: LP == 8 rows per group, so these reshapes are
        # tile-aligned splits of the sublane axis (no lane<->sublane relayout).
        s3 = s.reshape(CB, LP, 1)
        v3 = cmask.reshape(CB, LP, 1)
        emb3 = emb.reshape(CB, LP, H)
        smax = jnp.max(s3, axis=1, keepdims=True)                            # per-group max
        e3 = jnp.exp(s3 - smax) * v3                                         # (CB, LP, 1)
        denom = jnp.sum(e3, axis=1) + 1e-9                                   # (CB, 1)
        pooled = jnp.sum(e3 * emb3, axis=1) / denom                          # (CB, H)
        can_hidden = jnp.tanh(
            jnp.dot(pooled, wo, preferred_element_type=f32) + bo)            # (CB, H)

        # ------------- choose: logits[c*BP+b] = <can_hidden[c*BP+b], msg_hidden[b]> ----------
        msg_rep = jnp.concatenate([msg_hidden] * C, axis=0)                  # (CB, H), aligned
        logits_col = jnp.sum(can_hidden * msg_rep, axis=-1, keepdims=True)   # (CB, 1)
        # Lane-dense store (unmasked vst); sliced back in the wrapper.
        out_ref[...] = jnp.broadcast_to(logits_col, (CB, LANE))

    out = pl.pallas_call(
        kernel,
        out_shape=jax.ShapeDtypeStruct((CB, LANE), jnp.float32),
        in_specs=[_vmem(), _vmem(), _vmem()],
        out_specs=_vmem(),
    )(tok, msk, slab)

    # (C*BP,) -> (C, BP) -> drop batch padding -> (B, C): trivial plumbing outside the kernel.
    logits = out[:, 0].reshape(C, BP)[:, :B].transpose(1, 0)
    return logits


def reference_forward(params, message, msg_mask3, cand_onehot, cand_mask):
    """Pure-JAX reference with the same semantics (for a sanity check)."""
    T, B, Vm = message.shape
    C, _, L, Vc = cand_onehot.shape
    H = params['E_msg'].shape[1]
    with jax.default_matmul_precision('highest'):
        x = jax.nn.relu(jnp.einsum('tbv,vh->tbh', message, params['E_msg']))
        h = jnp.zeros((B, H), jnp.float32)
        c = jnp.zeros((B, H), jnp.float32)
        for t in range(T):
            gates = x[t] @ params['Wx'] + h @ params['Wh'] + params['b_lstm']
            i = jax.nn.sigmoid(gates[:, :H])
            f = jax.nn.sigmoid(gates[:, H:2 * H])
            g = jnp.tanh(gates[:, 2 * H:3 * H])
            o = jax.nn.sigmoid(gates[:, 3 * H:])
            cn = f * c + i * g
            hn = o * jnp.tanh(cn)
            m = msg_mask3[t]
            h = m * hn + (1.0 - m) * h
            c = m * cn + (1.0 - m) * c
        emb = jnp.einsum('cblv,vh->cblh', cand_onehot, params['E_voc'])
        feat = jnp.tanh(jnp.einsum('cblh,hk->cblk', emb, params['Wa']) + params['ba'])
        scores = jnp.einsum('cblh,hk->cblk', feat, params['va'])[..., 0]
        valid = (cand_mask > 0).astype(jnp.float32)
        s = jnp.where(cand_mask > 0, scores, -1e30)
        s = s - jnp.max(s, axis=-1, keepdims=True)
        e = jnp.exp(s) * valid
        w = e / (jnp.sum(e, axis=-1, keepdims=True) + 1e-9)
        pooled = jnp.einsum('cbl,cblh->cbh', w, emb)
        ch = jnp.tanh(jnp.einsum('cbh,hk->cbk', pooled, params['Wo']) + params['bo'])
        logits = jnp.einsum('cbh,bh->bc', ch, h)
    return logits


if __name__ == "__main__":
    # small shapes consistent with the module
    B, T, Vm, Vc, H, C, L = 2, 8, 10, 11, 32, 4, 6

    key = jax.random.PRNGKey(0)
    ks = jax.random.split(key, 16)

    params = dict(
        E_voc=0.1 * jax.random.normal(ks[0], (Vc, H), jnp.float32),   # self.embedding
        E_msg=0.1 * jax.random.normal(ks[1], (Vm, H), jnp.float32),   # self.msg_embedding
        Wx=0.1 * jax.random.normal(ks[2], (H, 4 * H), jnp.float32),   # SeqEncoder LSTM
        Wh=0.1 * jax.random.normal(ks[3], (H, 4 * H), jnp.float32),
        b_lstm=jnp.zeros((1, 4 * H), jnp.float32),
        Wa=0.1 * jax.random.normal(ks[4], (H, H), jnp.float32),       # SetEncoder attn
        ba=jnp.zeros((1, H), jnp.float32),
        va=0.1 * jax.random.normal(ks[5], (H, 1), jnp.float32),
        Wo=0.1 * jax.random.normal(ks[6], (H, H), jnp.float32),       # SetEncoder proj
        bo=jnp.zeros((1, H), jnp.float32),
    )

    # message: one-hot (T, B, Vm), mask (T, B, 1) with variable lengths
    msg_ids = jax.random.randint(ks[7], (T, B), 0, Vm)
    message = jax.nn.one_hot(msg_ids, Vm, dtype=jnp.float32)
    msg_lens = jnp.array([T, 5], jnp.int32)
    msg_mask3 = (jnp.arange(T)[:, None] < msg_lens[None, :]
                 ).astype(jnp.float32)[:, :, None]

    # candidates: ids (C, L, B) like the reference's per-candidate input_var (L, B)
    cand_ids = jax.random.randint(ks[8], (C, L, B), 0, Vc)
    cand_onehot = jax.nn.one_hot(
        jnp.transpose(cand_ids, (0, 2, 1)), Vc, dtype=jnp.float32)    # (C, B, L, Vc)
    cand_lens = jax.random.randint(ks[9], (C, B), 2, L + 1)
    cand_mask = (jnp.arange(L)[None, None, :] < cand_lens[:, :, None]
                 ).astype(jnp.float32)                                # (C, B, L)

    logits = listening_agent_forward(params, message, msg_mask3,
                                     cand_onehot, cand_mask)
    logits = jax.block_until_ready(logits)
    assert logits.shape == (B, C)
    assert bool(jnp.all(jnp.isfinite(logits)))

    # numerical sanity check against a pure-JAX reference
    ref = reference_forward(params, message, msg_mask3, cand_onehot, cand_mask)
    assert bool(jnp.allclose(logits, ref, atol=5e-3, rtol=5e-3))

    print("KERNEL_OK")
</pallas_src>

<mosaic_0001>
module attributes {stable_mosaic.version = 11 : i64} {
  func.func @kernel(%arg0: memref<320x16xf32, #tpu.memory_space<vmem>>, %arg1: memref<320x1xf32, #tpu.memory_space<vmem>>, %arg2: memref<216x128xf32, #tpu.memory_space<vmem>>, %arg3: memref<32x128xf32, #tpu.memory_space<vmem>>) attributes {dimension_semantics = [], scalar_prefetch = 0 : i64, scratch_operands = 0 : i64, tpu.core_type = #tpu.core_type<tc>} {
    %c0 = arith.constant 0 : index
    %c0_0 = arith.constant 0 : index
    %0 = vector.load %arg2[%c0, %c0_0] : memref<216x128xf32, #tpu.memory_space<vmem>>, vector<16x32xf32>
    %c16 = arith.constant 16 : index
    %c0_1 = arith.constant 0 : index
    %1 = vector.load %arg2[%c16, %c0_1] : memref<216x128xf32, #tpu.memory_space<vmem>>, vector<32x128xf32>
    %c48 = arith.constant 48 : index
    %c0_2 = arith.constant 0 : index
    %2 = vector.load %arg2[%c48, %c0_2] : memref<216x128xf32, #tpu.memory_space<vmem>>, vector<32x128xf32>
    %c80 = arith.constant 80 : index
    %c0_3 = arith.constant 0 : index
    %3 = vector.load %arg2[%c80, %c0_3] : memref<216x128xf32, #tpu.memory_space<vmem>>, vector<1x128xf32>
    %c88 = arith.constant 88 : index
    %c0_4 = arith.constant 0 : index
    %4 = vector.load %arg2[%c88, %c0_4] : memref<216x128xf32, #tpu.memory_space<vmem>>, vector<16x32xf32>
    %c104 = arith.constant 104 : index
    %c0_5 = arith.constant 0 : index
    %5 = vector.load %arg2[%c104, %c0_5] : memref<216x128xf32, #tpu.memory_space<vmem>>, vector<32x32xf32>
    %c136 = arith.constant 136 : index
    %c0_6 = arith.constant 0 : index
    %6 = vector.load %arg2[%c136, %c0_6] : memref<216x128xf32, #tpu.memory_space<vmem>>, vector<1x32xf32>
    %c144 = arith.constant 144 : index
    %c0_7 = arith.constant 0 : index
    %7 = vector.load %arg2[%c144, %c0_7] : memref<216x128xf32, #tpu.memory_space<vmem>>, vector<32x1xf32>
    %c176 = arith.constant 176 : index
    %c0_8 = arith.constant 0 : index
    %8 = vector.load %arg2[%c176, %c0_8] : memref<216x128xf32, #tpu.memory_space<vmem>>, vector<32x32xf32>
    %c208 = arith.constant 208 : index
    %c0_9 = arith.constant 0 : index
    %9 = vector.load %arg2[%c208, %c0_9] : memref<216x128xf32, #tpu.memory_space<vmem>>, vector<1x32xf32>
    %c0_10 = arith.constant 0 : index
    %c0_11 = arith.constant 0 : index
    %10 = vector.load %arg0[%c0_10, %c0_11] : memref<320x16xf32, #tpu.memory_space<vmem>>, vector<64x16xf32>
    %cst = arith.constant dense<0.000000e+00> : vector<64x32xf32>
    %11 = tpu.matmul %10, %0, %cst {dimension_numbers = #tpu.dot_dimension_numbers<[1], [0], [0], [1], [0, 0, 1, 1], [], []>} : vector<64x16xf32>, vector<16x32xf32>, vector<64x32xf32> -> vector<64x32xf32>
    %cst_12 = arith.constant 0.000000e+00 : f32
    %12 = vector.broadcast %cst_12 : f32 to vector<64x32xf32>
    %13 = arith.maximumf %11, %12 : vector<64x32xf32>
    %cst_13 = arith.constant dense<0.000000e+00> : vector<64x128xf32>
    %14 = tpu.matmul %13, %1, %cst_13 {dimension_numbers = #tpu.dot_dimension_numbers<[1], [0], [0], [1], [0, 0, 1, 1], [], []>} : vector<64x32xf32>, vector<32x128xf32>, vector<64x128xf32> -> vector<64x128xf32>
    %15 = vector.broadcast %3 : vector<1x128xf32> to vector<64x128xf32>
    %16 = arith.addf %14, %15 : vector<64x128xf32>
    %cst_14 = arith.constant 0.000000e+00 : f32
    %17 = vector.broadcast %cst_14 : f32 to vector<8x32xf32>
    %cst_15 = arith.constant 0.000000e+00 : f32
    %18 = vector.broadcast %cst_15 : f32 to vector<8x32xf32>
    %19 = vector.extract_strided_slice %16 {offsets = [0, 0], sizes = [8, 128], strides = [1, 1]} : vector<64x128xf32> to vector<8x128xf32>
    %cst_16 = arith.constant dense<0.000000e+00> : vector<8x128xf32>
    %20 = tpu.matmul %17, %2, %cst_16 {dimension_numbers = #tpu.dot_dimension_numbers<[1], [0], [0], [1], [0, 0, 1, 1], [], []>} : vector<8x32xf32>, vector<32x128xf32>, vector<8x128xf32> -> vector<8x128xf32>
    %21 = arith.addf %19, %20 : vector<8x128xf32>
    %22 = arith.negf %21 : vector<8x128xf32>
    %23 = math.exp %22 : vector<8x128xf32>
    %cst_17 = arith.constant 1.000000e+00 : f32
    %24 = vector.broadcast %cst_17 : f32 to vector<8x128xf32>
    %25 = arith.addf %24, %23 : vector<8x128xf32>
    %26 = arith.divf %24, %25 : vector<8x128xf32>
    %27 = math.tanh %21 : vector<8x128xf32>
    %28 = vector.extract_strided_slice %26 {offsets = [0, 0], sizes = [8, 32], strides = [1, 1]} : vector<8x128xf32> to vector<8x32xf32>
    %29 = vector.extract_strided_slice %26 {offsets = [0, 32], sizes = [8, 32], strides = [1, 1]} : vector<8x128xf32> to vector<8x32xf32>
    %30 = vector.extract_strided_slice %27 {offsets = [0, 64], sizes = [8, 32], strides = [1, 1]} : vector<8x128xf32> to vector<8x32xf32>
    %31 = vector.extract_strided_slice %26 {offsets = [0, 96], sizes = [8, 32], strides = [1, 1]} : vector<8x128xf32> to vector<8x32xf32>
    %32 = arith.mulf %29, %18 : vector<8x32xf32>
    %33 = arith.mulf %28, %30 : vector<8x32xf32>
    %34 = arith.addf %32, %33 : vector<8x32xf32>
    %35 = math.tanh %34 : vector<8x32xf32>
    %36 = arith.mulf %31, %35 : vector<8x32xf32>
    %c0_18 = arith.constant 0 : index
    %c0_19 = arith.constant 0 : index
    %37 = vector.load %arg1[%c0_18, %c0_19] : memref<320x1xf32, #tpu.memory_space<vmem>>, vector<8x1xf32>
    %38 = vector.broadcast %37 : vector<8x1xf32> to vector<8x32xf32>
    %39 = arith.mulf %38, %36 : vector<8x32xf32>
    %cst_20 = arith.constant 1.000000e+00 : f32
    %40 = vector.broadcast %cst_20 : f32 to vector<8x1xf32>
    %41 = arith.subf %40, %37 : vector<8x1xf32>
    %42 = vector.broadcast %41 : vector<8x1xf32> to vector<8x32xf32>
    %43 = arith.mulf %42, %17 : vector<8x32xf32>
    %44 = arith.addf %39, %43 : vector<8x32xf32>
    %45 = vector.broadcast %37 : vector<8x1xf32> to vector<8x32xf32>
    %46 = arith.mulf %45, %34 : vector<8x32xf32>
    %cst_21 = arith.constant 1.000000e+00 : f32
    %47 = vector.broadcast %cst_21 : f32 to vector<8x1xf32>
    %48 = arith.subf %47, %37 : vector<8x1xf32>
    %49 = vector.broadcast %48 : vector<8x1xf32> to vector<8x32xf32>
    %50 = arith.mulf %49, %18 : vector<8x32xf32>
    %51 = arith.addf %46, %50 : vector<8x32xf32>
    %52 = vector.extract_strided_slice %16 {offsets = [8, 0], sizes = [8, 128], strides = [1, 1]} : vector<64x128xf32> to vector<8x128xf32>
    %cst_22 = arith.constant dense<0.000000e+00> : vector<8x128xf32>
    %53 = tpu.matmul %44, %2, %cst_22 {dimension_numbers = #tpu.dot_dimension_numbers<[1], [0], [0], [1], [0, 0, 1, 1], [], []>} : vector<8x32xf32>, vector<32x128xf32>, vector<8x128xf32> -> vector<8x128xf32>
    %54 = arith.addf %52, %53 : vector<8x128xf32>
    %55 = arith.negf %54 : vector<8x128xf32>
    %56 = math.exp %55 : vector<8x128xf32>
    %cst_23 = arith.constant 1.000000e+00 : f32
    %57 = vector.broadcast %cst_23 : f32 to vector<8x128xf32>
    %58 = arith.addf %57, %56 : vector<8x128xf32>
    %59 = arith.divf %57, %58 : vector<8x128xf32>
    %60 = math.tanh %54 : vector<8x128xf32>
    %61 = vector.extract_strided_slice %59 {offsets = [0, 0], sizes = [8, 32], strides = [1, 1]} : vector<8x128xf32> to vector<8x32xf32>
    %62 = vector.extract_strided_slice %59 {offsets = [0, 32], sizes = [8, 32], strides = [1, 1]} : vector<8x128xf32> to vector<8x32xf32>
    %63 = vector.extract_strided_slice %60 {offsets = [0, 64], sizes = [8, 32], strides = [1, 1]} : vector<8x128xf32> to vector<8x32xf32>
    %64 = vector.extract_strided_slice %59 {offsets = [0, 96], sizes = [8, 32], strides = [1, 1]} : vector<8x128xf32> to vector<8x32xf32>
    %65 = arith.mulf %62, %51 : vector<8x32xf32>
    %66 = arith.mulf %61, %63 : vector<8x32xf32>
    %67 = arith.addf %65, %66 : vector<8x32xf32>
    %68 = math.tanh %67 : vector<8x32xf32>
    %69 = arith.mulf %64, %68 : vector<8x32xf32>
    %c8 = arith.constant 8 : index
    %c0_24 = arith.constant 0 : index
    %70 = vector.load %arg1[%c8, %c0_24] : memref<320x1xf32, #tpu.memory_space<vmem>>, vector<8x1xf32>
    %71 = vector.broadcast %70 : vector<8x1xf32> to vector<8x32xf32>
    %72 = arith.mulf %71, %69 : vector<8x32xf32>
    %cst_25 = arith.constant 1.000000e+00 : f32
    %73 = vector.broadcast %cst_25 : f32 to vector<8x1xf32>
    %74 = arith.subf %73, %70 : vector<8x1xf32>
    %75 = vector.broadcast %74 : vector<8x1xf32> to vector<8x32xf32>
    %76 = arith.mulf %75, %44 : vector<8x32xf32>
    %77 = arith.addf %72, %76 : vector<8x32xf32>
    %78 = vector.broadcast %70 : vector<8x1xf32> to vector<8x32xf32>
    %79 = arith.mulf %78, %67 : vector<8x32xf32>
    %cst_26 = arith.constant 1.000000e+00 : f32
    %80 = vector.broadcast %cst_26 : f32 to vector<8x1xf32>
    %81 = arith.subf %80, %70 : vector<8x1xf32>
    %82 = vector.broadcast %81 : vector<8x1xf32> to vector<8x32xf32>
    %83 = arith.mulf %82, %51 : vector<8x32xf32>
    %84 = arith.addf %79, %83 : vector<8x32xf32>
    %85 = vector.extract_strided_slice %16 {offsets = [16, 0], sizes = [8, 128], strides = [1, 1]} : vector<64x128xf32> to vector<8x128xf32>
    %cst_27 = arith.constant dense<0.000000e+00> : vector<8x128xf32>
    %86 = tpu.matmul %77, %2, %cst_27 {dimension_numbers = #tpu.dot_dimension_numbers<[1], [0], [0], [1], [0, 0, 1, 1], [], []>} : vector<8x32xf32>, vector<32x128xf32>, vector<8x128xf32> -> vector<8x128xf32>
    %87 = arith.addf %85, %86 : vector<8x128xf32>
    %88 = arith.negf %87 : vector<8x128xf32>
    %89 = math.exp %88 : vector<8x128xf32>
    %cst_28 = arith.constant 1.000000e+00 : f32
    %90 = vector.broadcast %cst_28 : f32 to vector<8x128xf32>
    %91 = arith.addf %90, %89 : vector<8x128xf32>
    %92 = arith.divf %90, %91 : vector<8x128xf32>
    %93 = math.tanh %87 : vector<8x128xf32>
    %94 = vector.extract_strided_slice %92 {offsets = [0, 0], sizes = [8, 32], strides = [1, 1]} : vector<8x128xf32> to vector<8x32xf32>
    %95 = vector.extract_strided_slice %92 {offsets = [0, 32], sizes = [8, 32], strides = [1, 1]} : vector<8x128xf32> to vector<8x32xf32>
    %96 = vector.extract_strided_slice %93 {offsets = [0, 64], sizes = [8, 32], strides = [1, 1]} : vector<8x128xf32> to vector<8x32xf32>
    %97 = vector.extract_strided_slice %92 {offsets = [0, 96], sizes = [8, 32], strides = [1, 1]} : vector<8x128xf32> to vector<8x32xf32>
    %98 = arith.mulf %95, %84 : vector<8x32xf32>
    %99 = arith.mulf %94, %96 : vector<8x32xf32>
    %100 = arith.addf %98, %99 : vector<8x32xf32>
    %101 = math.tanh %100 : vector<8x32xf32>
    %102 = arith.mulf %97, %101 : vector<8x32xf32>
    %c16_29 = arith.constant 16 : index
    %c0_30 = arith.constant 0 : index
    %103 = vector.load %arg1[%c16_29, %c0_30] : memref<320x1xf32, #tpu.memory_space<vmem>>, vector<8x1xf32>
    %104 = vector.broadcast %103 : vector<8x1xf32> to vector<8x32xf32>
    %105 = arith.mulf %104, %102 : vector<8x32xf32>
    %cst_31 = arith.constant 1.000000e+00 : f32
    %106 = vector.broadcast %cst_31 : f32 to vector<8x1xf32>
    %107 = arith.subf %106, %103 : vector<8x1xf32>
    %108 = vector.broadcast %107 : vector<8x1xf32> to vector<8x32xf32>
    %109 = arith.mulf %108, %77 : vector<8x32xf32>
    %110 = arith.addf %105, %109 : vector<8x32xf32>
    %111 = vector.broadcast %103 : vector<8x1xf32> to vector<8x32xf32>
    %112 = arith.mulf %111, %100 : vector<8x32xf32>
    %cst_32 = arith.constant 1.000000e+00 : f32
    %113 = vector.broadcast %cst_32 : f32 to vector<8x1xf32>
    %114 = arith.subf %113, %103 : vector<8x1xf32>
    %115 = vector.broadcast %114 : vector<8x1xf32> to vector<8x32xf32>
    %116 = arith.mulf %115, %84 : vector<8x32xf32>
    %117 = arith.addf %112, %116 : vector<8x32xf32>
    %118 = vector.extract_strided_slice %16 {offsets = [24, 0], sizes = [8, 128], strides = [1, 1]} : vector<64x128xf32> to vector<8x128xf32>
    %cst_33 = arith.constant dense<0.000000e+00> : vector<8x128xf32>
    %119 = tpu.matmul %110, %2, %cst_33 {dimension_numbers = #tpu.dot_dimension_numbers<[1], [0], [0], [1], [0, 0, 1, 1], [], []>} : vector<8x32xf32>, vector<32x128xf32>, vector<8x128xf32> -> vector<8x128xf32>
    %120 = arith.addf %118, %119 : vector<8x128xf32>
    %121 = arith.negf %120 : vector<8x128xf32>
    %122 = math.exp %121 : vector<8x128xf32>
    %cst_34 = arith.constant 1.000000e+00 : f32
    %123 = vector.broadcast %cst_34 : f32 to vector<8x128xf32>
    %124 = arith.addf %123, %122 : vector<8x128xf32>
    %125 = arith.divf %123, %124 : vector<8x128xf32>
    %126 = math.tanh %120 : vector<8x128xf32>
    %127 = vector.extract_strided_slice %125 {offsets = [0, 0], sizes = [8, 32], strides = [1, 1]} : vector<8x128xf32> to vector<8x32xf32>
    %128 = vector.extract_strided_slice %125 {offsets = [0, 32], sizes = [8, 32], strides = [1, 1]} : vector<8x128xf32> to vector<8x32xf32>
    %129 = vector.extract_strided_slice %126 {offsets = [0, 64], sizes = [8, 32], strides = [1, 1]} : vector<8x128xf32> to vector<8x32xf32>
    %130 = vector.extract_strided_slice %125 {offsets = [0, 96], sizes = [8, 32], strides = [1, 1]} : vector<8x128xf32> to vector<8x32xf32>
    %131 = arith.mulf %128, %117 : vector<8x32xf32>
    %132 = arith.mulf %127, %129 : vector<8x32xf32>
    %133 = arith.addf %131, %132 : vector<8x32xf32>
    %134 = math.tanh %133 : vector<8x32xf32>
    %135 = arith.mulf %130, %134 : vector<8x32xf32>
    %c24 = arith.constant 24 : index
    %c0_35 = arith.constant 0 : index
    %136 = vector.load %arg1[%c24, %c0_35] : memref<320x1xf32, #tpu.memory_space<vmem>>, vector<8x1xf32>
    %137 = vector.broadcast %136 : vector<8x1xf32> to vector<8x32xf32>
    %138 = arith.mulf %137, %135 : vector<8x32xf32>
    %cst_36 = arith.constant 1.000000e+00 : f32
    %139 = vector.broadcast %cst_36 : f32 to vector<8x1xf32>
    %140 = arith.subf %139, %136 : vector<8x1xf32>
    %141 = vector.broadcast %140 : vector<8x1xf32> to vector<8x32xf32>
    %142 = arith.mulf %141, %110 : vector<8x32xf32>
    %143 = arith.addf %138, %142 : vector<8x32xf32>
    %144 = vector.broadcast %136 : vector<8x1xf32> to vector<8x32xf32>
    %145 = arith.mulf %144, %133 : vector<8x32xf32>
    %cst_37 = arith.constant 1.000000e+00 : f32
    %146 = vector.broadcast %cst_37 : f32 to vector<8x1xf32>
    %147 = arith.subf %146, %136 : vector<8x1xf32>
    %148 = vector.broadcast %147 : vector<8x1xf32> to vector<8x32xf32>
    %149 = arith.mulf %148, %117 : vector<8x32xf32>
    %150 = arith.addf %145, %149 : vector<8x32xf32>
    %151 = vector.extract_strided_slice %16 {offsets = [32, 0], sizes = [8, 128], strides = [1, 1]} : vector<64x128xf32> to vector<8x128xf32>
    %cst_38 = arith.constant dense<0.000000e+00> : vector<8x128xf32>
    %152 = tpu.matmul %143, %2, %cst_38 {dimension_numbers = #tpu.dot_dimension_numbers<[1], [0], [0], [1], [0, 0, 1, 1], [], []>} : vector<8x32xf32>, vector<32x128xf32>, vector<8x128xf32> -> vector<8x128xf32>
    %153 = arith.addf %151, %152 : vector<8x128xf32>
    %154 = arith.negf %153 : vector<8x128xf32>
    %155 = math.exp %154 : vector<8x128xf32>
    %cst_39 = arith.constant 1.000000e+00 : f32
    %156 = vector.broadcast %cst_39 : f32 to vector<8x128xf32>
    %157 = arith.addf %156, %155 : vector<8x128xf32>
    %158 = arith.divf %156, %157 : vector<8x128xf32>
    %159 = math.tanh %153 : vector<8x128xf32>
    %160 = vector.extract_strided_slice %158 {offsets = [0, 0], sizes = [8, 32], strides = [1, 1]} : vector<8x128xf32> to vector<8x32xf32>
    %161 = vector.extract_strided_slice %158 {offsets = [0, 32], sizes = [8, 32], strides = [1, 1]} : vector<8x128xf32> to vector<8x32xf32>
    %162 = vector.extract_strided_slice %159 {offsets = [0, 64], sizes = [8, 32], strides = [1, 1]} : vector<8x128xf32> to vector<8x32xf32>
    %163 = vector.extract_strided_slice %158 {offsets = [0, 96], sizes = [8, 32], strides = [1, 1]} : vector<8x128xf32> to vector<8x32xf32>
    %164 = arith.mulf %161, %150 : vector<8x32xf32>
    %165 = arith.mulf %160, %162 : vector<8x32xf32>
    %166 = arith.addf %164, %165 : vector<8x32xf32>
    %167 = math.tanh %166 : vector<8x32xf32>
    %168 = arith.mulf %163, %167 : vector<8x32xf32>
    %c32 = arith.constant 32 : index
    %c0_40 = arith.constant 0 : index
    %169 = vector.load %arg1[%c32, %c0_40] : memref<320x1xf32, #tpu.memory_space<vmem>>, vector<8x1xf32>
    %170 = vector.broadcast %169 : vector<8x1xf32> to vector<8x32xf32>
    %171 = arith.mulf %170, %168 : vector<8x32xf32>
    %cst_41 = arith.constant 1.000000e+00 : f32
    %172 = vector.broadcast %cst_41 : f32 to vector<8x1xf32>
    %173 = arith.subf %172, %169 : vector<8x1xf32>
    %174 = vector.broadcast %173 : vector<8x1xf32> to vector<8x32xf32>
    %175 = arith.mulf %174, %143 : vector<8x32xf32>
    %176 = arith.addf %171, %175 : vector<8x32xf32>
    %177 = vector.broadcast %169 : vector<8x1xf32> to vector<8x32xf32>
    %178 = arith.mulf %177, %166 : vector<8x32xf32>
    %cst_42 = arith.constant 1.000000e+00 : f32
    %179 = vector.broadcast %cst_42 : f32 to vector<8x1xf32>
    %180 = arith.subf %179, %169 : vector<8x1xf32>
    %181 = vector.broadcast %180 : vector<8x1xf32> to vector<8x32xf32>
    %182 = arith.mulf %181, %150 : vector<8x32xf32>
    %183 = arith.addf %178, %182 : vector<8x32xf32>
    %184 = vector.extract_strided_slice %16 {offsets = [40, 0], sizes = [8, 128], strides = [1, 1]} : vector<64x128xf32> to vector<8x128xf32>
    %cst_43 = arith.constant dense<0.000000e+00> : vector<8x128xf32>
    %185 = tpu.matmul %176, %2, %cst_43 {dimension_numbers = #tpu.dot_dimension_numbers<[1], [0], [0], [1], [0, 0, 1, 1], [], []>} : vector<8x32xf32>, vector<32x128xf32>, vector<8x128xf32> -> vector<8x128xf32>
    %186 = arith.addf %184, %185 : vector<8x128xf32>
    %187 = arith.negf %186 : vector<8x128xf32>
    %188 = math.exp %187 : vector<8x128xf32>
    %cst_44 = arith.constant 1.000000e+00 : f32
    %189 = vector.broadcast %cst_44 : f32 to vector<8x128xf32>
    %190 = arith.addf %189, %188 : vector<8x128xf32>
    %191 = arith.divf %189, %190 : vector<8x128xf32>
    %192 = math.tanh %186 : vector<8x128xf32>
    %193 = vector.extract_strided_slice %191 {offsets = [0, 0], sizes = [8, 32], strides = [1, 1]} : vector<8x128xf32> to vector<8x32xf32>
    %194 = vector.extract_strided_slice %191 {offsets = [0, 32], sizes = [8, 32], strides = [1, 1]} : vector<8x128xf32> to vector<8x32xf32>
    %195 = vector.extract_strided_slice %192 {offsets = [0, 64], sizes = [8, 32], strides = [1, 1]} : vector<8x128xf32> to vector<8x32xf32>
    %196 = vector.extract_strided_slice %191 {offsets = [0, 96], sizes = [8, 32], strides = [1, 1]} : vector<8x128xf32> to vector<8x32xf32>
    %197 = arith.mulf %194, %183 : vector<8x32xf32>
    %198 = arith.mulf %193, %195 : vector<8x32xf32>
    %199 = arith.addf %197, %198 : vector<8x32xf32>
    %200 = math.tanh %199 : vector<8x32xf32>
    %201 = arith.mulf %196, %200 : vector<8x32xf32>
    %c40 = arith.constant 40 : index
    %c0_45 = arith.constant 0 : index
    %202 = vector.load %arg1[%c40, %c0_45] : memref<320x1xf32, #tpu.memory_space<vmem>>, vector<8x1xf32>
    %203 = vector.broadcast %202 : vector<8x1xf32> to vector<8x32xf32>
    %204 = arith.mulf %203, %201 : vector<8x32xf32>
    %cst_46 = arith.constant 1.000000e+00 : f32
    %205 = vector.broadcast %cst_46 : f32 to vector<8x1xf32>
    %206 = arith.subf %205, %202 : vector<8x1xf32>
    %207 = vector.broadcast %206 : vector<8x1xf32> to vector<8x32xf32>
    %208 = arith.mulf %207, %176 : vector<8x32xf32>
    %209 = arith.addf %204, %208 : vector<8x32xf32>
    %210 = vector.broadcast %202 : vector<8x1xf32> to vector<8x32xf32>
    %211 = arith.mulf %210, %199 : vector<8x32xf32>
    %cst_47 = arith.constant 1.000000e+00 : f32
    %212 = vector.broadcast %cst_47 : f32 to vector<8x1xf32>
    %213 = arith.subf %212, %202 : vector<8x1xf32>
    %214 = vector.broadcast %213 : vector<8x1xf32> to vector<8x32xf32>
    %215 = arith.mulf %214, %183 : vector<8x32xf32>
    %216 = arith.addf %211, %215 : vector<8x32xf32>
    %217 = vector.extract_strided_slice %16 {offsets = [48, 0], sizes = [8, 128], strides = [1, 1]} : vector<64x128xf32> to vector<8x128xf32>
    %cst_48 = arith.constant dense<0.000000e+00> : vector<8x128xf32>
    %218 = tpu.matmul %209, %2, %cst_48 {dimension_numbers = #tpu.dot_dimension_numbers<[1], [0], [0], [1], [0, 0, 1, 1], [], []>} : vector<8x32xf32>, vector<32x128xf32>, vector<8x128xf32> -> vector<8x128xf32>
    %219 = arith.addf %217, %218 : vector<8x128xf32>
    %220 = arith.negf %219 : vector<8x128xf32>
    %221 = math.exp %220 : vector<8x128xf32>
    %cst_49 = arith.constant 1.000000e+00 : f32
    %222 = vector.broadcast %cst_49 : f32 to vector<8x128xf32>
    %223 = arith.addf %222, %221 : vector<8x128xf32>
    %224 = arith.divf %222, %223 : vector<8x128xf32>
    %225 = math.tanh %219 : vector<8x128xf32>
    %226 = vector.extract_strided_slice %224 {offsets = [0, 0], sizes = [8, 32], strides = [1, 1]} : vector<8x128xf32> to vector<8x32xf32>
    %227 = vector.extract_strided_slice %224 {offsets = [0, 32], sizes = [8, 32], strides = [1, 1]} : vector<8x128xf32> to vector<8x32xf32>
    %228 = vector.extract_strided_slice %225 {offsets = [0, 64], sizes = [8, 32], strides = [1, 1]} : vector<8x128xf32> to vector<8x32xf32>
    %229 = vector.extract_strided_slice %224 {offsets = [0, 96], sizes = [8, 32], strides = [1, 1]} : vector<8x128xf32> to vector<8x32xf32>
    %230 = arith.mulf %227, %216 : vector<8x32xf32>
    %231 = arith.mulf %226, %228 : vector<8x32xf32>
    %232 = arith.addf %230, %231 : vector<8x32xf32>
    %233 = math.tanh %232 : vector<8x32xf32>
    %234 = arith.mulf %229, %233 : vector<8x32xf32>
    %c48_50 = arith.constant 48 : index
    %c0_51 = arith.constant 0 : index
    %235 = vector.load %arg1[%c48_50, %c0_51] : memref<320x1xf32, #tpu.memory_space<vmem>>, vector<8x1xf32>
    %236 = vector.broadcast %235 : vector<8x1xf32> to vector<8x32xf32>
    %237 = arith.mulf %236, %234 : vector<8x32xf32>
    %cst_52 = arith.constant 1.000000e+00 : f32
    %238 = vector.broadcast %cst_52 : f32 to vector<8x1xf32>
    %239 = arith.subf %238, %235 : vector<8x1xf32>
    %240 = vector.broadcast %239 : vector<8x1xf32> to vector<8x32xf32>
    %241 = arith.mulf %240, %209 : vector<8x32xf32>
    %242 = arith.addf %237, %241 : vector<8x32xf32>
    %243 = vector.broadcast %235 : vector<8x1xf32> to vector<8x32xf32>
    %244 = arith.mulf %243, %232 : vector<8x32xf32>
    %cst_53 = arith.constant 1.000000e+00 : f32
    %245 = vector.broadcast %cst_53 : f32 to vector<8x1xf32>
    %246 = arith.subf %245, %235 : vector<8x1xf32>
    %247 = vector.broadcast %246 : vector<8x1xf32> to vector<8x32xf32>
    %248 = arith.mulf %247, %216 : vector<8x32xf32>
    %249 = arith.addf %244, %248 : vector<8x32xf32>
    %250 = vector.extract_strided_slice %16 {offsets = [56, 0], sizes = [8, 128], strides = [1, 1]} : vector<64x128xf32> to vector<8x128xf32>
    %cst_54 = arith.constant dense<0.000000e+00> : vector<8x128xf32>
    %251 = tpu.matmul %242, %2, %cst_54 {dimension_numbers = #tpu.dot_dimension_numbers<[1], [0], [0], [1], [0, 0, 1, 1], [], []>} : vector<8x32xf32>, vector<32x128xf32>, vector<8x128xf32> -> vector<8x128xf32>
    %252 = arith.addf %250, %251 : vector<8x128xf32>
    %253 = arith.negf %252 : vector<8x128xf32>
    %254 = math.exp %253 : vector<8x128xf32>
    %cst_55 = arith.constant 1.000000e+00 : f32
    %255 = vector.broadcast %cst_55 : f32 to vector<8x128xf32>
    %256 = arith.addf %255, %254 : vector<8x128xf32>
    %257 = arith.divf %255, %256 : vector<8x128xf32>
    %258 = math.tanh %252 : vector<8x128xf32>
    %259 = vector.extract_strided_slice %257 {offsets = [0, 0], sizes = [8, 32], strides = [1, 1]} : vector<8x128xf32> to vector<8x32xf32>
    %260 = vector.extract_strided_slice %257 {offsets = [0, 32], sizes = [8, 32], strides = [1, 1]} : vector<8x128xf32> to vector<8x32xf32>
    %261 = vector.extract_strided_slice %258 {offsets = [0, 64], sizes = [8, 32], strides = [1, 1]} : vector<8x128xf32> to vector<8x32xf32>
    %262 = vector.extract_strided_slice %257 {offsets = [0, 96], sizes = [8, 32], strides = [1, 1]} : vector<8x128xf32> to vector<8x32xf32>
    %263 = arith.mulf %260, %249 : vector<8x32xf32>
    %264 = arith.mulf %259, %261 : vector<8x32xf32>
    %265 = arith.addf %263, %264 : vector<8x32xf32>
    %266 = math.tanh %265 : vector<8x32xf32>
    %267 = arith.mulf %262, %266 : vector<8x32xf32>
    %c56 = arith.constant 56 : index
    %c0_56 = arith.constant 0 : index
    %268 = vector.load %arg1[%c56, %c0_56] : memref<320x1xf32, #tpu.memory_space<vmem>>, vector<8x1xf32>
    %269 = vector.broadcast %268 : vector<8x1xf32> to vector<8x32xf32>
    %270 = arith.mulf %269, %267 : vector<8x32xf32>
    %cst_57 = arith.constant 1.000000e+00 : f32
    %271 = vector.broadcast %cst_57 : f32 to vector<8x1xf32>
    %272 = arith.subf %271, %268 : vector<8x1xf32>
    %273 = vector.broadcast %272 : vector<8x1xf32> to vector<8x32xf32>
    %274 = arith.mulf %273, %242 : vector<8x32xf32>
    %275 = arith.addf %270, %274 : vector<8x32xf32>
    %c64 = arith.constant 64 : index
    %c0_58 = arith.constant 0 : index
    %276 = vector.load %arg0[%c64, %c0_58] : memref<320x16xf32, #tpu.memory_space<vmem>>, vector<256x16xf32>
    %c64_59 = arith.constant 64 : index
    %c0_60 = arith.constant 0 : index
    %277 = vector.load %arg1[%c64_59, %c0_60] : memref<320x1xf32, #tpu.memory_space<vmem>>, vector<256x1xf32>
    %cst_61 = arith.constant dense<0.000000e+00> : vector<256x32xf32>
    %278 = tpu.matmul %276, %4, %cst_61 {dimension_numbers = #tpu.dot_dimension_numbers<[1], [0], [0], [1], [0, 0, 1, 1], [], []>} : vector<256x16xf32>, vector<16x32xf32>, vector<256x32xf32> -> vector<256x32xf32>
    %cst_62 = arith.constant dense<0.000000e+00> : vector<256x32xf32>
    %279 = tpu.matmul %278, %5, %cst_62 {dimension_numbers = #tpu.dot_dimension_numbers<[1], [0], [0], [1], [0, 0, 1, 1], [], []>} : vector<256x32xf32>, vector<32x32xf32>, vector<256x32xf32> -> vector<256x32xf32>
    %280 = vector.broadcast %6 : vector<1x32xf32> to vector<256x32xf32>
    %281 = arith.addf %279, %280 : vector<256x32xf32>
    %282 = math.tanh %281 : vector<256x32xf32>
    %cst_63 = arith.constant dense<0.000000e+00> : vector<256x1xf32>
    %283 = tpu.matmul %282, %7, %cst_63 {dimension_numbers = #tpu.dot_dimension_numbers<[1], [0], [0], [1], [0, 0, 1, 1], [], []>} : vector<256x32xf32>, vector<32x1xf32>, vector<256x1xf32> -> vector<256x1xf32>
    %cst_64 = arith.constant 0.000000e+00 : f32
    %284 = vector.broadcast %cst_64 : f32 to vector<256x1xf32>
    %285 = arith.cmpf ogt, %277, %284 : vector<256x1xf32>
    %cst_65 = arith.constant -1.000000e+30 : f32
    %286 = vector.broadcast %cst_65 : f32 to vector<256x1xf32>
    %287 = arith.select %285, %283, %286 : vector<256x1xi1>, vector<256x1xf32>
    %288 = vector.shape_cast %287 : vector<256x1xf32> to vector<32x8x1xf32>
    %289 = vector.shape_cast %277 : vector<256x1xf32> to vector<32x8x1xf32>
    %290 = vector.shape_cast %278 : vector<256x32xf32> to vector<32x8x32xf32>
    %cst_66 = arith.constant dense<0xFF800000> : vector<32x1xf32>
    %291 = vector.multi_reduction <maximumf>, %288, %cst_66 [1] : vector<32x8x1xf32> to vector<32x1xf32>
    %292 = vector.shape_cast %291 : vector<32x1xf32> to vector<32x1x1xf32>
    %293 = vector.broadcast %292 : vector<32x1x1xf32> to vector<32x8x1xf32>
    %294 = arith.subf %288, %293 : vector<32x8x1xf32>
    %295 = math.exp %294 : vector<32x8x1xf32>
    %296 = arith.mulf %295, %289 : vector<32x8x1xf32>
    %cst_67 = arith.constant dense<0.000000e+00> : vector<32x1xf32>
    %297 = vector.multi_reduction <add>, %296, %cst_67 [1] : vector<32x8x1xf32> to vector<32x1xf32>
    %cst_68 = arith.constant 9.99999971E-10 : f32
    %298 = vector.broadcast %cst_68 : f32 to vector<32x1xf32>
    %299 = arith.addf %297, %298 : vector<32x1xf32>
    %300 = vector.broadcast %296 : vector<32x8x1xf32> to vector<32x8x32xf32>
    %301 = arith.mulf %300, %290 : vector<32x8x32xf32>
    %cst_69 = arith.constant dense<0.000000e+00> : vector<32x32xf32>
    %302 = vector.multi_reduction <add>, %301, %cst_69 [1] : vector<32x8x32xf32> to vector<32x32xf32>
    %303 = vector.broadcast %299 : vector<32x1xf32> to vector<32x32xf32>
    %304 = arith.divf %302, %303 : vector<32x32xf32>
    %cst_70 = arith.constant dense<0.000000e+00> : vector<32x32xf32>
    %305 = tpu.matmul %304, %8, %cst_70 {dimension_numbers = #tpu.dot_dimension_numbers<[1], [0], [0], [1], [0, 0, 1, 1], [], []>} : vector<32x32xf32>, vector<32x32xf32>, vector<32x32xf32> -> vector<32x32xf32>
    %306 = vector.broadcast %9 : vector<1x32xf32> to vector<32x32xf32>
    %307 = arith.addf %305, %306 : vector<32x32xf32>
    %308 = math.tanh %307 : vector<32x32xf32>
    %309 = tpu.concatenate %275, %275, %275, %275 in 0 : vector<8x32xf32>, vector<8x32xf32>, vector<8x32xf32>, vector<8x32xf32> -> vector<32x32xf32>
    %310 = arith.mulf %308, %309 : vector<32x32xf32>
    %cst_71 = arith.constant dense<0.000000e+00> : vector<32xf32>
    %311 = vector.multi_reduction <add>, %310, %cst_71 [1] : vector<32x32xf32> to vector<32xf32>
    %312 = vector.shape_cast %311 : vector<32xf32> to vector<32x1xf32>
    %313 = vector.shape_cast %312 : vector<32x1xf32> to vector<32x1xf32>
    %314 = vector.broadcast %313 : vector<32x1xf32> to vector<32x128xf32>
    %c0_72 = arith.constant 0 : index
    %c0_73 = arith.constant 0 : index
    %315 = vector.load %arg3[%c0_72, %c0_73] : memref<32x128xf32, #tpu.memory_space<vmem>>, vector<32x128xf32>
    tpu.vector_store %arg3[%c0_72, %c0_73], %314 {strides = array<i32>} : memref<32x128xf32, #tpu.memory_space<vmem>>, vector<32x128xf32>,
    return
  }
}

</mosaic_0001>

<llo_original>
// kernel: tpu_custom_call.1
$region0: #{tpu_custom_call.1}
  #allocation0 [shape = 'u32[]', space=smem, size = 0x4, offset = 0x4, fixed_abs, tag = 'smem constant byte address 0x4 - core index']
  #allocation1 [shape = 'u32[72,128]{1,0:T(1,128)}', space=vmem, size = 0x9000, scoped, tag = 'internal scratch']
  %s0 = inlined_call_operand.vmem [shape: f32[320,16], index: 0, kind: input, shape index: {}]
  %s1 = inlined_call_operand.vmem [shape: f32[320,1], index: 1, kind: input, shape index: {}]
  %s2 = inlined_call_operand.vmem [shape: f32[216,128], index: 2, kind: input, shape index: {}]
  %s3 = inlined_call_operand.hbm [shape: f32[32,128], index: 3, kind: output, shape index: {}]
  %s4 = sld [smem:[#allocation0]]
  $region22: #{tpu_custom_call.1} parent=0
    _
  %s6 = ssub.s32 1, %s4
  %s7 = scalar_select 0, %s6, %s4
  $region1: #{tpu_custom_call.1} parent=0
    #allocation2 [shape = 'u8[16384]{0}', space=vmem, size = 0x4000, scoped, tag = 'output window, operand 0, single buffered']
    #allocation3 [shape = 's32[1]{0}', space=sflag, size = 0x4, scoped, tag = 'scoped memory for tpu_custom_call.1']
    %8 = vsyncpa [#allocation3], 0
    // Predicated region
    $region2: #{tpu_custom_call.1} parent=1 // pred_check
      _
    $region3: #{tpu_custom_call.1} parent=1 // pred_check_branch
      %10 = sbr.rel (0) target = $region5
    $region4: #{tpu_custom_call.1} parent=1 // pred_region
      _
    $region5: #{tpu_custom_call.1} parent=1 // pred_fallthru
      _
    // Predicated region
    $region6: #{tpu_custom_call.1} parent=1 // pred_check
      _
    $region7: #{tpu_custom_call.1} parent=1 // pred_check_branch
      %12 = sbr.rel (0) target = $region9
    $region8: #{tpu_custom_call.1} parent=1 // pred_region
      _
    $region9: #{tpu_custom_call.1} parent=1 // pred_fallthru
      _
    // Predicated region
    $region10: #{tpu_custom_call.1} parent=1 // pred_check
      _
    $region11: #{tpu_custom_call.1} parent=1 // pred_check_branch
      %14 = sbr.rel (0) target = $region13
    $region12: #{tpu_custom_call.1} parent=1 // pred_region
      _
    $region13: #{tpu_custom_call.1} parent=1 // pred_fallthru
      _
    %v15 = vld [vmem:[%s2] sm:$0xff]
    %v16 = vld [vmem:[%s2 + $0x8] sm:$0xff]
    %v17 = vld [vmem:[%s2 + $0x10] sm:$0xff]
    %v18 = vld [vmem:[%s2 + $0x18] sm:$0xff]
    %v19 = vld [vmem:[%s2 + $0x20] sm:$0xff]
    %v20 = vld [vmem:[%s2 + $0x28] sm:$0xff]
    %v21 = vld [vmem:[%s2 + $0x30] sm:$0xff]
    %v22 = vld [vmem:[%s2 + $0x38] sm:$0xff]
    %v23 = vld [vmem:[%s2 + $0x40] sm:$0xff]
    %v24 = vld [vmem:[%s2 + $0x48] sm:$0xff]
    %v25 = vld [vmem:[%s2 + $0x50] sm:$0x1]
    %v26 = vld [vmem:[%s2 + $0x58] sm:$0xff]
    %v27 = vld [vmem:[%s2 + $0x60] sm:$0xff]
    %v28 = vld [vmem:[%s2 + $0x68] sm:$0xff]
    %v29 = vld [vmem:[%s2 + $0x70] sm:$0xff]
    %v30 = vld [vmem:[%s2 + $0x78] sm:$0xff]
    %v31 = vld [vmem:[%s2 + $0x80] sm:$0xff]
    %v32 = vld [vmem:[%s2 + $0x88] sm:$0x1]
    %v33 = vld [vmem:[%s2 + $0x90] sm:$0xff]
    %v34 = vld [vmem:[%s2 + $0x98] sm:$0xff]
    %v35 = vld [vmem:[%s2 + $0xa0] sm:$0xff]
    %v36 = vld [vmem:[%s2 + $0xa8] sm:$0xff]
    %v37 = vld [vmem:[%s2 + $0xb0] sm:$0xff]
    %v38 = vld [vmem:[%s2 + $0xb8] sm:$0xff]
    %v39 = vld [vmem:[%s2 + $0xc0] sm:$0xff]
    %v40 = vld [vmem:[%s2 + $0xc8] sm:$0xff]
    %v41 = vld [vmem:[%s2 + $0xd0] sm:$0x1]
    %v42 = vld [vmem:[%s0] sm:$0xff]
    %v43 = vld [vmem:[%s0 + $0x8] sm:$0xff]
    %v44 = vld [vmem:[%s0 + $0x10] sm:$0xff]
    %v45 = vld [vmem:[%s0 + $0x18] sm:$0xff]
    %v46 = vld [vmem:[%s0 + $0x20] sm:$0xff]
    %v47 = vld [vmem:[%s0 + $0x28] sm:$0xff]
    %v48 = vld [vmem:[%s0 + $0x30] sm:$0xff]
    %v49 = vld [vmem:[%s0 + $0x38] sm:$0xff]
    %vm50 = vcmask 130048
    %v52 = vsel %vm50, %v42, 0
    %v55 = vsel %vm50, %v43, 0
    %v58 = vsel %vm50, %v44, 0
    %v61 = vsel %vm50, %v45, 0
    %v64 = vsel %vm50, %v46, 0
    %v67 = vsel %vm50, %v47, 0
    %v70 = vsel %vm50, %v48, 0
    %v73 = vsel %vm50, %v49, 0
    %75 = vmatpush.msra.mxu0 0.0
    %76 = vmatpush.msra.mxu0 0.0
    %77 = vmatpush.msra.mxu0 0.0
    %78 = vmatpush.msra.mxu0 0.0
    %79 = vmatpush.msra.mxu0 0.0
    %80 = vmatpush.msra.mxu0 0.0
    %81 = vmatpush.msra.mxu0 0.0
    %82 = vmatpush.msra.mxu0 0.0
    %83 = vmatpush.msra.mxu0 0.0
    %84 = vmatpush.msra.mxu0 0.0
    %85 = vmatpush.msra.mxu0 0.0
    %86 = vmatpush.msra.mxu0 0.0
    %87 = vmatpush.msra.mxu0 0.0
    %88 = vmatpush.msra.mxu0 0.0
    %89 = vmatpush.msra.mxu0 %v16
    %90 = vmatpush.msra.mxu0 %v15
    %91 = vmatmul.f32.gmra.mxu0 %v52
    %v92 = vpop.f32.mrf.mxu0
    %v93 = vadd.f32 0.0, %v92
    %94 = vmatmul.f32.gmra.mxu0 %v55
    %v95 = vpop.f32.mrf.mxu0
    %v96 = vadd.f32 0.0, %v95
    %97 = vmatmul.f32.gmra.mxu0 %v58
    %v98 = vpop.f32.mrf.mxu0
    %v99 = vadd.f32 0.0, %v98
    %100 = vmatmul.f32.gmra.mxu0 %v61
    %v101 = vpop.f32.mrf.mxu0
    %v102 = vadd.f32 0.0, %v101
    %103 = vmatmul.f32.gmra.mxu0 %v64
    %v104 = vpop.f32.mrf.mxu0
    %v105 = vadd.f32 0.0, %v104
    %106 = vmatmul.f32.gmra.mxu0 %v67
    %v107 = vpop.f32.mrf.mxu0
    %v108 = vadd.f32 0.0, %v107
    %109 = vmatmul.f32.gmra.mxu0 %v70
    %v110 = vpop.f32.mrf.mxu0
    %v111 = vadd.f32 0.0, %v110
    %112 = vmatmul.f32.gmra.mxu0 %v73
    %v113 = vpop.f32.mrf.mxu0
    %v114 = vadd.f32 0.0, %v113
    %115 = vdwg.mxu0
    %v116 = vmax.f32 %v93, 0.0
    %v117 = vmax.f32 %v96, 0.0
    %v118 = vmax.f32 %v99, 0.0
    %v119 = vmax.f32 %v102, 0.0
    %v120 = vmax.f32 %v105, 0.0
    %v121 = vmax.f32 %v108, 0.0
    %v122 = vmax.f32 %v111, 0.0
    %v123 = vmax.f32 %v114, 0.0
    %v124 = vperm.slane %v25, 0
    %vm125 = vcmask 261120
    %v127 = vsel %vm125, %v116, 0
    %v130 = vsel %vm125, %v117, 0
    %v133 = vsel %vm125, %v118, 0
    %v136 = vsel %vm125, %v119, 0
    %v139 = vsel %vm125, %v120, 0
    %v142 = vsel %vm125, %v121, 0
    %v145 = vsel %vm125, %v122, 0
    %v148 = vsel %vm125, %v123, 0
    %150 = vmatpush.msra.mxu0 0.0
    %151 = vmatpush.msra.mxu0 0.0
    %152 = vmatpush.msra.mxu0 0.0
    %153 = vmatpush.msra.mxu0 0.0
    %154 = vmatpush.msra.mxu0 0.0
    %155 = vmatpush.msra.mxu0 0.0
    %156 = vmatpush.msra.mxu0 0.0
    %157 = vmatpush.msra.mxu0 0.0
    %158 = vmatpush.msra.mxu0 0.0
    %159 = vmatpush.msra.mxu0 0.0
    %160 = vmatpush.msra.mxu0 0.0
    %161 = vmatpush.msra.mxu0 0.0
    %162 = vmatpush.msra.mxu0 %v20
    %163 = vmatpush.msra.mxu0 %v19
    %164 = vmatpush.msra.mxu0 %v18
    %165 = vmatpush.msra.mxu0 %v17
    %166 = vmatmul.f32.gmra.mxu0 %v127
    %v167 = vpop.f32.mrf.mxu0
    %v168 = vadd.f32 %v124, %v167
    %169 = vmatmul.f32.gmra.mxu0 %v130
    %v170 = vpop.f32.mrf.mxu0
    %v171 = vadd.f32 %v124, %v170
    %172 = vmatmul.f32.gmra.mxu0 %v133
    %v173 = vpop.f32.mrf.mxu0
    %v174 = vadd.f32 %v124, %v173
    %175 = vmatmul.f32.gmra.mxu0 %v136
    %v176 = vpop.f32.mrf.mxu0
    %v177 = vadd.f32 %v124, %v176
    %178 = vmatmul.f32.gmra.mxu0 %v139
    %v179 = vpop.f32.mrf.mxu0
    %v180 = vadd.f32 %v124, %v179
    %181 = vmatmul.f32.gmra.mxu0 %v142
    %v182 = vpop.f32.mrf.mxu0
    %v183 = vadd.f32 %v124, %v182
    %184 = vmatmul.f32.gmra.mxu0 %v145
    %v185 = vpop.f32.mrf.mxu0
    %v186 = vadd.f32 %v124, %v185
    %187 = vmatmul.f32.gmra.mxu0 %v148
    %v188 = vpop.f32.mrf.mxu0
    %v189 = vadd.f32 %v124, %v188
    %190 = vdwg.mxu0
    %v192 = vsel %vm125, 0.0, 0
    %194 = vmatpush.msra.mxu0 0.0
    %195 = vmatpush.msra.mxu0 0.0
    %196 = vmatpush.msra.mxu0 0.0
    %197 = vmatpush.msra.mxu0 0.0
    %198 = vmatpush.msra.mxu0 0.0
    %199 = vmatpush.msra.mxu0 0.0
    %200 = vmatpush.msra.mxu0 0.0
    %201 = vmatpush.msra.mxu0 0.0
    %202 = vmatpush.msra.mxu0 0.0
    %203 = vmatpush.msra.mxu0 0.0
    %204 = vmatpush.msra.mxu0 0.0
    %205 = vmatpush.msra.mxu0 0.0
    %206 = vmatpush.msra.mxu0 %v24
    %207 = vmatpush.msra.mxu0 %v23
    %208 = vmatpush.msra.mxu0 %v22
    %209 = vmatpush.msra.mxu0 %v21
    %210 = vmatmul.f32.gmra.mxu0 %v192
    %v211 = vpop.f32.mrf.mxu0
    %v212 = vadd.f32 0.0, %v211
    %213 = vdwg.mxu0
    %v214 = vadd.f32 %v168, %v212
    %v215 = vxor.u32 %v214, 2147483648
    %v216 = vmul.f32 %v215, 1.442695
    %v217 = vpow.pop %v216
    %v218 = vadd.f32 %v217, 1.0
    %v219 = vrcp.pop %v218
    %v220 = vmul.f32 %v218, %v219
    %v221 = vsub.f32 1.0, %v220
    %v222 = vmul.f32 %v219, %v221
    %v223 = vadd.f32 %v219, %v222
    %vm224 = vweird.f32 %v218
    %vm225 = vweird.f32 %v219
    %vm226 = vmor %vm224, %vm225
    %v227 = vsel %vm226, %v219, %v223
    %v228 = vand.u32 2147483647, %v218
    %vm229 = vcmp.eq.f32.partialorder %v228, 8.507059e+37
    %v230 = vand.u32 %v218, 2147483648
    %v231 = vor.u32 1.1754944e-38, %v230
    %v232 = vsel %vm229, %v231, %v227
    %v233 = vmul.f32 1.0, %v232
    %v234 = vtanh.pop %v214
    %v235 = vmul.f32 %v233, 0.0
    %237 = vrot.lane.b32.xlu0 %v234, 64
    %v238 = vpop.permute.xlu0 %237
    %v240 = vmul.f32 %v233, %v238
    %242 = vrot.lane.b32.xlu0 %v240, 32
    %v243 = vpop.permute.xlu0 %242
    %v245 = vadd.f32 %v235, %v243
    %v246 = vtanh.pop %v245
    %248 = vrot.lane.b32.xlu0 %v246, 64
    %v249 = vpop.permute.xlu0 %248
    %v251 = vmul.f32 %v233, %v249
    %v252 = vld [vmem:[%s1] sm:$0xff]
    %254 = vset.pattern.permute.xlu0 0
    %255 = vperm.xlu0 %254, %v252
    %v256 = vpop.permute.xlu0 %255
    %v258 = vmul.f32 %v256, %v251
    %v259 = vsub.f32 1.0, %v252
    %261 = vset.pattern.permute.xlu0 0
    %262 = vperm.xlu0 %261, %v259
    %v263 = vpop.permute.xlu0 %262
    %v265 = vmul.f32 %v263, 0.0
    %v266 = vadd.f32 %v258, %v265
    %v267 = vmul.f32 %v256, %v245
    %v268 = vadd.f32 %v267, %v265
    %270 = vrot.lane.b32.xlu0 %v266, 32
    %v271 = vpop.permute.xlu0 %270
    %v272 = vsel %vm125, %v271, 0
    %274 = vmatpush.msra.mxu0 0.0
    %275 = vmatpush.msra.mxu0 0.0
    %276 = vmatpush.msra.mxu0 0.0
    %277 = vmatpush.msra.mxu0 0.0
    %278 = vmatpush.msra.mxu0 0.0
    %279 = vmatpush.msra.mxu0 0.0
    %280 = vmatpush.msra.mxu0 0.0
    %281 = vmatpush.msra.mxu0 0.0
    %282 = vmatpush.msra.mxu0 0.0
    %283 = vmatpush.msra.mxu0 0.0
    %284 = vmatpush.msra.mxu0 0.0
    %285 = vmatpush.msra.mxu0 0.0
    %286 = vmatpush.msra.mxu0 %v24
    %287 = vmatpush.msra.mxu0 %v23
    %288 = vmatpush.msra.mxu0 %v22
    %289 = vmatpush.msra.mxu0 %v21
    %290 = vmatmul.f32.gmra.mxu0 %v272
    %v291 = vpop.f32.mrf.mxu0
    %v292 = vadd.f32 0.0, %v291
    %293 = vdwg.mxu0
    %v294 = vadd.f32 %v171, %v292
    %v295 = vxor.u32 %v294, 2147483648
    %v296 = vmul.f32 %v295, 1.442695
    %v297 = vpow.pop %v296
    %v298 = vadd.f32 %v297, 1.0
    %v299 = vrcp.pop %v298
    %v300 = vmul.f32 %v298, %v299
    %v301 = vsub.f32 1.0, %v300
    %v302 = vmul.f32 %v299, %v301
    %v303 = vadd.f32 %v299, %v302
    %vm304 = vweird.f32 %v298
    %vm305 = vweird.f32 %v299
    %vm306 = vmor %vm304, %vm305
    %v307 = vsel %vm306, %v299, %v303
    %v308 = vand.u32 2147483647, %v298
    %vm309 = vcmp.eq.f32.partialorder %v308, 8.507059e+37
    %v310 = vand.u32 %v298, 2147483648
    %v311 = vor.u32 1.1754944e-38, %v310
    %v312 = vsel %vm309, %v311, %v307
    %v313 = vmul.f32 1.0, %v312
    %v314 = vtanh.pop %v294
    %v315 = vmul.f32 %v313, %v268
    %317 = vrot.lane.b32.xlu0 %v314, 64
    %v318 = vpop.permute.xlu0 %317
    %v320 = vmul.f32 %v313, %v318
    %322 = vrot.lane.b32.xlu0 %v320, 32
    %v323 = vpop.permute.xlu0 %322
    %v325 = vadd.f32 %v315, %v323
    %v326 = vtanh.pop %v325
    %328 = vrot.lane.b32.xlu0 %v326, 64
    %v329 = vpop.permute.xlu0 %328
    %v331 = vmul.f32 %v313, %v329
    %v332 = vld [vmem:[%s1 + $0x8] sm:$0xff]
    %334 = vset.pattern.permute.xlu0 0
    %335 = vperm.xlu0 %334, %v332
    %v336 = vpop.permute.xlu0 %335
    %v338 = vmul.f32 %v336, %v331
    %v339 = vsub.f32 1.0, %v332
    %341 = vset.pattern.permute.xlu0 0
    %342 = vperm.xlu0 %341, %v339
    %v343 = vpop.permute.xlu0 %342
    %v345 = vmul.f32 %v343, %v266
    %v346 = vadd.f32 %v338, %v345
    %v347 = vmul.f32 %v336, %v325
    %v348 = vmul.f32 %v343, %v268
    %v349 = vadd.f32 %v347, %v348
    %351 = vrot.lane.b32.xlu0 %v346, 32
    %v352 = vpop.permute.xlu0 %351
    %v353 = vsel %vm125, %v352, 0
    %355 = vmatpush.msra.mxu0 0.0
    %356 = vmatpush.msra.mxu0 0.0
    %357 = vmatpush.msra.mxu0 0.0
    %358 = vmatpush.msra.mxu0 0.0
    %359 = vmatpush.msra.mxu0 0.0
    %360 = vmatpush.msra.mxu0 0.0
    %361 = vmatpush.msra.mxu0 0.0
    %362 = vmatpush.msra.mxu0 0.0
    %363 = vmatpush.msra.mxu0 0.0
    %364 = vmatpush.msra.mxu0 0.0
    %365 = vmatpush.msra.mxu0 0.0
    %366 = vmatpush.msra.mxu0 0.0
    %367 = vmatpush.msra.mxu0 %v24
    %368 = vmatpush.msra.mxu0 %v23
    %369 = vmatpush.msra.mxu0 %v22
    %370 = vmatpush.msra.mxu0 %v21
    %371 = vmatmul.f32.gmra.mxu0 %v353
    %v372 = vpop.f32.mrf.mxu0
    %v373 = vadd.f32 0.0, %v372
    %374 = vdwg.mxu0
    %v375 = vadd.f32 %v174, %v373
    %v376 = vxor.u32 %v375, 2147483648
    %v377 = vmul.f32 %v376, 1.442695
    %v378 = vpow.pop %v377
    %v379 = vadd.f32 %v378, 1.0
    %v380 = vrcp.pop %v379
    %v381 = vmul.f32 %v379, %v380
    %v382 = vsub.f32 1.0, %v381
    %v383 = vmul.f32 %v380, %v382
    %v384 = vadd.f32 %v380, %v383
    %vm385 = vweird.f32 %v379
    %vm386 = vweird.f32 %v380
    %vm387 = vmor %vm385, %vm386
    %v388 = vsel %vm387, %v380, %v384
    %v389 = vand.u32 2147483647, %v379
    %vm390 = vcmp.eq.f32.partialorder %v389, 8.507059e+37
    %v391 = vand.u32 %v379, 2147483648
    %v392 = vor.u32 1.1754944e-38, %v391
    %v393 = vsel %vm390, %v392, %v388
    %v394 = vmul.f32 1.0, %v393
    %v395 = vtanh.pop %v375
    %v396 = vmul.f32 %v394, %v349
    %398 = vrot.lane.b32.xlu0 %v395, 64
    %v399 = vpop.permute.xlu0 %398
    %v401 = vmul.f32 %v394, %v399
    %403 = vrot.lane.b32.xlu0 %v401, 32
    %v404 = vpop.permute.xlu0 %403
    %v406 = vadd.f32 %v396, %v404
    %v407 = vtanh.pop %v406
    %409 = vrot.lane.b32.xlu0 %v407, 64
    %v410 = vpop.permute.xlu0 %409
    %v412 = vmul.f32 %v394, %v410
    %v413 = vld [vmem:[%s1 + $0x10] sm:$0xff]
    %415 = vset.pattern.permute.xlu0 0
    %416 = vperm.xlu0 %415, %v413
    %v417 = vpop.permute.xlu0 %416
    %v419 = vmul.f32 %v417, %v412
    %v420 = vsub.f32 1.0, %v413
    %422 = vset.pattern.permute.xlu0 0
    %423 = vperm.xlu0 %422, %v420
    %v424 = vpop.permute.xlu0 %423
    %v426 = vmul.f32 %v424, %v346
    %v427 = vadd.f32 %v419, %v426
    %v428 = vmul.f32 %v417, %v406
    %v429 = vmul.f32 %v424, %v349
    %v430 = vadd.f32 %v428, %v429
    %432 = vrot.lane.b32.xlu0 %v427, 32
    %v433 = vpop.permute.xlu0 %432
    %v434 = vsel %vm125, %v433, 0
    %436 = vmatpush.msra.mxu0 0.0
    %437 = vmatpush.msra.mxu0 0.0
    %438 = vmatpush.msra.mxu0 0.0
    %439 = vmatpush.msra.mxu0 0.0
    %440 = vmatpush.msra.mxu0 0.0
    %441 = vmatpush.msra.mxu0 0.0
    %442 = vmatpush.msra.mxu0 0.0
    %443 = vmatpush.msra.mxu0 0.0
    %444 = vmatpush.msra.mxu0 0.0
    %445 = vmatpush.msra.mxu0 0.0
    %446 = vmatpush.msra.mxu0 0.0
    %447 = vmatpush.msra.mxu0 0.0
    %448 = vmatpush.msra.mxu0 %v24
    %449 = vmatpush.msra.mxu0 %v23
    %450 = vmatpush.msra.mxu0 %v22
    %451 = vmatpush.msra.mxu0 %v21
    %452 = vmatmul.f32.gmra.mxu0 %v434
    %v453 = vpop.f32.mrf.mxu0
    %v454 = vadd.f32 0.0, %v453
    %455 = vdwg.mxu0
    %v456 = vadd.f32 %v177, %v454
    %v457 = vxor.u32 %v456, 2147483648
    %v458 = vmul.f32 %v457, 1.442695
    %v459 = vpow.pop %v458
    %v460 = vadd.f32 %v459, 1.0
    %v461 = vrcp.pop %v460
    %v462 = vmul.f32 %v460, %v461
    %v463 = vsub.f32 1.0, %v462
    %v464 = vmul.f32 %v461, %v463
    %v465 = vadd.f32 %v461, %v464
    %vm466 = vweird.f32 %v460
    %vm467 = vweird.f32 %v461
    %vm468 = vmor %vm466, %vm467
    %v469 = vsel %vm468, %v461, %v465
    %v470 = vand.u32 2147483647, %v460
    %vm471 = vcmp.eq.f32.partialorder %v470, 8.507059e+37
    %v472 = vand.u32 %v460, 2147483648
    %v473 = vor.u32 1.1754944e-38, %v472
    %v474 = vsel %vm471, %v473, %v469
    %v475 = vmul.f32 1.0, %v474
    %v476 = vtanh.pop %v456
    %v477 = vmul.f32 %v475, %v430
    %479 = vrot.lane.b32.xlu0 %v476, 64
    %v480 = vpop.permute.xlu0 %479
    %v482 = vmul.f32 %v475, %v480
    %484 = vrot.lane.b32.xlu0 %v482, 32
    %v485 = vpop.permute.xlu0 %484
    %v487 = vadd.f32 %v477, %v485
    %v488 = vtanh.pop %v487
    %490 = vrot.lane.b32.xlu0 %v488, 64
    %v491 = vpop.permute.xlu0 %490
    %v493 = vmul.f32 %v475, %v491
    %v494 = vld [vmem:[%s1 + $0x18] sm:$0xff]
    %496 = vset.pattern.permute.xlu0 0
    %497 = vperm.xlu0 %496, %v494
    %v498 = vpop.permute.xlu0 %497
    %v500 = vmul.f32 %v498, %v493
    %v501 = vsub.f32 1.0, %v494
    %503 = vset.pattern.permute.xlu0 0
    %504 = vperm.xlu0 %503, %v501
    %v505 = vpop.permute.xlu0 %504
    %v507 = vmul.f32 %v505, %v427
    %v508 = vadd.f32 %v500, %v507
    %v509 = vmul.f32 %v498, %v487
    %v510 = vmul.f32 %v505, %v430
    %v511 = vadd.f32 %v509, %v510
    %513 = vrot.lane.b32.xlu0 %v508, 32
    %v514 = vpop.permute.xlu0 %513
    %v515 = vsel %vm125, %v514, 0
    %517 = vmatpush.msra.mxu0 0.0
    %518 = vmatpush.msra.mxu0 0.0
    %519 = vmatpush.msra.mxu0 0.0
    %520 = vmatpush.msra.mxu0 0.0
    %521 = vmatpush.msra.mxu0 0.0
    %522 = vmatpush.msra.mxu0 0.0
    %523 = vmatpush.msra.mxu0 0.0
    %524 = vmatpush.msra.mxu0 0.0
    %525 = vmatpush.msra.mxu0 0.0
    %526 = vmatpush.msra.mxu0 0.0
    %527 = vmatpush.msra.mxu0 0.0
    %528 = vmatpush.msra.mxu0 0.0
    %529 = vmatpush.msra.mxu0 %v24
    %530 = vmatpush.msra.mxu0 %v23
    %531 = vmatpush.msra.mxu0 %v22
    %532 = vmatpush.msra.mxu0 %v21
    %533 = vmatmul.f32.gmra.mxu0 %v515
    %v534 = vpop.f32.mrf.mxu0
    %v535 = vadd.f32 0.0, %v534
    %536 = vdwg.mxu0
    %v537 = vadd.f32 %v180, %v535
    %v538 = vxor.u32 %v537, 2147483648
    %v539 = vmul.f32 %v538, 1.442695
    %v540 = vpow.pop %v539
    %v541 = vadd.f32 %v540, 1.0
    %v542 = vrcp.pop %v541
    %v543 = vmul.f32 %v541, %v542
    %v544 = vsub.f32 1.0, %v543
    %v545 = vmul.f32 %v542, %v544
    %v546 = vadd.f32 %v542, %v545
    %vm547 = vweird.f32 %v541
    %vm548 = vweird.f32 %v542
    %vm549 = vmor %vm547, %vm548
    %v550 = vsel %vm549, %v542, %v546
    %v551 = vand.u32 2147483647, %v541
    %vm552 = vcmp.eq.f32.partialorder %v551, 8.507059e+37
    %v553 = vand.u32 %v541, 2147483648
    %v554 = vor.u32 1.1754944e-38, %v553
    %v555 = vsel %vm552, %v554, %v550
    %v556 = vmul.f32 1.0, %v555
    %v557 = vtanh.pop %v537
    %v558 = vmul.f32 %v556, %v511
    %560 = vrot.lane.b32.xlu0 %v557, 64
    %v561 = vpop.permute.xlu0 %560
    %v563 = vmul.f32 %v556, %v561
    %565 = vrot.lane.b32.xlu0 %v563, 32
    %v566 = vpop.permute.xlu0 %565
    %v568 = vadd.f32 %v558, %v566
    %v569 = vtanh.pop %v568
    %571 = vrot.lane.b32.xlu0 %v569, 64
    %v572 = vpop.permute.xlu0 %571
    %v574 = vmul.f32 %v556, %v572
    %v575 = vld [vmem:[%s1 + $0x20] sm:$0xff]
    %577 = vset.pattern.permute.xlu0 0
    %578 = vperm.xlu0 %577, %v575
    %v579 = vpop.permute.xlu0 %578
    %v581 = vmul.f32 %v579, %v574
    %v582 = vsub.f32 1.0, %v575
    %584 = vset.pattern.permute.xlu0 0
    %585 = vperm.xlu0 %584, %v582
    %v586 = vpop.permute.xlu0 %585
    %v588 = vmul.f32 %v586, %v508
    %v589 = vadd.f32 %v581, %v588
    %v590 = vmul.f32 %v579, %v568
    %v591 = vmul.f32 %v586, %v511
    %v592 = vadd.f32 %v590, %v591
    %594 = vrot.lane.b32.xlu0 %v589, 32
    %v595 = vpop.permute.xlu0 %594
    %v596 = vsel %vm125, %v595, 0
    %598 = vmatpush.msra.mxu0 0.0
    %599 = vmatpush.msra.mxu0 0.0
    %600 = vmatpush.msra.mxu0 0.0
    %601 = vmatpush.msra.mxu0 0.0
    %602 = vmatpush.msra.mxu0 0.0
    %603 = vmatpush.msra.mxu0 0.0
    %604 = vmatpush.msra.mxu0 0.0
    %605 = vmatpush.msra.mxu0 0.0
    %606 = vmatpush.msra.mxu0 0.0
    %607 = vmatpush.msra.mxu0 0.0
    %608 = vmatpush.msra.mxu0 0.0
    %609 = vmatpush.msra.mxu0 0.0
    %610 = vmatpush.msra.mxu0 %v24
    %611 = vmatpush.msra.mxu0 %v23
    %612 = vmatpush.msra.mxu0 %v22
    %613 = vmatpush.msra.mxu0 %v21
    %614 = vmatmul.f32.gmra.mxu0 %v596
    %v615 = vpop.f32.mrf.mxu0
    %v616 = vadd.f32 0.0, %v615
    %617 = vdwg.mxu0
    %v618 = vadd.f32 %v183, %v616
    %v619 = vxor.u32 %v618, 2147483648
    %v620 = vmul.f32 %v619, 1.442695
    %v621 = vpow.pop %v620
    %v622 = vadd.f32 %v621, 1.0
    %v623 = vrcp.pop %v622
    %v624 = vmul.f32 %v622, %v623
    %v625 = vsub.f32 1.0, %v624
    %v626 = vmul.f32 %v623, %v625
    %v627 = vadd.f32 %v623, %v626
    %vm628 = vweird.f32 %v622
    %vm629 = vweird.f32 %v623
    %vm630 = vmor %vm628, %vm629
    %v631 = vsel %vm630, %v623, %v627
    %v632 = vand.u32 2147483647, %v622
    %vm633 = vcmp.eq.f32.partialorder %v632, 8.507059e+37
    %v634 = vand.u32 %v622, 2147483648
    %v635 = vor.u32 1.1754944e-38, %v634
    %v636 = vsel %vm633, %v635, %v631
    %v637 = vmul.f32 1.0, %v636
    %v638 = vtanh.pop %v618
    %v639 = vmul.f32 %v637, %v592
    %641 = vrot.lane.b32.xlu0 %v638, 64
    %v642 = vpop.permute.xlu0 %641
    %v644 = vmul.f32 %v637, %v642
    %646 = vrot.lane.b32.xlu0 %v644, 32
    %v647 = vpop.permute.xlu0 %646
    %v649 = vadd.f32 %v639, %v647
    %v650 = vtanh.pop %v649
    %652 = vrot.lane.b32.xlu0 %v650, 64
    %v653 = vpop.permute.xlu0 %652
    %v655 = vmul.f32 %v637, %v653
    %v656 = vld [vmem:[%s1 + $0x28] sm:$0xff]
    %658 = vset.pattern.permute.xlu0 0
    %659 = vperm.xlu0 %658, %v656
    %v660 = vpop.permute.xlu0 %659
    %v662 = vmul.f32 %v660, %v655
    %v663 = vsub.f32 1.0, %v656
    %665 = vset.pattern.permute.xlu0 0
    %666 = vperm.xlu0 %665, %v663
    %v667 = vpop.permute.xlu0 %666
    %v669 = vmul.f32 %v667, %v589
    %v670 = vadd.f32 %v662, %v669
    %v671 = vmul.f32 %v660, %v649
    %v672 = vmul.f32 %v667, %v592
    %v673 = vadd.f32 %v671, %v672
    %675 = vrot.lane.b32.xlu0 %v670, 32
    %v676 = vpop.permute.xlu0 %675
    %v677 = vsel %vm125, %v676, 0
    %679 = vmatpush.msra.mxu0 0.0
    %680 = vmatpush.msra.mxu0 0.0
    %681 = vmatpush.msra.mxu0 0.0
    %682 = vmatpush.msra.mxu0 0.0
    %683 = vmatpush.msra.mxu0 0.0
    %684 = vmatpush.msra.mxu0 0.0
    %685 = vmatpush.msra.mxu0 0.0
    %686 = vmatpush.msra.mxu0 0.0
    %687 = vmatpush.msra.mxu0 0.0
    %688 = vmatpush.msra.mxu0 0.0
    %689 = vmatpush.msra.mxu0 0.0
    %690 = vmatpush.msra.mxu0 0.0
    %691 = vmatpush.msra.mxu0 %v24
    %692 = vmatpush.msra.mxu0 %v23
    %693 = vmatpush.msra.mxu0 %v22
    %694 = vmatpush.msra.mxu0 %v21
    %695 = vmatmul.f32.gmra.mxu0 %v677
    %v696 = vpop.f32.mrf.mxu0
    %v697 = vadd.f32 0.0, %v696
    %698 = vdwg.mxu0
    %v699 = vadd.f32 %v186, %v697
    %v700 = vxor.u32 %v699, 2147483648
    %v701 = vmul.f32 %v700, 1.442695
    %v702 = vpow.pop %v701
    %v703 = vadd.f32 %v702, 1.0
    %v704 = vrcp.pop %v703
    %v705 = vmul.f32 %v703, %v704
    %v706 = vsub.f32 1.0, %v705
    %v707 = vmul.f32 %v704, %v706
    %v708 = vadd.f32 %v704, %v707
    %vm709 = vweird.f32 %v703
    %vm710 = vweird.f32 %v704
    %vm711 = vmor %vm709, %vm710
    %v712 = vsel %vm711, %v704, %v708
    %v713 = vand.u32 2147483647, %v703
    %vm714 = vcmp.eq.f32.partialorder %v713, 8.507059e+37
    %v715 = vand.u32 %v703, 2147483648
    %v716 = vor.u32 1.1754944e-38, %v715
    %v717 = vsel %vm714, %v716, %v712
    %v718 = vmul.f32 1.0, %v717
    %v719 = vtanh.pop %v699
    %v720 = vmul.f32 %v718, %v673
    %722 = vrot.lane.b32.xlu0 %v719, 64
    %v723 = vpop.permute.xlu0 %722
    %v725 = vmul.f32 %v718, %v723
    %727 = vrot.lane.b32.xlu0 %v725, 32
    %v728 = vpop.permute.xlu0 %727
    %v730 = vadd.f32 %v720, %v728
    %v731 = vtanh.pop %v730
    %733 = vrot.lane.b32.xlu0 %v731, 64
    %v734 = vpop.permute.xlu0 %733
    %v736 = vmul.f32 %v718, %v734
    %v737 = vld [vmem:[%s1 + $0x30] sm:$0xff]
    %739 = vset.pattern.permute.xlu0 0
    %740 = vperm.xlu0 %739, %v737
    %v741 = vpop.permute.xlu0 %740
    %v743 = vmul.f32 %v741, %v736
    %v744 = vsub.f32 1.0, %v737
    %746 = vset.pattern.permute.xlu0 0
    %747 = vperm.xlu0 %746, %v744
    %v748 = vpop.permute.xlu0 %747
    %v750 = vmul.f32 %v748, %v670
    %v751 = vadd.f32 %v743, %v750
    %v752 = vmul.f32 %v741, %v730
    %v753 = vmul.f32 %v748, %v673
    %v754 = vadd.f32 %v752, %v753
    %756 = vrot.lane.b32.xlu0 %v751, 32
    %v757 = vpop.permute.xlu0 %756
    %v758 = vsel %vm125, %v757, 0
    %760 = vmatpush.msra.mxu0 0.0
    %761 = vmatpush.msra.mxu0 0.0
    %762 = vmatpush.msra.mxu0 0.0
    %763 = vmatpush.msra.mxu0 0.0
    %764 = vmatpush.msra.mxu0 0.0
    %765 = vmatpush.msra.mxu0 0.0
    %766 = vmatpush.msra.mxu0 0.0
    %767 = vmatpush.msra.mxu0 0.0
    %768 = vmatpush.msra.mxu0 0.0
    %769 = vmatpush.msra.mxu0 0.0
    %770 = vmatpush.msra.mxu0 0.0
    %771 = vmatpush.msra.mxu0 0.0
    %772 = vmatpush.msra.mxu0 %v24
    %773 = vmatpush.msra.mxu0 %v23
    %774 = vmatpush.msra.mxu0 %v22
    %775 = vmatpush.msra.mxu0 %v21
    %776 = vmatmul.f32.gmra.mxu0 %v758
    %v777 = vpop.f32.mrf.mxu0
    %v778 = vadd.f32 0.0, %v777
    %779 = vdwg.mxu0
    %v780 = vadd.f32 %v189, %v778
    %v781 = vxor.u32 %v780, 2147483648
    %v782 = vmul.f32 %v781, 1.442695
    %v783 = vpow.pop %v782
    %v784 = vadd.f32 %v783, 1.0
    %v785 = vrcp.pop %v784
    %v786 = vmul.f32 %v784, %v785
    %v787 = vsub.f32 1.0, %v786
    %v788 = vmul.f32 %v785, %v787
    %v789 = vadd.f32 %v785, %v788
    %vm790 = vweird.f32 %v784
    %vm791 = vweird.f32 %v785
    %vm792 = vmor %vm790, %vm791
    %v793 = vsel %vm792, %v785, %v789
    %v794 = vand.u32 2147483647, %v784
    %vm795 = vcmp.eq.f32.partialorder %v794, 8.507059e+37
    %v796 = vand.u32 %v784, 2147483648
    %v797 = vor.u32 1.1754944e-38, %v796
    %v798 = vsel %vm795, %v797, %v793
    %v799 = vmul.f32 1.0, %v798
    %v800 = vtanh.pop %v780
    %v801 = vmul.f32 %v799, %v754
    %803 = vrot.lane.b32.xlu0 %v800, 64
    %v804 = vpop.permute.xlu0 %803
    %v806 = vmul.f32 %v799, %v804
    %808 = vrot.lane.b32.xlu0 %v806, 32
    %v809 = vpop.permute.xlu0 %808
    %v811 = vadd.f32 %v801, %v809
    %v812 = vtanh.pop %v811
    %814 = vrot.lane.b32.xlu0 %v812, 64
    %v815 = vpop.permute.xlu0 %814
    %v817 = vmul.f32 %v799, %v815
    %v818 = vld [vmem:[%s1 + $0x38] sm:$0xff]
    %820 = vset.pattern.permute.xlu0 0
    %821 = vperm.xlu0 %820, %v818
    %v822 = vpop.permute.xlu0 %821
    %v824 = vmul.f32 %v822, %v817
    %v825 = vsub.f32 1.0, %v818
    %827 = vset.pattern.permute.xlu0 0
    %828 = vperm.xlu0 %827, %v825
    %v829 = vpop.permute.xlu0 %828
    %v831 = vmul.f32 %v829, %v751
    %v832 = vadd.f32 %v824, %v831
    %v833 = vld [vmem:[%s0 + $0x40] sm:$0xff]
    %v834 = vld [vmem:[%s0 + $0x48] sm:$0xff]
    %v835 = vld [vmem:[%s0 + $0x50] sm:$0xff]
    %v836 = vld [vmem:[%s0 + $0x58] sm:$0xff]
    %v837 = vld [vmem:[%s0 + $0x60] sm:$0xff]
    %v838 = vld [vmem:[%s0 + $0x68] sm:$0xff]
    %v839 = vld [vmem:[%s0 + $0x70] sm:$0xff]
    %v840 = vld [vmem:[%s0 + $0x78] sm:$0xff]
    %v841 = vld [vmem:[%s0 + $0x80] sm:$0xff]
    %v842 = vld [vmem:[%s0 + $0x88] sm:$0xff]
    %v843 = vld [vmem:[%s0 + $0x90] sm:$0xff]
    %v844 = vld [vmem:[%s0 + $0x98] sm:$0xff]
    %v845 = vld [vmem:[%s0 + $0xa0] sm:$0xff]
    %v846 = vld [vmem:[%s0 + $0xa8] sm:$0xff]
    %v847 = vld [vmem:[%s0 + $0xb0] sm:$0xff]
    %v848 = vld [vmem:[%s0 + $0xb8] sm:$0xff]
    %v849 = vld [vmem:[%s0 + $0xc0] sm:$0xff]
    %v850 = vld [vmem:[%s0 + $0xc8] sm:$0xff]
    %v851 = vld [vmem:[%s0 + $0xd0] sm:$0xff]
    %v852 = vld [vmem:[%s0 + $0xd8] sm:$0xff]
    %v853 = vld [vmem:[%s0 + $0xe0] sm:$0xff]
    %v854 = vld [vmem:[%s0 + $0xe8] sm:$0xff]
    %v855 = vld [vmem:[%s0 + $0xf0] sm:$0xff]
    %v856 = vld [vmem:[%s0 + $0xf8] sm:$0xff]
    %v857 = vld [vmem:[%s0 + $0x100] sm:$0xff]
    %v858 = vld [vmem:[%s0 + $0x108] sm:$0xff]
    %v859 = vld [vmem:[%s0 + $0x110] sm:$0xff]
    %v860 = vld [vmem:[%s0 + $0x118] sm:$0xff]
    %v861 = vld [vmem:[%s0 + $0x120] sm:$0xff]
    %v862 = vld [vmem:[%s0 + $0x128] sm:$0xff]
    %v863 = vld [vmem:[%s0 + $0x130] sm:$0xff]
    %v864 = vld [vmem:[%s0 + $0x138] sm:$0xff]
    %v865 = vld [vmem:[%s1 + $0x40] sm:$0xff]
    %v866 = vld [vmem:[%s1 + $0x48] sm:$0xff]
    %v867 = vld [vmem:[%s1 + $0x50] sm:$0xff]
    %v868 = vld [vmem:[%s1 + $0x58] sm:$0xff]
    %v869 = vld [vmem:[%s1 + $0x60] sm:$0xff]
    %v870 = vld [vmem:[%s1 + $0x68] sm:$0xff]
    %v871 = vld [vmem:[%s1 + $0x70] sm:$0xff]
    %v872 = vld [vmem:[%s1 + $0x78] sm:$0xff]
    %v873 = vld [vmem:[%s1 + $0x80] sm:$0xff]
    %v874 = vld [vmem:[%s1 + $0x88] sm:$0xff]
    %v875 = vld [vmem:[%s1 + $0x90] sm:$0xff]
    %v876 = vld [vmem:[%s1 + $0x98] sm:$0xff]
    %v877 = vld [vmem:[%s1 + $0xa0] sm:$0xff]
    %v878 = vld [vmem:[%s1 + $0xa8] sm:$0xff]
    %v879 = vld [vmem:[%s1 + $0xb0] sm:$0xff]
    %v880 = vld [vmem:[%s1 + $0xb8] sm:$0xff]
    %v881 = vld [vmem:[%s1 + $0xc0] sm:$0xff]
    %v882 = vld [vmem:[%s1 + $0xc8] sm:$0xff]
    %v883 = vld [vmem:[%s1 + $0xd0] sm:$0xff]
    %v884 = vld [vmem:[%s1 + $0xd8] sm:$0xff]
    %v885 = vld [vmem:[%s1 + $0xe0] sm:$0xff]
    %v886 = vld [vmem:[%s1 + $0xe8] sm:$0xff]
    %v887 = vld [vmem:[%s1 + $0xf0] sm:$0xff]
    %v888 = vld [vmem:[%s1 + $0xf8] sm:$0xff]
    %v889 = vld [vmem:[%s1 + $0x100] sm:$0xff]
    %v890 = vld [vmem:[%s1 + $0x108] sm:$0xff]
    %v891 = vld [vmem:[%s1 + $0x110] sm:$0xff]
    %v892 = vld [vmem:[%s1 + $0x118] sm:$0xff]
    %v893 = vld [vmem:[%s1 + $0x120] sm:$0xff]
    %v894 = vld [vmem:[%s1 + $0x128] sm:$0xff]
    %v895 = vld [vmem:[%s1 + $0x130] sm:$0xff]
    %v896 = vld [vmem:[%s1 + $0x138] sm:$0xff]
    %v898 = vsel %vm50, %v833, 0
    %v901 = vsel %vm50, %v834, 0
    %v904 = vsel %vm50, %v835, 0
    %v907 = vsel %vm50, %v836, 0
    %v910 = vsel %vm50, %v837, 0
    %v913 = vsel %vm50, %v838, 0
    %v916 = vsel %vm50, %v839, 0
    %v919 = vsel %vm50, %v840, 0
    %v922 = vsel %vm50, %v841, 0
    %v925 = vsel %vm50, %v842, 0
    %v928 = vsel %vm50, %v843, 0
    %v931 = vsel %vm50, %v844, 0
    %v934 = vsel %vm50, %v845, 0
    %v937 = vsel %vm50, %v846, 0
    %v940 = vsel %vm50, %v847, 0
    %v943 = vsel %vm50, %v848, 0
    %v946 = vsel %vm50, %v849, 0
    %v949 = vsel %vm50, %v850, 0
    %v952 = vsel %vm50, %v851, 0
    %v955 = vsel %vm50, %v852, 0
    %v958 = vsel %vm50, %v853, 0
    %v961 = vsel %vm50, %v854, 0
    %v964 = vsel %vm50, %v855, 0
    %v967 = vsel %vm50, %v856, 0
    %v970 = vsel %vm50, %v857, 0
    %v973 = vsel %vm50, %v858, 0
    %v976 = vsel %vm50, %v859, 0
    %v979 = vsel %vm50, %v860, 0
    %v982 = vsel %vm50, %v861, 0
    %v985 = vsel %vm50, %v862, 0
    %v988 = vsel %vm50, %v863, 0
    %v991 = vsel %vm50, %v864, 0
    %993 = vmatpush.msra.mxu0 0.0
    %994 = vmatpush.msra.mxu0 0.0
    %995 = vmatpush.msra.mxu0 0.0
    %996 = vmatpush.msra.mxu0 0.0
    %997 = vmatpush.msra.mxu0 0.0
    %998 = vmatpush.msra.mxu0 0.0
    %999 = vmatpush.msra.mxu0 0.0
    %1000 = vmatpush.msra.mxu0 0.0
    %1001 = vmatpush.msra.mxu0 0.0
    %1002 = vmatpush.msra.mxu0 0.0
    %1003 = vmatpush.msra.mxu0 0.0
    %1004 = vmatpush.msra.mxu0 0.0
    %1005 = vmatpush.msra.mxu0 0.0
    %1006 = vmatpush.msra.mxu0 0.0
    %1007 = vmatpush.msra.mxu0 %v27
    %1008 = vmatpush.msra.mxu0 %v26
    %1009 = vmatmul.f32.gmra.mxu0 %v898
    %v1010 = vpop.f32.mrf.mxu0
    %v1011 = vadd.f32 0.0, %v1010
    %1012 = vmatmul.f32.gmra.mxu0 %v901
    %v1013 = vpop.f32.mrf.mxu0
    %v1014 = vadd.f32 0.0, %v1013
    %1015 = vmatmul.f32.gmra.mxu0 %v904
    %v1016 = vpop.f32.mrf.mxu0
    %v1017 = vadd.f32 0.0, %v1016
    %1018 = vmatmul.f32.gmra.mxu0 %v907
    %v1019 = vpop.f32.mrf.mxu0
    %v1020 = vadd.f32 0.0, %v1019
    %1021 = vmatmul.f32.gmra.mxu0 %v910
    %v1022 = vpop.f32.mrf.mxu0
    %v1023 = vadd.f32 0.0, %v1022
    %1024 = vmatmul.f32.gmra.mxu0 %v913
    %v1025 = vpop.f32.mrf.mxu0
    %v1026 = vadd.f32 0.0, %v1025
    %1027 = vmatmul.f32.gmra.mxu0 %v916
    %v1028 = vpop.f32.mrf.mxu0
    %v1029 = vadd.f32 0.0, %v1028
    %1030 = vmatmul.f32.gmra.mxu0 %v919
    %v1031 = vpop.f32.mrf.mxu0
    %v1032 = vadd.f32 0.0, %v1031
    %1033 = vmatmul.f32.gmra.mxu0 %v922
    %v1034 = vpop.f32.mrf.mxu0
    %v1035 = vadd.f32 0.0, %v1034
    %1036 = vmatmul.f32.gmra.mxu0 %v925
    %v1037 = vpop.f32.mrf.mxu0
    %v1038 = vadd.f32 0.0, %v1037
    %1039 = vmatmul.f32.gmra.mxu0 %v928
    %v1040 = vpop.f32.mrf.mxu0
    %v1041 = vadd.f32 0.0, %v1040
    %1042 = vmatmul.f32.gmra.mxu0 %v931
    %v1043 = vpop.f32.mrf.mxu0
    %v1044 = vadd.f32 0.0, %v1043
    %1045 = vmatmul.f32.gmra.mxu0 %v934
    %v1046 = vpop.f32.mrf.mxu0
    %v1047 = vadd.f32 0.0, %v1046
    %1048 = vmatmul.f32.gmra.mxu0 %v937
    %v1049 = vpop.f32.mrf.mxu0
    %v1050 = vadd.f32 0.0, %v1049
    %1051 = vmatmul.f32.gmra.mxu0 %v940
    %v1052 = vpop.f32.mrf.mxu0
    %v1053 = vadd.f32 0.0, %v1052
    %1054 = vmatmul.f32.gmra.mxu0 %v943
    %v1055 = vpop.f32.mrf.mxu0
    %v1056 = vadd.f32 0.0, %v1055
    %1057 = vmatmul.f32.gmra.mxu0 %v946
    %v1058 = vpop.f32.mrf.mxu0
    %v1059 = vadd.f32 0.0, %v1058
    %1060 = vmatmul.f32.gmra.mxu0 %v949
    %v1061 = vpop.f32.mrf.mxu0
    %v1062 = vadd.f32 0.0, %v1061
    %1063 = vmatmul.f32.gmra.mxu0 %v952
    %v1064 = vpop.f32.mrf.mxu0
    %v1065 = vadd.f32 0.0, %v1064
    %1066 = vmatmul.f32.gmra.mxu0 %v955
    %v1067 = vpop.f32.mrf.mxu0
    %v1068 = vadd.f32 0.0, %v1067
    %1069 = vmatmul.f32.gmra.mxu0 %v958
    %v1070 = vpop.f32.mrf.mxu0
    %v1071 = vadd.f32 0.0, %v1070
    %1072 = vmatmul.f32.gmra.mxu0 %v961
    %v1073 = vpop.f32.mrf.mxu0
    %v1074 = vadd.f32 0.0, %v1073
    %1075 = vmatmul.f32.gmra.mxu0 %v964
    %v1076 = vpop.f32.mrf.mxu0
    %v1077 = vadd.f32 0.0, %v1076
    %1078 = vmatmul.f32.gmra.mxu0 %v967
    %v1079 = vpop.f32.mrf.mxu0
    %v1080 = vadd.f32 0.0, %v1079
    %1081 = vmatmul.f32.gmra.mxu0 %v970
    %v1082 = vpop.f32.mrf.mxu0
    %v1083 = vadd.f32 0.0, %v1082
    %1084 = vmatmul.f32.gmra.mxu0 %v973
    %v1085 = vpop.f32.mrf.mxu0
    %v1086 = vadd.f32 0.0, %v1085
    %1087 = vmatmul.f32.gmra.mxu0 %v976
    %v1088 = vpop.f32.mrf.mxu0
    %v1089 = vadd.f32 0.0, %v1088
    %1090 = vmatmul.f32.gmra.mxu0 %v979
    %v1091 = vpop.f32.mrf.mxu0
    %v1092 = vadd.f32 0.0, %v1091
    %1093 = vmatmul.f32.gmra.mxu0 %v982
    %v1094 = vpop.f32.mrf.mxu0
    %v1095 = vadd.f32 0.0, %v1094
    %1096 = vmatmul.f32.gmra.mxu0 %v985
    %v1097 = vpop.f32.mrf.mxu0
    %v1098 = vadd.f32 0.0, %v1097
    %1099 = vmatmul.f32.gmra.mxu0 %v988
    %v1100 = vpop.f32.mrf.mxu0
    %v1101 = vadd.f32 0.0, %v1100
    %1102 = vmatmul.f32.gmra.mxu0 %v991
    %v1103 = vpop.f32.mrf.mxu0
    %v1104 = vadd.f32 0.0, %v1103
    %1105 = vdwg.mxu0
    %v1106 = vperm.slane %v32, 0
    %v1108 = vsel %vm125, %v1011, 0
    %v1111 = vsel %vm125, %v1014, 0
    %v1114 = vsel %vm125, %v1017, 0
    %v1117 = vsel %vm125, %v1020, 0
    %v1120 = vsel %vm125, %v1023, 0
    %v1123 = vsel %vm125, %v1026, 0
    %v1126 = vsel %vm125, %v1029, 0
    %v1129 = vsel %vm125, %v1032, 0
    %v1132 = vsel %vm125, %v1035, 0
    %v1135 = vsel %vm125, %v1038, 0
    %v1138 = vsel %vm125, %v1041, 0
    %v1141 = vsel %vm125, %v1044, 0
    %v1144 = vsel %vm125, %v1047, 0
    %v1147 = vsel %vm125, %v1050, 0
    %v1150 = vsel %vm125, %v1053, 0
    %v1153 = vsel %vm125, %v1056, 0
    %v1156 = vsel %vm125, %v1059, 0
    %v1159 = vsel %vm125, %v1062, 0
    %v1162 = vsel %vm125, %v1065, 0
    %v1165 = vsel %vm125, %v1068, 0
    %v1168 = vsel %vm125, %v1071, 0
    %v1171 = vsel %vm125, %v1074, 0
    %v1174 = vsel %vm125, %v1077, 0
    %v1177 = vsel %vm125, %v1080, 0
    %v1180 = vsel %vm125, %v1083, 0
    %v1183 = vsel %vm125, %v1086, 0
    %v1186 = vsel %vm125, %v1089, 0
    %v1189 = vsel %vm125, %v1092, 0
    %v1192 = vsel %vm125, %v1095, 0
    %v1195 = vsel %vm125, %v1098, 0
    %v1198 = vsel %vm125, %v1101, 0
    %v1201 = vsel %vm125, %v1104, 0
    %1203 = vmatpush.msra.mxu0 0.0
    %1204 = vmatpush.msra.mxu0 0.0
    %1205 = vmatpush.msra.mxu0 0.0
    %1206 = vmatpush.msra.mxu0 0.0
    %1207 = vmatpush.msra.mxu0 0.0
    %1208 = vmatpush.msra.mxu0 0.0
    %1209 = vmatpush.msra.mxu0 0.0
    %1210 = vmatpush.msra.mxu0 0.0
    %1211 = vmatpush.msra.mxu0 0.0
    %1212 = vmatpush.msra.mxu0 0.0
    %1213 = vmatpush.msra.mxu0 0.0
    %1214 = vmatpush.msra.mxu0 0.0
    %1215 = vmatpush.msra.mxu0 %v31
    %1216 = vmatpush.msra.mxu0 %v30
    %1217 = vmatpush.msra.mxu0 %v29
    %1218 = vmatpush.msra.mxu0 %v28
    %1219 = vmatmul.f32.gmra.mxu0 %v1108
    %v1220 = vpop.f32.mrf.mxu0
    %v1221 = vadd.f32 %v1106, %v1220
    %1222 = vmatmul.f32.gmra.mxu0 %v1111
    %v1223 = vpop.f32.mrf.mxu0
    %v1224 = vadd.f32 %v1106, %v1223
    %1225 = vmatmul.f32.gmra.mxu0 %v1114
    %v1226 = vpop.f32.mrf.mxu0
    %v1227 = vadd.f32 %v1106, %v1226
    %1228 = vmatmul.f32.gmra.mxu0 %v1117
    %v1229 = vpop.f32.mrf.mxu0
    %v1230 = vadd.f32 %v1106, %v1229
    %1231 = vmatmul.f32.gmra.mxu0 %v1120
    %v1232 = vpop.f32.mrf.mxu0
    %v1233 = vadd.f32 %v1106, %v1232
    %1234 = vmatmul.f32.gmra.mxu0 %v1123
    %v1235 = vpop.f32.mrf.mxu0
    %v1236 = vadd.f32 %v1106, %v1235
    %1237 = vmatmul.f32.gmra.mxu0 %v1126
    %v1238 = vpop.f32.mrf.mxu0
    %v1239 = vadd.f32 %v1106, %v1238
    %1240 = vmatmul.f32.gmra.mxu0 %v1129
    %v1241 = vpop.f32.mrf.mxu0
    %v1242 = vadd.f32 %v1106, %v1241
    %1243 = vmatmul.f32.gmra.mxu0 %v1132
    %v1244 = vpop.f32.mrf.mxu0
    %v1245 = vadd.f32 %v1106, %v1244
    %1246 = vmatmul.f32.gmra.mxu0 %v1135
    %v1247 = vpop.f32.mrf.mxu0
    %v1248 = vadd.f32 %v1106, %v1247
    %1249 = vmatmul.f32.gmra.mxu0 %v1138
    %v1250 = vpop.f32.mrf.mxu0
    %v1251 = vadd.f32 %v1106, %v1250
    %1252 = vmatmul.f32.gmra.mxu0 %v1141
    %v1253 = vpop.f32.mrf.mxu0
    %v1254 = vadd.f32 %v1106, %v1253
    %1255 = vmatmul.f32.gmra.mxu0 %v1144
    %v1256 = vpop.f32.mrf.mxu0
    %v1257 = vadd.f32 %v1106, %v1256
    %1258 = vmatmul.f32.gmra.mxu0 %v1147
    %v1259 = vpop.f32.mrf.mxu0
    %v1260 = vadd.f32 %v1106, %v1259
    %1261 = vmatmul.f32.gmra.mxu0 %v1150
    %v1262 = vpop.f32.mrf.mxu0
    %v1263 = vadd.f32 %v1106, %v1262
    %1264 = vmatmul.f32.gmra.mxu0 %v1153
    %v1265 = vpop.f32.mrf.mxu0
    %v1266 = vadd.f32 %v1106, %v1265
    %1267 = vmatmul.f32.gmra.mxu0 %v1156
    %v1268 = vpop.f32.mrf.mxu0
    %v1269 = vadd.f32 %v1106, %v1268
    %1270 = vmatmul.f32.gmra.mxu0 %v1159
    %v1271 = vpop.f32.mrf.mxu0
    %v1272 = vadd.f32 %v1106, %v1271
    %1273 = vmatmul.f32.gmra.mxu0 %v1162
    %v1274 = vpop.f32.mrf.mxu0
    %v1275 = vadd.f32 %v1106, %v1274
    %1276 = vmatmul.f32.gmra.mxu0 %v1165
    %v1277 = vpop.f32.mrf.mxu0
    %v1278 = vadd.f32 %v1106, %v1277
    %1279 = vmatmul.f32.gmra.mxu0 %v1168
    %v1280 = vpop.f32.mrf.mxu0
    %v1281 = vadd.f32 %v1106, %v1280
    %1282 = vmatmul.f32.gmra.mxu0 %v1171
    %v1283 = vpop.f32.mrf.mxu0
    %v1284 = vadd.f32 %v1106, %v1283
    %1285 = vmatmul.f32.gmra.mxu0 %v1174
    %v1286 = vpop.f32.mrf.mxu0
    %v1287 = vadd.f32 %v1106, %v1286
    %1288 = vmatmul.f32.gmra.mxu0 %v1177
    %v1289 = vpop.f32.mrf.mxu0
    %v1290 = vadd.f32 %v1106, %v1289
    %1291 = vmatmul.f32.gmra.mxu0 %v1180
    %v1292 = vpop.f32.mrf.mxu0
    %v1293 = vadd.f32 %v1106, %v1292
    %1294 = vmatmul.f32.gmra.mxu0 %v1183
    %v1295 = vpop.f32.mrf.mxu0
    %v1296 = vadd.f32 %v1106, %v1295
    %1297 = vmatmul.f32.gmra.mxu0 %v1186
    %v1298 = vpop.f32.mrf.mxu0
    %v1299 = vadd.f32 %v1106, %v1298
    %1300 = vmatmul.f32.gmra.mxu0 %v1189
    %v1301 = vpop.f32.mrf.mxu0
    %v1302 = vadd.f32 %v1106, %v1301
    %1303 = vmatmul.f32.gmra.mxu0 %v1192
    %v1304 = vpop.f32.mrf.mxu0
    %v1305 = vadd.f32 %v1106, %v1304
    %1306 = vmatmul.f32.gmra.mxu0 %v1195
    %v1307 = vpop.f32.mrf.mxu0
    %v1308 = vadd.f32 %v1106, %v1307
    %1309 = vmatmul.f32.gmra.mxu0 %v1198
    %v1310 = vpop.f32.mrf.mxu0
    %v1311 = vadd.f32 %v1106, %v1310
    %1312 = vmatmul.f32.gmra.mxu0 %v1201
    %v1313 = vpop.f32.mrf.mxu0
    %v1314 = vadd.f32 %v1106, %v1313
    %1315 = vdwg.mxu0
    %v1316 = vtanh.pop %v1221
    %v1317 = vtanh.pop %v1224
    %v1318 = vtanh.pop %v1227
    %v1319 = vtanh.pop %v1230
    %v1320 = vtanh.pop %v1233
    %v1321 = vtanh.pop %v1236
    %v1322 = vtanh.pop %v1239
    %v1323 = vtanh.pop %v1242
    %v1324 = vtanh.pop %v1245
    %v1325 = vtanh.pop %v1248
    %v1326 = vtanh.pop %v1251
    %v1327 = vtanh.pop %v1254
    %v1328 = vtanh.pop %v1257
    %v1329 = vtanh.pop %v1260
    %v1330 = vtanh.pop %v1263
    %v1331 = vtanh.pop %v1266
    %v1332 = vtanh.pop %v1269
    %v1333 = vtanh.pop %v1272
    %v1334 = vtanh.pop %v1275
    %v1335 = vtanh.pop %v1278
    %v1336 = vtanh.pop %v1281
    %v1337 = vtanh.pop %v1284
    %v1338 = vtanh.pop %v1287
    %v1339 = vtanh.pop %v1290
    %v1340 = vtanh.pop %v1293
    %v1341 = vtanh.pop %v1296
    %v1342 = vtanh.pop %v1299
    %v1343 = vtanh.pop %v1302
    %v1344 = vtanh.pop %v1305
    %v1345 = vtanh.pop %v1308
    %v1346 = vtanh.pop %v1311
    %v1347 = vtanh.pop %v1314
    %v1349 = vsel %vm125, %v1316, 0
    %v1352 = vsel %vm125, %v1317, 0
    %v1355 = vsel %vm125, %v1318, 0
    %v1358 = vsel %vm125, %v1319, 0
    %v1361 = vsel %vm125, %v1320, 0
    %v1364 = vsel %vm125, %v1321, 0
    %v1367 = vsel %vm125, %v1322, 0
    %v1370 = vsel %vm125, %v1323, 0
    %v1373 = vsel %vm125, %v1324, 0
    %v1376 = vsel %vm125, %v1325, 0
    %v1379 = vsel %vm125, %v1326, 0
    %v1382 = vsel %vm125, %v1327, 0
    %v1385 = vsel %vm125, %v1328, 0
    %v1388 = vsel %vm125, %v1329, 0
    %v1391 = vsel %vm125, %v1330, 0
    %v1394 = vsel %vm125, %v1331, 0
    %v1397 = vsel %vm125, %v1332, 0
    %v1400 = vsel %vm125, %v1333, 0
    %v1403 = vsel %vm125, %v1334, 0
    %v1406 = vsel %vm125, %v1335, 0
    %v1409 = vsel %vm125, %v1336, 0
    %v1412 = vsel %vm125, %v1337, 0
    %v1415 = vsel %vm125, %v1338, 0
    %v1418 = vsel %vm125, %v1339, 0
    %v1421 = vsel %vm125, %v1340, 0
    %v1424 = vsel %vm125, %v1341, 0
    %v1427 = vsel %vm125, %v1342, 0
    %v1430 = vsel %vm125, %v1343, 0
    %v1433 = vsel %vm125, %v1344, 0
    %v1436 = vsel %vm125, %v1345, 0
    %v1439 = vsel %vm125, %v1346, 0
    %v1442 = vsel %vm125, %v1347, 0
    %1444 = vmatpush.msra.mxu0 0.0
    %1445 = vmatpush.msra.mxu0 0.0
    %1446 = vmatpush.msra.mxu0 0.0
    %1447 = vmatpush.msra.mxu0 0.0
    %1448 = vmatpush.msra.mxu0 0.0
    %1449 = vmatpush.msra.mxu0 0.0
    %1450 = vmatpush.msra.mxu0 0.0
    %1451 = vmatpush.msra.mxu0 0.0
    %1452 = vmatpush.msra.mxu0 0.0
    %1453 = vmatpush.msra.mxu0 0.0
    %1454 = vmatpush.msra.mxu0 0.0
    %1455 = vmatpush.msra.mxu0 0.0
    %1456 = vmatpush.msra.mxu0 %v36
    %1457 = vmatpush.msra.mxu0 %v35
    %1458 = vmatpush.msra.mxu0 %v34
    %1459 = vmatpush.msra.mxu0 %v33
    %1460 = vmatmul.f32.gmra.mxu0 %v1349
    %v1461 = vpop.f32.mrf.mxu0
    %v1462 = vadd.f32 0.0, %v1461
    %1463 = vmatmul.f32.gmra.mxu0 %v1352
    %v1464 = vpop.f32.mrf.mxu0
    %v1465 = vadd.f32 0.0, %v1464
    %1466 = vmatmul.f32.gmra.mxu0 %v1355
    %v1467 = vpop.f32.mrf.mxu0
    %v1468 = vadd.f32 0.0, %v1467
    %1469 = vmatmul.f32.gmra.mxu0 %v1358
    %v1470 = vpop.f32.mrf.mxu0
    %v1471 = vadd.f32 0.0, %v1470
    %1472 = vmatmul.f32.gmra.mxu0 %v1361
    %v1473 = vpop.f32.mrf.mxu0
    %v1474 = vadd.f32 0.0, %v1473
    %1475 = vmatmul.f32.gmra.mxu0 %v1364
    %v1476 = vpop.f32.mrf.mxu0
    %v1477 = vadd.f32 0.0, %v1476
    %1478 = vmatmul.f32.gmra.mxu0 %v1367
    %v1479 = vpop.f32.mrf.mxu0
    %v1480 = vadd.f32 0.0, %v1479
    %1481 = vmatmul.f32.gmra.mxu0 %v1370
    %v1482 = vpop.f32.mrf.mxu0
    %v1483 = vadd.f32 0.0, %v1482
    %1484 = vmatmul.f32.gmra.mxu0 %v1373
    %v1485 = vpop.f32.mrf.mxu0
    %v1486 = vadd.f32 0.0, %v1485
    %1487 = vmatmul.f32.gmra.mxu0 %v1376
    %v1488 = vpop.f32.mrf.mxu0
    %v1489 = vadd.f32 0.0, %v1488
    %1490 = vmatmul.f32.gmra.mxu0 %v1379
    %v1491 = vpop.f32.mrf.mxu0
    %v1492 = vadd.f32 0.0, %v1491
    %1493 = vmatmul.f32.gmra.mxu0 %v1382
    %v1494 = vpop.f32.mrf.mxu0
    %v1495 = vadd.f32 0.0, %v1494
    %1496 = vmatmul.f32.gmra.mxu0 %v1385
    %v1497 = vpop.f32.mrf.mxu0
    %v1498 = vadd.f32 0.0, %v1497
    %1499 = vmatmul.f32.gmra.mxu0 %v1388
    %v1500 = vpop.f32.mrf.mxu0
    %v1501 = vadd.f32 0.0, %v1500
    %1502 = vmatmul.f32.gmra.mxu0 %v1391
    %v1503 = vpop.f32.mrf.mxu0
    %v1504 = vadd.f32 0.0, %v1503
    %1505 = vmatmul.f32.gmra.mxu0 %v1394
    %v1506 = vpop.f32.mrf.mxu0
    %v1507 = vadd.f32 0.0, %v1506
    %1508 = vmatmul.f32.gmra.mxu0 %v1397
    %v1509 = vpop.f32.mrf.mxu0
    %v1510 = vadd.f32 0.0, %v1509
    %1511 = vmatmul.f32.gmra.mxu0 %v1400
    %v1512 = vpop.f32.mrf.mxu0
    %v1513 = vadd.f32 0.0, %v1512
    %1514 = vmatmul.f32.gmra.mxu0 %v1403
    %v1515 = vpop.f32.mrf.mxu0
    %v1516 = vadd.f32 0.0, %v1515
    %1517 = vmatmul.f32.gmra.mxu0 %v1406
    %v1518 = vpop.f32.mrf.mxu0
    %v1519 = vadd.f32 0.0, %v1518
    %1520 = vmatmul.f32.gmra.mxu0 %v1409
    %v1521 = vpop.f32.mrf.mxu0
    %v1522 = vadd.f32 0.0, %v1521
    %1523 = vmatmul.f32.gmra.mxu0 %v1412
    %v1524 = vpop.f32.mrf.mxu0
    %v1525 = vadd.f32 0.0, %v1524
    %1526 = vmatmul.f32.gmra.mxu0 %v1415
    %v1527 = vpop.f32.mrf.mxu0
    %v1528 = vadd.f32 0.0, %v1527
    %1529 = vmatmul.f32.gmra.mxu0 %v1418
    %v1530 = vpop.f32.mrf.mxu0
    %v1531 = vadd.f32 0.0, %v1530
    %1532 = vmatmul.f32.gmra.mxu0 %v1421
    %v1533 = vpop.f32.mrf.mxu0
    %v1534 = vadd.f32 0.0, %v1533
    %1535 = vmatmul.f32.gmra.mxu0 %v1424
    %v1536 = vpop.f32.mrf.mxu0
    %v1537 = vadd.f32 0.0, %v1536
    %1538 = vmatmul.f32.gmra.mxu0 %v1427
    %v1539 = vpop.f32.mrf.mxu0
    %v1540 = vadd.f32 0.0, %v1539
    %1541 = vmatmul.f32.gmra.mxu0 %v1430
    %v1542 = vpop.f32.mrf.mxu0
    %v1543 = vadd.f32 0.0, %v1542
    %1544 = vmatmul.f32.gmra.mxu0 %v1433
    %v1545 = vpop.f32.mrf.mxu0
    %v1546 = vadd.f32 0.0, %v1545
    %1547 = vmatmul.f32.gmra.mxu0 %v1436
    %v1548 = vpop.f32.mrf.mxu0
    %v1549 = vadd.f32 0.0, %v1548
    %1550 = vmatmul.f32.gmra.mxu0 %v1439
    %v1551 = vpop.f32.mrf.mxu0
    %v1552 = vadd.f32 0.0, %v1551
    %1553 = vmatmul.f32.gmra.mxu0 %v1442
    %v1554 = vpop.f32.mrf.mxu0
    %v1555 = vadd.f32 0.0, %v1554
    %1556 = vdwg.mxu0
    %vm1557 = vcmp.gt.f32.partialorder %v865, 0.0
    %vm1558 = vcmp.gt.f32.partialorder %v866, 0.0
    %vm1559 = vcmp.gt.f32.partialorder %v867, 0.0
    %vm1560 = vcmp.gt.f32.partialorder %v868, 0.0
    %vm1561 = vcmp.gt.f32.partialorder %v869, 0.0
    %vm1562 = vcmp.gt.f32.partialorder %v870, 0.0
    %vm1563 = vcmp.gt.f32.partialorder %v871, 0.0
    %vm1564 = vcmp.gt.f32.partialorder %v872, 0.0
    %vm1565 = vcmp.gt.f32.partialorder %v873, 0.0
    %vm1566 = vcmp.gt.f32.partialorder %v874, 0.0
    %vm1567 = vcmp.gt.f32.partialorder %v875, 0.0
    %vm1568 = vcmp.gt.f32.partialorder %v876, 0.0
    %vm1569 = vcmp.gt.f32.partialorder %v877, 0.0
    %vm1570 = vcmp.gt.f32.partialorder %v878, 0.0
    %vm1571 = vcmp.gt.f32.partialorder %v879, 0.0
    %vm1572 = vcmp.gt.f32.partialorder %v880, 0.0
    %vm1573 = vcmp.gt.f32.partialorder %v881, 0.0
    %vm1574 = vcmp.gt.f32.partialorder %v882, 0.0
    %vm1575 = vcmp.gt.f32.partialorder %v883, 0.0
    %vm1576 = vcmp.gt.f32.partialorder %v884, 0.0
    %vm1577 = vcmp.gt.f32.partialorder %v885, 0.0
    %vm1578 = vcmp.gt.f32.partialorder %v886, 0.0
    %vm1579 = vcmp.gt.f32.partialorder %v887, 0.0
    %vm1580 = vcmp.gt.f32.partialorder %v888, 0.0
    %vm1581 = vcmp.gt.f32.partialorder %v889, 0.0
    %vm1582 = vcmp.gt.f32.partialorder %v890, 0.0
    %vm1583 = vcmp.gt.f32.partialorder %v891, 0.0
    %vm1584 = vcmp.gt.f32.partialorder %v892, 0.0
    %vm1585 = vcmp.gt.f32.partialorder %v893, 0.0
    %vm1586 = vcmp.gt.f32.partialorder %v894, 0.0
    %vm1587 = vcmp.gt.f32.partialorder %v895, 0.0
    %vm1588 = vcmp.gt.f32.partialorder %v896, 0.0
    %v1589 = vsel %vm1557, %v1462, -1e+30
    %v1590 = vsel %vm1558, %v1465, -1e+30
    %v1591 = vsel %vm1559, %v1468, -1e+30
    %v1592 = vsel %vm1560, %v1471, -1e+30
    %v1593 = vsel %vm1561, %v1474, -1e+30
    %v1594 = vsel %vm1562, %v1477, -1e+30
    %v1595 = vsel %vm1563, %v1480, -1e+30
    %v1596 = vsel %vm1564, %v1483, -1e+30
    %v1597 = vsel %vm1565, %v1486, -1e+30
    %v1598 = vsel %vm1566, %v1489, -1e+30
    %v1599 = vsel %vm1567, %v1492, -1e+30
    %v1600 = vsel %vm1568, %v1495, -1e+30
    %v1601 = vsel %vm1569, %v1498, -1e+30
    %v1602 = vsel %vm1570, %v1501, -1e+30
    %v1603 = vsel %vm1571, %v1504, -1e+30
    %v1604 = vsel %vm1572, %v1507, -1e+30
    %v1605 = vsel %vm1573, %v1510, -1e+30
    %v1606 = vsel %vm1574, %v1513, -1e+30
    %v1607 = vsel %vm1575, %v1516, -1e+30
    %v1608 = vsel %vm1576, %v1519, -1e+30
    %v1609 = vsel %vm1577, %v1522, -1e+30
    %v1610 = vsel %vm1578, %v1525, -1e+30
    %v1611 = vsel %vm1579, %v1528, -1e+30
    %v1612 = vsel %vm1580, %v1531, -1e+30
    %v1613 = vsel %vm1581, %v1534, -1e+30
    %v1614 = vsel %vm1582, %v1537, -1e+30
    %v1615 = vsel %vm1583, %v1540, -1e+30
    %v1616 = vsel %vm1584, %v1543, -1e+30
    %v1617 = vsel %vm1585, %v1546, -1e+30
    %v1618 = vsel %vm1586, %v1549, -1e+30
    %v1619 = vsel %vm1587, %v1552, -1e+30
    %v1620 = vsel %vm1588, %v1555, -1e+30
    %vm1621 = vcmask 7168
    %v1622 = vsel %vm1621, %v1589, -inf
    %v1623 = vrot.slane %v1622, 4
    %v1624 = vmax.f32 %v1622, %v1623
    %v1625 = vrot.slane %v1624, 2
    %v1626 = vmax.f32 %v1624, %v1625
    %v1627 = vrot.slane %v1626, 1
    %v1628 = vmax.f32 %v1626, %v1627
    %v1629 = vsel %vm1621, %v1590, -inf
    %v1630 = vrot.slane %v1629, 4
    %v1631 = vmax.f32 %v1629, %v1630
    %v1632 = vrot.slane %v1631, 2
    %v1633 = vmax.f32 %v1631, %v1632
    %v1634 = vrot.slane %v1633, 1
    %v1635 = vmax.f32 %v1633, %v1634
    %v1636 = vsel %vm1621, %v1591, -inf
    %v1637 = vrot.slane %v1636, 4
    %v1638 = vmax.f32 %v1636, %v1637
    %v1639 = vrot.slane %v1638, 2
    %v1640 = vmax.f32 %v1638, %v1639
    %v1641 = vrot.slane %v1640, 1
    %v1642 = vmax.f32 %v1640, %v1641
    %v1643 = vsel %vm1621, %v1592, -inf
    %v1644 = vrot.slane %v1643, 4
    %v1645 = vmax.f32 %v1643, %v1644
    %v1646 = vrot.slane %v1645, 2
    %v1647 = vmax.f32 %v1645, %v1646
    %v1648 = vrot.slane %v1647, 1
    %v1649 = vmax.f32 %v1647, %v1648
    %v1650 = vsel %vm1621, %v1593, -inf
    %v1651 = vrot.slane %v1650, 4
    %v1652 = vmax.f32 %v1650, %v1651
    %v1653 = vrot.slane %v1652, 2
    %v1654 = vmax.f32 %v1652, %v1653
    %v1655 = vrot.slane %v1654, 1
    %v1656 = vmax.f32 %v1654, %v1655
    %v1657 = vsel %vm1621, %v1594, -inf
    %v1658 = vrot.slane %v1657, 4
    %v1659 = vmax.f32 %v1657, %v1658
    %v1660 = vrot.slane %v1659, 2
    %v1661 = vmax.f32 %v1659, %v1660
    %v1662 = vrot.slane %v1661, 1
    %v1663 = vmax.f32 %v1661, %v1662
    %v1664 = vsel %vm1621, %v1595, -inf
    %v1665 = vrot.slane %v1664, 4
    %v1666 = vmax.f32 %v1664, %v1665
    %v1667 = vrot.slane %v1666, 2
    %v1668 = vmax.f32 %v1666, %v1667
    %v1669 = vrot.slane %v1668, 1
    %v1670 = vmax.f32 %v1668, %v1669
    %v1671 = vsel %vm1621, %v1596, -inf
    %v1672 = vrot.slane %v1671, 4
    %v1673 = vmax.f32 %v1671, %v1672
    %v1674 = vrot.slane %v1673, 2
    %v1675 = vmax.f32 %v1673, %v1674
    %v1676 = vrot.slane %v1675, 1
    %v1677 = vmax.f32 %v1675, %v1676
    %v1678 = vsel %vm1621, %v1597, -inf
    %v1679 = vrot.slane %v1678, 4
    %v1680 = vmax.f32 %v1678, %v1679
    %v1681 = vrot.slane %v1680, 2
    %v1682 = vmax.f32 %v1680, %v1681
    %v1683 = vrot.slane %v1682, 1
    %v1684 = vmax.f32 %v1682, %v1683
    %v1685 = vsel %vm1621, %v1598, -inf
    %v1686 = vrot.slane %v1685, 4
    %v1687 = vmax.f32 %v1685, %v1686
    %v1688 = vrot.slane %v1687, 2
    %v1689 = vmax.f32 %v1687, %v1688
    %v1690 = vrot.slane %v1689, 1
    %v1691 = vmax.f32 %v1689, %v1690
    %v1692 = vsel %vm1621, %v1599, -inf
    %v1693 = vrot.slane %v1692, 4
    %v1694 = vmax.f32 %v1692, %v1693
    %v1695 = vrot.slane %v1694, 2
    %v1696 = vmax.f32 %v1694, %v1695
    %v1697 = vrot.slane %v1696, 1
    %v1698 = vmax.f32 %v1696, %v1697
    %v1699 = vsel %vm1621, %v1600, -inf
    %v1700 = vrot.slane %v1699, 4
    %v1701 = vmax.f32 %v1699, %v1700
    %v1702 = vrot.slane %v1701, 2
    %v1703 = vmax.f32 %v1701, %v1702
    %v1704 = vrot.slane %v1703, 1
    %v1705 = vmax.f32 %v1703, %v1704
    %v1706 = vsel %vm1621, %v1601, -inf
    %v1707 = vrot.slane %v1706, 4
    %v1708 = vmax.f32 %v1706, %v1707
    %v1709 = vrot.slane %v1708, 2
    %v1710 = vmax.f32 %v1708, %v1709
    %v1711 = vrot.slane %v1710, 1
    %v1712 = vmax.f32 %v1710, %v1711
    %v1713 = vsel %vm1621, %v1602, -inf
    %v1714 = vrot.slane %v1713, 4
    %v1715 = vmax.f32 %v1713, %v1714
    %v1716 = vrot.slane %v1715, 2
    %v1717 = vmax.f32 %v1715, %v1716
    %v1718 = vrot.slane %v1717, 1
    %v1719 = vmax.f32 %v1717, %v1718
    %v1720 = vsel %vm1621, %v1603, -inf
    %v1721 = vrot.slane %v1720, 4
    %v1722 = vmax.f32 %v1720, %v1721
    %v1723 = vrot.slane %v1722, 2
    %v1724 = vmax.f32 %v1722, %v1723
    %v1725 = vrot.slane %v1724, 1
    %v1726 = vmax.f32 %v1724, %v1725
    %v1727 = vsel %vm1621, %v1604, -inf
    %v1728 = vrot.slane %v1727, 4
    %v1729 = vmax.f32 %v1727, %v1728
    %v1730 = vrot.slane %v1729, 2
    %v1731 = vmax.f32 %v1729, %v1730
    %v1732 = vrot.slane %v1731, 1
    %v1733 = vmax.f32 %v1731, %v1732
    %v1734 = vsel %vm1621, %v1605, -inf
    %v1735 = vrot.slane %v1734, 4
    %v1736 = vmax.f32 %v1734, %v1735
    %v1737 = vrot.slane %v1736, 2
    %v1738 = vmax.f32 %v1736, %v1737
    %v1739 = vrot.slane %v1738, 1
    %v1740 = vmax.f32 %v1738, %v1739
    %v1741 = vsel %vm1621, %v1606, -inf
    %v1742 = vrot.slane %v1741, 4
    %v1743 = vmax.f32 %v1741, %v1742
    %v1744 = vrot.slane %v1743, 2
    %v1745 = vmax.f32 %v1743, %v1744
    %v1746 = vrot.slane %v1745, 1
    %v1747 = vmax.f32 %v1745, %v1746
    %v1748 = vsel %vm1621, %v1607, -inf
    %v1749 = vrot.slane %v1748, 4
    %v1750 = vmax.f32 %v1748, %v1749
    %v1751 = vrot.slane %v1750, 2
    %v1752 = vmax.f32 %v1750, %v1751
    %v1753 = vrot.slane %v1752, 1
    %v1754 = vmax.f32 %v1752, %v1753
    %v1755 = vsel %vm1621, %v1608, -inf
    %v1756 = vrot.slane %v1755, 4
    %v1757 = vmax.f32 %v1755, %v1756
    %v1758 = vrot.slane %v1757, 2
    %v1759 = vmax.f32 %v1757, %v1758
    %v1760 = vrot.slane %v1759, 1
    %v1761 = vmax.f32 %v1759, %v1760
    %v1762 = vsel %vm1621, %v1609, -inf
    %v1763 = vrot.slane %v1762, 4
    %v1764 = vmax.f32 %v1762, %v1763
    %v1765 = vrot.slane %v1764, 2
    %v1766 = vmax.f32 %v1764, %v1765
    %v1767 = vrot.slane %v1766, 1
    %v1768 = vmax.f32 %v1766, %v1767
    %v1769 = vsel %vm1621, %v1610, -inf
    %v1770 = vrot.slane %v1769, 4
    %v1771 = vmax.f32 %v1769, %v1770
    %v1772 = vrot.slane %v1771, 2
    %v1773 = vmax.f32 %v1771, %v1772
    %v1774 = vrot.slane %v1773, 1
    %v1775 = vmax.f32 %v1773, %v1774
    %v1776 = vsel %vm1621, %v1611, -inf
    %v1777 = vrot.slane %v1776, 4
    %v1778 = vmax.f32 %v1776, %v1777
    %v1779 = vrot.slane %v1778, 2
    %v1780 = vmax.f32 %v1778, %v1779
    %v1781 = vrot.slane %v1780, 1
    %v1782 = vmax.f32 %v1780, %v1781
    %v1783 = vsel %vm1621, %v1612, -inf
    %v1784 = vrot.slane %v1783, 4
    %v1785 = vmax.f32 %v1783, %v1784
    %v1786 = vrot.slane %v1785, 2
    %v1787 = vmax.f32 %v1785, %v1786
    %v1788 = vrot.slane %v1787, 1
    %v1789 = vmax.f32 %v1787, %v1788
    %v1790 = vsel %vm1621, %v1613, -inf
    %v1791 = vrot.slane %v1790, 4
    %v1792 = vmax.f32 %v1790, %v1791
    %v1793 = vrot.slane %v1792, 2
    %v1794 = vmax.f32 %v1792, %v1793
    %v1795 = vrot.slane %v1794, 1
    %v1796 = vmax.f32 %v1794, %v1795
    %v1797 = vsel %vm1621, %v1614, -inf
    %v1798 = vrot.slane %v1797, 4
    %v1799 = vmax.f32 %v1797, %v1798
    %v1800 = vrot.slane %v1799, 2
    %v1801 = vmax.f32 %v1799, %v1800
    %v1802 = vrot.slane %v1801, 1
    %v1803 = vmax.f32 %v1801, %v1802
    %v1804 = vsel %vm1621, %v1615, -inf
    %v1805 = vrot.slane %v1804, 4
    %v1806 = vmax.f32 %v1804, %v1805
    %v1807 = vrot.slane %v1806, 2
    %v1808 = vmax.f32 %v1806, %v1807
    %v1809 = vrot.slane %v1808, 1
    %v1810 = vmax.f32 %v1808, %v1809
    %v1811 = vsel %vm1621, %v1616, -inf
    %v1812 = vrot.slane %v1811, 4
    %v1813 = vmax.f32 %v1811, %v1812
    %v1814 = vrot.slane %v1813, 2
    %v1815 = vmax.f32 %v1813, %v1814
    %v1816 = vrot.slane %v1815, 1
    %v1817 = vmax.f32 %v1815, %v1816
    %v1818 = vsel %vm1621, %v1617, -inf
    %v1819 = vrot.slane %v1818, 4
    %v1820 = vmax.f32 %v1818, %v1819
    %v1821 = vrot.slane %v1820, 2
    %v1822 = vmax.f32 %v1820, %v1821
    %v1823 = vrot.slane %v1822, 1
    %v1824 = vmax.f32 %v1822, %v1823
    %v1825 = vsel %vm1621, %v1618, -inf
    %v1826 = vrot.slane %v1825, 4
    %v1827 = vmax.f32 %v1825, %v1826
    %v1828 = vrot.slane %v1827, 2
    %v1829 = vmax.f32 %v1827, %v1828
    %v1830 = vrot.slane %v1829, 1
    %v1831 = vmax.f32 %v1829, %v1830
    %v1832 = vsel %vm1621, %v1619, -inf
    %v1833 = vrot.slane %v1832, 4
    %v1834 = vmax.f32 %v1832, %v1833
    %v1835 = vrot.slane %v1834, 2
    %v1836 = vmax.f32 %v1834, %v1835
    %v1837 = vrot.slane %v1836, 1
    %v1838 = vmax.f32 %v1836, %v1837
    %v1839 = vsel %vm1621, %v1620, -inf
    %v1840 = vrot.slane %v1839, 4
    %v1841 = vmax.f32 %v1839, %v1840
    %v1842 = vrot.slane %v1841, 2
    %v1843 = vmax.f32 %v1841, %v1842
    %v1844 = vrot.slane %v1843, 1
    %v1845 = vmax.f32 %v1843, %v1844
    %v1846 = vsub.f32 %v1589, %v1628
    %v1847 = vsub.f32 %v1590, %v1635
    %v1848 = vsub.f32 %v1591, %v1642
    %v1849 = vsub.f32 %v1592, %v1649
    %v1850 = vsub.f32 %v1593, %v1656
    %v1851 = vsub.f32 %v1594, %v1663
    %v1852 = vsub.f32 %v1595, %v1670
    %v1853 = vsub.f32 %v1596, %v1677
    %v1854 = vsub.f32 %v1597, %v1684
    %v1855 = vsub.f32 %v1598, %v1691
    %v1856 = vsub.f32 %v1599, %v1698
    %v1857 = vsub.f32 %v1600, %v1705
    %v1858 = vsub.f32 %v1601, %v1712
    %v1859 = vsub.f32 %v1602, %v1719
    %v1860 = vsub.f32 %v1603, %v1726
    %v1861 = vsub.f32 %v1604, %v1733
    %v1862 = vsub.f32 %v1605, %v1740
    %v1863 = vsub.f32 %v1606, %v1747
    %v1864 = vsub.f32 %v1607, %v1754
    %v1865 = vsub.f32 %v1608, %v1761
    %v1866 = vsub.f32 %v1609, %v1768
    %v1867 = vsub.f32 %v1610, %v1775
    %v1868 = vsub.f32 %v1611, %v1782
    %v1869 = vsub.f32 %v1612, %v1789
    %v1870 = vsub.f32 %v1613, %v1796
    %v1871 = vsub.f32 %v1614, %v1803
    %v1872 = vsub.f32 %v1615, %v1810
    %v1873 = vsub.f32 %v1616, %v1817
    %v1874 = vsub.f32 %v1617, %v1824
    %v1875 = vsub.f32 %v1618, %v1831
    %v1876 = vsub.f32 %v1619, %v1838
    %v1877 = vsub.f32 %v1620, %v1845
    %v1878 = vmul.f32 %v1846, 1.442695
    %v1879 = vpow.pop %v1878
    %v1880 = vmul.f32 %v1847, 1.442695
    %v1881 = vpow.pop %v1880
    %v1882 = vmul.f32 %v1848, 1.442695
    %v1883 = vpow.pop %v1882
    %v1884 = vmul.f32 %v1849, 1.442695
    %v1885 = vpow.pop %v1884
    %v1886 = vmul.f32 %v1850, 1.442695
    %v1887 = vpow.pop %v1886
    %v1888 = vmul.f32 %v1851, 1.442695
    %v1889 = vpow.pop %v1888
    %v1890 = vmul.f32 %v1852, 1.442695
    %v1891 = vpow.pop %v1890
    %v1892 = vmul.f32 %v1853, 1.442695
    %v1893 = vpow.pop %v1892
    %v1894 = vmul.f32 %v1854, 1.442695
    %v1895 = vpow.pop %v1894
    %v1896 = vmul.f32 %v1855, 1.442695
    %v1897 = vpow.pop %v1896
    %v1898 = vmul.f32 %v1856, 1.442695
    %v1899 = vpow.pop %v1898
    %v1900 = vmul.f32 %v1857, 1.442695
    %v1901 = vpow.pop %v1900
    %v1902 = vmul.f32 %v1858, 1.442695
    %v1903 = vpow.pop %v1902
    %v1904 = vmul.f32 %v1859, 1.442695
    %v1905 = vpow.pop %v1904
    %v1906 = vmul.f32 %v1860, 1.442695
    %v1907 = vpow.pop %v1906
    %v1908 = vmul.f32 %v1861, 1.442695
    %v1909 = vpow.pop %v1908
    %v1910 = vmul.f32 %v1862, 1.442695
    %v1911 = vpow.pop %v1910
    %v1912 = vmul.f32 %v1863, 1.442695
    %v1913 = vpow.pop %v1912
    %v1914 = vmul.f32 %v1864, 1.442695
    %v1915 = vpow.pop %v1914
    %v1916 = vmul.f32 %v1865, 1.442695
    %v1917 = vpow.pop %v1916
    %v1918 = vmul.f32 %v1866, 1.442695
    %v1919 = vpow.pop %v1918
    %v1920 = vmul.f32 %v1867, 1.442695
    %v1921 = vpow.pop %v1920
    %v1922 = vmul.f32 %v1868, 1.442695
    %v1923 = vpow.pop %v1922
    %v1924 = vmul.f32 %v1869, 1.442695
    %v1925 = vpow.pop %v1924
    %v1926 = vmul.f32 %v1870, 1.442695
    %v1927 = vpow.pop %v1926
    %v1928 = vmul.f32 %v1871, 1.442695
    %v1929 = vpow.pop %v1928
    %v1930 = vmul.f32 %v1872, 1.442695
    %v1931 = vpow.pop %v1930
    %v1932 = vmul.f32 %v1873, 1.442695
    %v1933 = vpow.pop %v1932
    %v1934 = vmul.f32 %v1874, 1.442695
    %v1935 = vpow.pop %v1934
    %v1936 = vmul.f32 %v1875, 1.442695
    %v1937 = vpow.pop %v1936
    %v1938 = vmul.f32 %v1876, 1.442695
    %v1939 = vpow.pop %v1938
    %v1940 = vmul.f32 %v1877, 1.442695
    %v1941 = vpow.pop %v1940
    %v1942 = vmul.f32 %v1879, %v865
    %v1943 = vmul.f32 %v1881, %v866
    %v1944 = vmul.f32 %v1883, %v867
    %v1945 = vmul.f32 %v1885, %v868
    %v1946 = vmul.f32 %v1887, %v869
    %v1947 = vmul.f32 %v1889, %v870
    %v1948 = vmul.f32 %v1891, %v871
    %v1949 = vmul.f32 %v1893, %v872
    %v1950 = vmul.f32 %v1895, %v873
    %v1951 = vmul.f32 %v1897, %v874
    %v1952 = vmul.f32 %v1899, %v875
    %v1953 = vmul.f32 %v1901, %v876
    %v1954 = vmul.f32 %v1903, %v877
    %v1955 = vmul.f32 %v1905, %v878
    %v1956 = vmul.f32 %v1907, %v879
    %v1957 = vmul.f32 %v1909, %v880
    %v1958 = vmul.f32 %v1911, %v881
    %v1959 = vmul.f32 %v1913, %v882
    %v1960 = vmul.f32 %v1915, %v883
    %v1961 = vmul.f32 %v1917, %v884
    %v1962 = vmul.f32 %v1919, %v885
    %v1963 = vmul.f32 %v1921, %v886
    %v1964 = vmul.f32 %v1923, %v887
    %v1965 = vmul.f32 %v1925, %v888
    %v1966 = vmul.f32 %v1927, %v889
    %v1967 = vmul.f32 %v1929, %v890
    %v1968 = vmul.f32 %v1931, %v891
    %v1969 = vmul.f32 %v1933, %v892
    %v1970 = vmul.f32 %v1935, %v893
    %v1971 = vmul.f32 %v1937, %v894
    %v1972 = vmul.f32 %v1939, %v895
    %v1973 = vmul.f32 %v1941, %v896
    %v1974 = vsel %vm1621, %v1942, 0.0
    %v1975 = vrot.slane %v1974, 4
    %v1976 = vadd.f32 %v1974, %v1975
    %v1977 = vrot.slane %v1976, 2
    %v1978 = vadd.f32 %v1976, %v1977
    %v1979 = vrot.slane %v1978, 1
    %v1980 = vadd.f32 %v1978, %v1979
    %v1981 = vsel %vm1621, %v1943, 0.0
    %v1982 = vrot.slane %v1981, 4
    %v1983 = vadd.f32 %v1981, %v1982
    %v1984 = vrot.slane %v1983, 2
    %v1985 = vadd.f32 %v1983, %v1984
    %v1986 = vrot.slane %v1985, 1
    %v1987 = vadd.f32 %v1985, %v1986
    %v1988 = vsel %vm1621, %v1944, 0.0
    %v1989 = vrot.slane %v1988, 4
    %v1990 = vadd.f32 %v1988, %v1989
    %v1991 = vrot.slane %v1990, 2
    %v1992 = vadd.f32 %v1990, %v1991
    %v1993 = vrot.slane %v1992, 1
    %v1994 = vadd.f32 %v1992, %v1993
    %v1995 = vsel %vm1621, %v1945, 0.0
    %v1996 = vrot.slane %v1995, 4
    %v1997 = vadd.f32 %v1995, %v1996
    %v1998 = vrot.slane %v1997, 2
    %v1999 = vadd.f32 %v1997, %v1998
    %v2000 = vrot.slane %v1999, 1
    %v2001 = vadd.f32 %v1999, %v2000
    %v2002 = vsel %vm1621, %v1946, 0.0
    %v2003 = vrot.slane %v2002, 4
    %v2004 = vadd.f32 %v2002, %v2003
    %v2005 = vrot.slane %v2004, 2
    %v2006 = vadd.f32 %v2004, %v2005
    %v2007 = vrot.slane %v2006, 1
    %v2008 = vadd.f32 %v2006, %v2007
    %v2009 = vsel %vm1621, %v1947, 0.0
    %v2010 = vrot.slane %v2009, 4
    %v2011 = vadd.f32 %v2009, %v2010
    %v2012 = vrot.slane %v2011, 2
    %v2013 = vadd.f32 %v2011, %v2012
    %v2014 = vrot.slane %v2013, 1
    %v2015 = vadd.f32 %v2013, %v2014
    %v2016 = vsel %vm1621, %v1948, 0.0
    %v2017 = vrot.slane %v2016, 4
    %v2018 = vadd.f32 %v2016, %v2017
    %v2019 = vrot.slane %v2018, 2
    %v2020 = vadd.f32 %v2018, %v2019
    %v2021 = vrot.slane %v2020, 1
    %v2022 = vadd.f32 %v2020, %v2021
    %v2023 = vsel %vm1621, %v1949, 0.0
    %v2024 = vrot.slane %v2023, 4
    %v2025 = vadd.f32 %v2023, %v2024
    %v2026 = vrot.slane %v2025, 2
    %v2027 = vadd.f32 %v2025, %v2026
    %v2028 = vrot.slane %v2027, 1
    %v2029 = vadd.f32 %v2027, %v2028
    %v2030 = vsel %vm1621, %v1950, 0.0
    %v2031 = vrot.slane %v2030, 4
    %v2032 = vadd.f32 %v2030, %v2031
    %v2033 = vrot.slane %v2032, 2
    %v2034 = vadd.f32 %v2032, %v2033
    %v2035 = vrot.slane %v2034, 1
    %v2036 = vadd.f32 %v2034, %v2035
    %v2037 = vsel %vm1621, %v1951, 0.0
    %v2038 = vrot.slane %v2037, 4
    %v2039 = vadd.f32 %v2037, %v2038
    %v2040 = vrot.slane %v2039, 2
    %v2041 = vadd.f32 %v2039, %v2040
    %v2042 = vrot.slane %v2041, 1
    %v2043 = vadd.f32 %v2041, %v2042
    %v2044 = vsel %vm1621, %v1952, 0.0
    %v2045 = vrot.slane %v2044, 4
    %v2046 = vadd.f32 %v2044, %v2045
    %v2047 = vrot.slane %v2046, 2
    %v2048 = vadd.f32 %v2046, %v2047
    %v2049 = vrot.slane %v2048, 1
    %v2050 = vadd.f32 %v2048, %v2049
    %v2051 = vsel %vm1621, %v1953, 0.0
    %v2052 = vrot.slane %v2051, 4
    %v2053 = vadd.f32 %v2051, %v2052
    %v2054 = vrot.slane %v2053, 2
    %v2055 = vadd.f32 %v2053, %v2054
    %v2056 = vrot.slane %v2055, 1
    %v2057 = vadd.f32 %v2055, %v2056
    %v2058 = vsel %vm1621, %v1954, 0.0
    %v2059 = vrot.slane %v2058, 4
    %v2060 = vadd.f32 %v2058, %v2059
    %v2061 = vrot.slane %v2060, 2
    %v2062 = vadd.f32 %v2060, %v2061
    %v2063 = vrot.slane %v2062, 1
    %v2064 = vadd.f32 %v2062, %v2063
    %v2065 = vsel %vm1621, %v1955, 0.0
    %v2066 = vrot.slane %v2065, 4
    %v2067 = vadd.f32 %v2065, %v2066
    %v2068 = vrot.slane %v2067, 2
    %v2069 = vadd.f32 %v2067, %v2068
    %v2070 = vrot.slane %v2069, 1
    %v2071 = vadd.f32 %v2069, %v2070
    %v2072 = vsel %vm1621, %v1956, 0.0
    %v2073 = vrot.slane %v2072, 4
    %v2074 = vadd.f32 %v2072, %v2073
    %v2075 = vrot.slane %v2074, 2
    %v2076 = vadd.f32 %v2074, %v2075
    %v2077 = vrot.slane %v2076, 1
    %v2078 = vadd.f32 %v2076, %v2077
    %v2079 = vsel %vm1621, %v1957, 0.0
    %v2080 = vrot.slane %v2079, 4
    %v2081 = vadd.f32 %v2079, %v2080
    %v2082 = vrot.slane %v2081, 2
    %v2083 = vadd.f32 %v2081, %v2082
    %v2084 = vrot.slane %v2083, 1
    %v2085 = vadd.f32 %v2083, %v2084
    %v2086 = vsel %vm1621, %v1958, 0.0
    %v2087 = vrot.slane %v2086, 4
    %v2088 = vadd.f32 %v2086, %v2087
    %v2089 = vrot.slane %v2088, 2
    %v2090 = vadd.f32 %v2088, %v2089
    %v2091 = vrot.slane %v2090, 1
    %v2092 = vadd.f32 %v2090, %v2091
    %v2093 = vsel %vm1621, %v1959, 0.0
    %v2094 = vrot.slane %v2093, 4
    %v2095 = vadd.f32 %v2093, %v2094
    %v2096 = vrot.slane %v2095, 2
    %v2097 = vadd.f32 %v2095, %v2096
    %v2098 = vrot.slane %v2097, 1
    %v2099 = vadd.f32 %v2097, %v2098
    %v2100 = vsel %vm1621, %v1960, 0.0
    %v2101 = vrot.slane %v2100, 4
    %v2102 = vadd.f32 %v2100, %v2101
    %v2103 = vrot.slane %v2102, 2
    %v2104 = vadd.f32 %v2102, %v2103
    %v2105 = vrot.slane %v2104, 1
    %v2106 = vadd.f32 %v2104, %v2105
    %v2107 = vsel %vm1621, %v1961, 0.0
    %v2108 = vrot.slane %v2107, 4
    %v2109 = vadd.f32 %v2107, %v2108
    %v2110 = vrot.slane %v2109, 2
    %v2111 = vadd.f32 %v2109, %v2110
    %v2112 = vrot.slane %v2111, 1
    %v2113 = vadd.f32 %v2111, %v2112
    %v2114 = vsel %vm1621, %v1962, 0.0
    %v2115 = vrot.slane %v2114, 4
    %v2116 = vadd.f32 %v2114, %v2115
    %v2117 = vrot.slane %v2116, 2
    %v2118 = vadd.f32 %v2116, %v2117
    %v2119 = vrot.slane %v2118, 1
    %v2120 = vadd.f32 %v2118, %v2119
    %v2121 = vsel %vm1621, %v1963, 0.0
    %v2122 = vrot.slane %v2121, 4
    %v2123 = vadd.f32 %v2121, %v2122
    %v2124 = vrot.slane %v2123, 2
    %v2125 = vadd.f32 %v2123, %v2124
    %v2126 = vrot.slane %v2125, 1
    %v2127 = vadd.f32 %v2125, %v2126
    %v2128 = vsel %vm1621, %v1964, 0.0
    %v2129 = vrot.slane %v2128, 4
    %v2130 = vadd.f32 %v2128, %v2129
    %v2131 = vrot.slane %v2130, 2
    %v2132 = vadd.f32 %v2130, %v2131
    %v2133 = vrot.slane %v2132, 1
    %v2134 = vadd.f32 %v2132, %v2133
    %v2135 = vsel %vm1621, %v1965, 0.0
    %v2136 = vrot.slane %v2135, 4
    %v2137 = vadd.f32 %v2135, %v2136
    %v2138 = vrot.slane %v2137, 2
    %v2139 = vadd.f32 %v2137, %v2138
    %v2140 = vrot.slane %v2139, 1
    %v2141 = vadd.f32 %v2139, %v2140
    %v2142 = vsel %vm1621, %v1966, 0.0
    %v2143 = vrot.slane %v2142, 4
    %v2144 = vadd.f32 %v2142, %v2143
    %v2145 = vrot.slane %v2144, 2
    %v2146 = vadd.f32 %v2144, %v2145
    %v2147 = vrot.slane %v2146, 1
    %v2148 = vadd.f32 %v2146, %v2147
    %v2149 = vsel %vm1621, %v1967, 0.0
    %v2150 = vrot.slane %v2149, 4
    %v2151 = vadd.f32 %v2149, %v2150
    %v2152 = vrot.slane %v2151, 2
    %v2153 = vadd.f32 %v2151, %v2152
    %v2154 = vrot.slane %v2153, 1
    %v2155 = vadd.f32 %v2153, %v2154
    %v2156 = vsel %vm1621, %v1968, 0.0
    %v2157 = vrot.slane %v2156, 4
    %v2158 = vadd.f32 %v2156, %v2157
    %v2159 = vrot.slane %v2158, 2
    %v2160 = vadd.f32 %v2158, %v2159
    %v2161 = vrot.slane %v2160, 1
    %v2162 = vadd.f32 %v2160, %v2161
    %v2163 = vsel %vm1621, %v1969, 0.0
    %v2164 = vrot.slane %v2163, 4
    %v2165 = vadd.f32 %v2163, %v2164
    %v2166 = vrot.slane %v2165, 2
    %v2167 = vadd.f32 %v2165, %v2166
    %v2168 = vrot.slane %v2167, 1
    %v2169 = vadd.f32 %v2167, %v2168
    %v2170 = vsel %vm1621, %v1970, 0.0
    %v2171 = vrot.slane %v2170, 4
    %v2172 = vadd.f32 %v2170, %v2171
    %v2173 = vrot.slane %v2172, 2
    %v2174 = vadd.f32 %v2172, %v2173
    %v2175 = vrot.slane %v2174, 1
    %v2176 = vadd.f32 %v2174, %v2175
    %v2177 = vsel %vm1621, %v1971, 0.0
    %v2178 = vrot.slane %v2177, 4
    %v2179 = vadd.f32 %v2177, %v2178
    %v2180 = vrot.slane %v2179, 2
    %v2181 = vadd.f32 %v2179, %v2180
    %v2182 = vrot.slane %v2181, 1
    %v2183 = vadd.f32 %v2181, %v2182
    %v2184 = vsel %vm1621, %v1972, 0.0
    %v2185 = vrot.slane %v2184, 4
    %v2186 = vadd.f32 %v2184, %v2185
    %v2187 = vrot.slane %v2186, 2
    %v2188 = vadd.f32 %v2186, %v2187
    %v2189 = vrot.slane %v2188, 1
    %v2190 = vadd.f32 %v2188, %v2189
    %v2191 = vsel %vm1621, %v1973, 0.0
    %v2192 = vrot.slane %v2191, 4
    %v2193 = vadd.f32 %v2191, %v2192
    %v2194 = vrot.slane %v2193, 2
    %v2195 = vadd.f32 %v2193, %v2194
    %v2196 = vrot.slane %v2195, 1
    %v2197 = vadd.f32 %v2195, %v2196
    %v2198 = vadd.f32 %v1980, 1e-09
    %v2199 = vadd.f32 %v1987, 1e-09
    %v2200 = vadd.f32 %v1994, 1e-09
    %v2201 = vadd.f32 %v2001, 1e-09
    %v2202 = vadd.f32 %v2008, 1e-09
    %v2203 = vadd.f32 %v2015, 1e-09
    %v2204 = vadd.f32 %v2022, 1e-09
    %v2205 = vadd.f32 %v2029, 1e-09
    %v2206 = vadd.f32 %v2036, 1e-09
    %v2207 = vadd.f32 %v2043, 1e-09
    %v2208 = vadd.f32 %v2050, 1e-09
    %v2209 = vadd.f32 %v2057, 1e-09
    %v2210 = vadd.f32 %v2064, 1e-09
    %v2211 = vadd.f32 %v2071, 1e-09
    %v2212 = vadd.f32 %v2078, 1e-09
    %v2213 = vadd.f32 %v2085, 1e-09
    %v2214 = vadd.f32 %v2092, 1e-09
    %v2215 = vadd.f32 %v2099, 1e-09
    %v2216 = vadd.f32 %v2106, 1e-09
    %v2217 = vadd.f32 %v2113, 1e-09
    %v2218 = vadd.f32 %v2120, 1e-09
    %v2219 = vadd.f32 %v2127, 1e-09
    %v2220 = vadd.f32 %v2134, 1e-09
    %v2221 = vadd.f32 %v2141, 1e-09
    %v2222 = vadd.f32 %v2148, 1e-09
    %v2223 = vadd.f32 %v2155, 1e-09
    %v2224 = vadd.f32 %v2162, 1e-09
    %v2225 = vadd.f32 %v2169, 1e-09
    %v2226 = vadd.f32 %v2176, 1e-09
    %v2227 = vadd.f32 %v2183, 1e-09
    %v2228 = vadd.f32 %v2190, 1e-09
    %v2229 = vadd.f32 %v2197, 1e-09
    %2231 = vset.pattern.permute.xlu0 0
    %2232 = vperm.xlu0 %2231, %v1942
    %v2233 = vpop.permute.xlu0 %2232
    %2236 = vset.pattern.permute.xlu0 0
    %2237 = vperm.xlu0 %2236, %v1943
    %v2238 = vpop.permute.xlu0 %2237
    %2241 = vset.pattern.permute.xlu0 0
    %2242 = vperm.xlu0 %2241, %v1944
    %v2243 = vpop.permute.xlu0 %2242
    %2246 = vset.pattern.permute.xlu0 0
    %2247 = vperm.xlu0 %2246, %v1945
    %v2248 = vpop.permute.xlu0 %2247
    %2251 = vset.pattern.permute.xlu0 0
    %2252 = vperm.xlu0 %2251, %v1946
    %v2253 = vpop.permute.xlu0 %2252
    %2256 = vset.pattern.permute.xlu0 0
    %2257 = vperm.xlu0 %2256, %v1947
    %v2258 = vpop.permute.xlu0 %2257
    %2261 = vset.pattern.permute.xlu0 0
    %2262 = vperm.xlu0 %2261, %v1948
    %v2263 = vpop.permute.xlu0 %2262
    %2266 = vset.pattern.permute.xlu0 0
    %2267 = vperm.xlu0 %2266, %v1949
    %v2268 = vpop.permute.xlu0 %2267
    %2271 = vset.pattern.permute.xlu0 0
    %2272 = vperm.xlu0 %2271, %v1950
    %v2273 = vpop.permute.xlu0 %2272
    %2276 = vset.pattern.permute.xlu0 0
    %2277 = vperm.xlu0 %2276, %v1951
    %v2278 = vpop.permute.xlu0 %2277
    %2281 = vset.pattern.permute.xlu0 0
    %2282 = vperm.xlu0 %2281, %v1952
    %v2283 = vpop.permute.xlu0 %2282
    %2286 = vset.pattern.permute.xlu0 0
    %2287 = vperm.xlu0 %2286, %v1953
    %v2288 = vpop.permute.xlu0 %2287
    %2291 = vset.pattern.permute.xlu0 0
    %2292 = vperm.xlu0 %2291, %v1954
    %v2293 = vpop.permute.xlu0 %2292
    %2296 = vset.pattern.permute.xlu0 0
    %2297 = vperm.xlu0 %2296, %v1955
    %v2298 = vpop.permute.xlu0 %2297
    %2301 = vset.pattern.permute.xlu0 0
    %2302 = vperm.xlu0 %2301, %v1956
    %v2303 = vpop.permute.xlu0 %2302
    %2306 = vset.pattern.permute.xlu0 0
    %2307 = vperm.xlu0 %2306, %v1957
    %v2308 = vpop.permute.xlu0 %2307
    %2311 = vset.pattern.permute.xlu0 0
    %2312 = vperm.xlu0 %2311, %v1958
    %v2313 = vpop.permute.xlu0 %2312
    %2316 = vset.pattern.permute.xlu0 0
    %2317 = vperm.xlu0 %2316, %v1959
    %v2318 = vpop.permute.xlu0 %2317
    %2321 = vset.pattern.permute.xlu0 0
    %2322 = vperm.xlu0 %2321, %v1960
    %v2323 = vpop.permute.xlu0 %2322
    %2326 = vset.pattern.permute.xlu0 0
    %2327 = vperm.xlu0 %2326, %v1961
    %v2328 = vpop.permute.xlu0 %2327
    %2331 = vset.pattern.permute.xlu0 0
    %2332 = vperm.xlu0 %2331, %v1962
    %v2333 = vpop.permute.xlu0 %2332
    %2336 = vset.pattern.permute.xlu0 0
    %2337 = vperm.xlu0 %2336, %v1963
    %v2338 = vpop.permute.xlu0 %2337
    %2341 = vset.pattern.permute.xlu0 0
    %2342 = vperm.xlu0 %2341, %v1964
    %v2343 = vpop.permute.xlu0 %2342
    %2346 = vset.pattern.permute.xlu0 0
    %2347 = vperm.xlu0 %2346, %v1965
    %v2348 = vpop.permute.xlu0 %2347
    %2351 = vset.pattern.permute.xlu0 0
    %2352 = vperm.xlu0 %2351, %v1966
    %v2353 = vpop.permute.xlu0 %2352
    %2356 = vset.pattern.permute.xlu0 0
    %2357 = vperm.xlu0 %2356, %v1967
    %v2358 = vpop.permute.xlu0 %2357
    %2361 = vset.pattern.permute.xlu0 0
    %2362 = vperm.xlu0 %2361, %v1968
    %v2363 = vpop.permute.xlu0 %2362
    %2366 = vset.pattern.permute.xlu0 0
    %2367 = vperm.xlu0 %2366, %v1969
    %v2368 = vpop.permute.xlu0 %2367
    %2371 = vset.pattern.permute.xlu0 0
    %2372 = vperm.xlu0 %2371, %v1970
    %v2373 = vpop.permute.xlu0 %2372
    %2376 = vset.pattern.permute.xlu0 0
    %2377 = vperm.xlu0 %2376, %v1971
    %v2378 = vpop.permute.xlu0 %2377
    %2381 = vset.pattern.permute.xlu0 0
    %2382 = vperm.xlu0 %2381, %v1972
    %v2383 = vpop.permute.xlu0 %2382
    %2386 = vset.pattern.permute.xlu0 0
    %2387 = vperm.xlu0 %2386, %v1973
    %v2388 = vpop.permute.xlu0 %2387
    %v2390 = vmul.f32 %v2233, %v1011
    %v2391 = vmul.f32 %v2238, %v1014
    %v2392 = vmul.f32 %v2243, %v1017
    %v2393 = vmul.f32 %v2248, %v1020
    %v2394 = vmul.f32 %v2253, %v1023
    %v2395 = vmul.f32 %v2258, %v1026
    %v2396 = vmul.f32 %v2263, %v1029
    %v2397 = vmul.f32 %v2268, %v1032
    %v2398 = vmul.f32 %v2273, %v1035
    %v2399 = vmul.f32 %v2278, %v1038
    %v2400 = vmul.f32 %v2283, %v1041
    %v2401 = vmul.f32 %v2288, %v1044
    %v2402 = vmul.f32 %v2293, %v1047
    %v2403 = vmul.f32 %v2298, %v1050
    %v2404 = vmul.f32 %v2303, %v1053
    %v2405 = vmul.f32 %v2308, %v1056
    %v2406 = vmul.f32 %v2313, %v1059
    %v2407 = vmul.f32 %v2318, %v1062
    %v2408 = vmul.f32 %v2323, %v1065
    %v2409 = vmul.f32 %v2328, %v1068
    %v2410 = vmul.f32 %v2333, %v1071
    %v2411 = vmul.f32 %v2338, %v1074
    %v2412 = vmul.f32 %v2343, %v1077
    %v2413 = vmul.f32 %v2348, %v1080
    %v2414 = vmul.f32 %v2353, %v1083
    %v2415 = vmul.f32 %v2358, %v1086
    %v2416 = vmul.f32 %v2363, %v1089
    %v2417 = vmul.f32 %v2368, %v1092
    %v2418 = vmul.f32 %v2373, %v1095
    %v2419 = vmul.f32 %v2378, %v1098
    %v2420 = vmul.f32 %v2383, %v1101
    %v2421 = vmul.f32 %v2388, %v1104
    %v2422 = vsel %vm125, %v2390, 0.0
    %v2423 = vrot.slane %v2422, 4
    %v2424 = vadd.f32 %v2422, %v2423
    %v2425 = vrot.slane %v2424, 2
    %v2426 = vadd.f32 %v2424, %v2425
    %v2427 = vrot.slane %v2426, 1
    %v2428 = vadd.f32 %v2426, %v2427
    %v2429 = vsel %vm125, %v2391, 0.0
    %v2430 = vrot.slane %v2429, 4
    %v2431 = vadd.f32 %v2429, %v2430
    %v2432 = vrot.slane %v2431, 2
    %v2433 = vadd.f32 %v2431, %v2432
    %v2434 = vrot.slane %v2433, 1
    %v2435 = vadd.f32 %v2433, %v2434
    %v2436 = vsel %vm125, %v2392, 0.0
    %v2437 = vrot.slane %v2436, 4
    %v2438 = vadd.f32 %v2436, %v2437
    %v2439 = vrot.slane %v2438, 2
    %v2440 = vadd.f32 %v2438, %v2439
    %v2441 = vrot.slane %v2440, 1
    %v2442 = vadd.f32 %v2440, %v2441
    %v2443 = vsel %vm125, %v2393, 0.0
    %v2444 = vrot.slane %v2443, 4
    %v2445 = vadd.f32 %v2443, %v2444
    %v2446 = vrot.slane %v2445, 2
    %v2447 = vadd.f32 %v2445, %v2446
    %v2448 = vrot.slane %v2447, 1
    %v2449 = vadd.f32 %v2447, %v2448
    %v2450 = vsel %vm125, %v2394, 0.0
    %v2451 = vrot.slane %v2450, 4
    %v2452 = vadd.f32 %v2450, %v2451
    %v2453 = vrot.slane %v2452, 2
    %v2454 = vadd.f32 %v2452, %v2453
    %v2455 = vrot.slane %v2454, 1
    %v2456 = vadd.f32 %v2454, %v2455
    %v2457 = vsel %vm125, %v2395, 0.0
    %v2458 = vrot.slane %v2457, 4
    %v2459 = vadd.f32 %v2457, %v2458
    %v2460 = vrot.slane %v2459, 2
    %v2461 = vadd.f32 %v2459, %v2460
    %v2462 = vrot.slane %v2461, 1
    %v2463 = vadd.f32 %v2461, %v2462
    %v2464 = vsel %vm125, %v2396, 0.0
    %v2465 = vrot.slane %v2464, 4
    %v2466 = vadd.f32 %v2464, %v2465
    %v2467 = vrot.slane %v2466, 2
    %v2468 = vadd.f32 %v2466, %v2467
    %v2469 = vrot.slane %v2468, 1
    %v2470 = vadd.f32 %v2468, %v2469
    %v2471 = vsel %vm125, %v2397, 0.0
    %v2472 = vrot.slane %v2471, 4
    %v2473 = vadd.f32 %v2471, %v2472
    %v2474 = vrot.slane %v2473, 2
    %v2475 = vadd.f32 %v2473, %v2474
    %v2476 = vrot.slane %v2475, 1
    %v2477 = vadd.f32 %v2475, %v2476
    %v2478 = vsel %vm125, %v2398, 0.0
    %v2479 = vrot.slane %v2478, 4
    %v2480 = vadd.f32 %v2478, %v2479
    %v2481 = vrot.slane %v2480, 2
    %v2482 = vadd.f32 %v2480, %v2481
    %v2483 = vrot.slane %v2482, 1
    %v2484 = vadd.f32 %v2482, %v2483
    %v2485 = vsel %vm125, %v2399, 0.0
    %v2486 = vrot.slane %v2485, 4
    %v2487 = vadd.f32 %v2485, %v2486
    %v2488 = vrot.slane %v2487, 2
    %v2489 = vadd.f32 %v2487, %v2488
    %v2490 = vrot.slane %v2489, 1
    %v2491 = vadd.f32 %v2489, %v2490
    %v2492 = vsel %vm125, %v2400, 0.0
    %v2493 = vrot.slane %v2492, 4
    %v2494 = vadd.f32 %v2492, %v2493
    %v2495 = vrot.slane %v2494, 2
    %v2496 = vadd.f32 %v2494, %v2495
    %v2497 = vrot.slane %v2496, 1
    %v2498 = vadd.f32 %v2496, %v2497
    %v2499 = vsel %vm125, %v2401, 0.0
    %v2500 = vrot.slane %v2499, 4
    %v2501 = vadd.f32 %v2499, %v2500
    %v2502 = vrot.slane %v2501, 2
    %v2503 = vadd.f32 %v2501, %v2502
    %v2504 = vrot.slane %v2503, 1
    %v2505 = vadd.f32 %v2503, %v2504
    %v2506 = vsel %vm125, %v2402, 0.0
    %v2507 = vrot.slane %v2506, 4
    %v2508 = vadd.f32 %v2506, %v2507
    %v2509 = vrot.slane %v2508, 2
    %v2510 = vadd.f32 %v2508, %v2509
    %v2511 = vrot.slane %v2510, 1
    %v2512 = vadd.f32 %v2510, %v2511
    %v2513 = vsel %vm125, %v2403, 0.0
    %v2514 = vrot.slane %v2513, 4
    %v2515 = vadd.f32 %v2513, %v2514
    %v2516 = vrot.slane %v2515, 2
    %v2517 = vadd.f32 %v2515, %v2516
    %v2518 = vrot.slane %v2517, 1
    %v2519 = vadd.f32 %v2517, %v2518
    %v2520 = vsel %vm125, %v2404, 0.0
    %v2521 = vrot.slane %v2520, 4
    %v2522 = vadd.f32 %v2520, %v2521
    %v2523 = vrot.slane %v2522, 2
    %v2524 = vadd.f32 %v2522, %v2523
    %v2525 = vrot.slane %v2524, 1
    %v2526 = vadd.f32 %v2524, %v2525
    %v2527 = vsel %vm125, %v2405, 0.0
    %v2528 = vrot.slane %v2527, 4
    %v2529 = vadd.f32 %v2527, %v2528
    %v2530 = vrot.slane %v2529, 2
    %v2531 = vadd.f32 %v2529, %v2530
    %v2532 = vrot.slane %v2531, 1
    %v2533 = vadd.f32 %v2531, %v2532
    %v2534 = vsel %vm125, %v2406, 0.0
    %v2535 = vrot.slane %v2534, 4
    %v2536 = vadd.f32 %v2534, %v2535
    %v2537 = vrot.slane %v2536, 2
    %v2538 = vadd.f32 %v2536, %v2537
    %v2539 = vrot.slane %v2538, 1
    %v2540 = vadd.f32 %v2538, %v2539
    %v2541 = vsel %vm125, %v2407, 0.0
    %v2542 = vrot.slane %v2541, 4
    %v2543 = vadd.f32 %v2541, %v2542
    %v2544 = vrot.slane %v2543, 2
    %v2545 = vadd.f32 %v2543, %v2544
    %v2546 = vrot.slane %v2545, 1
    %v2547 = vadd.f32 %v2545, %v2546
    %v2548 = vsel %vm125, %v2408, 0.0
    %v2549 = vrot.slane %v2548, 4
    %v2550 = vadd.f32 %v2548, %v2549
    %v2551 = vrot.slane %v2550, 2
    %v2552 = vadd.f32 %v2550, %v2551
    %v2553 = vrot.slane %v2552, 1
    %v2554 = vadd.f32 %v2552, %v2553
    %v2555 = vsel %vm125, %v2409, 0.0
    %v2556 = vrot.slane %v2555, 4
    %v2557 = vadd.f32 %v2555, %v2556
    %v2558 = vrot.slane %v2557, 2
    %v2559 = vadd.f32 %v2557, %v2558
    %v2560 = vrot.slane %v2559, 1
    %v2561 = vadd.f32 %v2559, %v2560
    %v2562 = vsel %vm125, %v2410, 0.0
    %v2563 = vrot.slane %v2562, 4
    %v2564 = vadd.f32 %v2562, %v2563
    %v2565 = vrot.slane %v2564, 2
    %v2566 = vadd.f32 %v2564, %v2565
    %v2567 = vrot.slane %v2566, 1
    %v2568 = vadd.f32 %v2566, %v2567
    %v2569 = vsel %vm125, %v2411, 0.0
    %v2570 = vrot.slane %v2569, 4
    %v2571 = vadd.f32 %v2569, %v2570
    %v2572 = vrot.slane %v2571, 2
    %v2573 = vadd.f32 %v2571, %v2572
    %v2574 = vrot.slane %v2573, 1
    %v2575 = vadd.f32 %v2573, %v2574
    %v2576 = vsel %vm125, %v2412, 0.0
    %v2577 = vrot.slane %v2576, 4
    %v2578 = vadd.f32 %v2576, %v2577
    %v2579 = vrot.slane %v2578, 2
    %v2580 = vadd.f32 %v2578, %v2579
    %v2581 = vrot.slane %v2580, 1
    %v2582 = vadd.f32 %v2580, %v2581
    %v2583 = vsel %vm125, %v2413, 0.0
    %v2584 = vrot.slane %v2583, 4
    %v2585 = vadd.f32 %v2583, %v2584
    %v2586 = vrot.slane %v2585, 2
    %v2587 = vadd.f32 %v2585, %v2586
    %v2588 = vrot.slane %v2587, 1
    %v2589 = vadd.f32 %v2587, %v2588
    %v2590 = vsel %vm125, %v2414, 0.0
    %v2591 = vrot.slane %v2590, 4
    %v2592 = vadd.f32 %v2590, %v2591
    %v2593 = vrot.slane %v2592, 2
    %v2594 = vadd.f32 %v2592, %v2593
    %v2595 = vrot.slane %v2594, 1
    %v2596 = vadd.f32 %v2594, %v2595
    %v2597 = vsel %vm125, %v2415, 0.0
    %v2598 = vrot.slane %v2597, 4
    %v2599 = vadd.f32 %v2597, %v2598
    %v2600 = vrot.slane %v2599, 2
    %v2601 = vadd.f32 %v2599, %v2600
    %v2602 = vrot.slane %v2601, 1
    %v2603 = vadd.f32 %v2601, %v2602
    %v2604 = vsel %vm125, %v2416, 0.0
    %v2605 = vrot.slane %v2604, 4
    %v2606 = vadd.f32 %v2604, %v2605
    %v2607 = vrot.slane %v2606, 2
    %v2608 = vadd.f32 %v2606, %v2607
    %v2609 = vrot.slane %v2608, 1
    %v2610 = vadd.f32 %v2608, %v2609
    %v2611 = vsel %vm125, %v2417, 0.0
    %v2612 = vrot.slane %v2611, 4
    %v2613 = vadd.f32 %v2611, %v2612
    %v2614 = vrot.slane %v2613, 2
    %v2615 = vadd.f32 %v2613, %v2614
    %v2616 = vrot.slane %v2615, 1
    %v2617 = vadd.f32 %v2615, %v2616
    %v2618 = vsel %vm125, %v2418, 0.0
    %v2619 = vrot.slane %v2618, 4
    %v2620 = vadd.f32 %v2618, %v2619
    %v2621 = vrot.slane %v2620, 2
    %v2622 = vadd.f32 %v2620, %v2621
    %v2623 = vrot.slane %v2622, 1
    %v2624 = vadd.f32 %v2622, %v2623
    %v2625 = vsel %vm125, %v2419, 0.0
    %v2626 = vrot.slane %v2625, 4
    %v2627 = vadd.f32 %v2625, %v2626
    %v2628 = vrot.slane %v2627, 2
    %v2629 = vadd.f32 %v2627, %v2628
    %v2630 = vrot.slane %v2629, 1
    %v2631 = vadd.f32 %v2629, %v2630
    %v2632 = vsel %vm125, %v2420, 0.0
    %v2633 = vrot.slane %v2632, 4
    %v2634 = vadd.f32 %v2632, %v2633
    %v2635 = vrot.slane %v2634, 2
    %v2636 = vadd.f32 %v2634, %v2635
    %v2637 = vrot.slane %v2636, 1
    %v2638 = vadd.f32 %v2636, %v2637
    %v2639 = vsel %vm125, %v2421, 0.0
    %v2640 = vrot.slane %v2639, 4
    %v2641 = vadd.f32 %v2639, %v2640
    %v2642 = vrot.slane %v2641, 2
    %v2643 = vadd.f32 %v2641, %v2642
    %v2644 = vrot.slane %v2643, 1
    %v2645 = vadd.f32 %v2643, %v2644
    %2647 = vset.pattern.permute.xlu0 0
    %2648 = vperm.xlu0 %2647, %v2198
    %v2649 = vpop.permute.xlu0 %2648
    %2652 = vset.pattern.permute.xlu0 0
    %2653 = vperm.xlu0 %2652, %v2199
    %v2654 = vpop.permute.xlu0 %2653
    %2657 = vset.pattern.permute.xlu0 0
    %2658 = vperm.xlu0 %2657, %v2200
    %v2659 = vpop.permute.xlu0 %2658
    %2662 = vset.pattern.permute.xlu0 0
    %2663 = vperm.xlu0 %2662, %v2201
    %v2664 = vpop.permute.xlu0 %2663
    %2667 = vset.pattern.permute.xlu0 0
    %2668 = vperm.xlu0 %2667, %v2202
    %v2669 = vpop.permute.xlu0 %2668
    %2672 = vset.pattern.permute.xlu0 0
    %2673 = vperm.xlu0 %2672, %v2203
    %v2674 = vpop.permute.xlu0 %2673
    %2677 = vset.pattern.permute.xlu0 0
    %2678 = vperm.xlu0 %2677, %v2204
    %v2679 = vpop.permute.xlu0 %2678
    %2682 = vset.pattern.permute.xlu0 0
    %2683 = vperm.xlu0 %2682, %v2205
    %v2684 = vpop.permute.xlu0 %2683
    %2687 = vset.pattern.permute.xlu0 0
    %2688 = vperm.xlu0 %2687, %v2206
    %v2689 = vpop.permute.xlu0 %2688
    %2692 = vset.pattern.permute.xlu0 0
    %2693 = vperm.xlu0 %2692, %v2207
    %v2694 = vpop.permute.xlu0 %2693
    %2697 = vset.pattern.permute.xlu0 0
    %2698 = vperm.xlu0 %2697, %v2208
    %v2699 = vpop.permute.xlu0 %2698
    %2702 = vset.pattern.permute.xlu0 0
    %2703 = vperm.xlu0 %2702, %v2209
    %v2704 = vpop.permute.xlu0 %2703
    %2707 = vset.pattern.permute.xlu0 0
    %2708 = vperm.xlu0 %2707, %v2210
    %v2709 = vpop.permute.xlu0 %2708
    %2712 = vset.pattern.permute.xlu0 0
    %2713 = vperm.xlu0 %2712, %v2211
    %v2714 = vpop.permute.xlu0 %2713
    %2717 = vset.pattern.permute.xlu0 0
    %2718 = vperm.xlu0 %2717, %v2212
    %v2719 = vpop.permute.xlu0 %2718
    %2722 = vset.pattern.permute.xlu0 0
    %2723 = vperm.xlu0 %2722, %v2213
    %v2724 = vpop.permute.xlu0 %2723
    %2727 = vset.pattern.permute.xlu0 0
    %2728 = vperm.xlu0 %2727, %v2214
    %v2729 = vpop.permute.xlu0 %2728
    %2732 = vset.pattern.permute.xlu0 0
    %2733 = vperm.xlu0 %2732, %v2215
    %v2734 = vpop.permute.xlu0 %2733
    %2737 = vset.pattern.permute.xlu0 0
    %2738 = vperm.xlu0 %2737, %v2216
    %v2739 = vpop.permute.xlu0 %2738
    %2742 = vset.pattern.permute.xlu0 0
    %2743 = vperm.xlu0 %2742, %v2217
    %v2744 = vpop.permute.xlu0 %2743
    %2747 = vset.pattern.permute.xlu0 0
    %2748 = vperm.xlu0 %2747, %v2218
    %v2749 = vpop.permute.xlu0 %2748
    %2752 = vset.pattern.permute.xlu0 0
    %2753 = vperm.xlu0 %2752, %v2219
    %v2754 = vpop.permute.xlu0 %2753
    %2757 = vset.pattern.permute.xlu0 0
    %2758 = vperm.xlu0 %2757, %v2220
    %v2759 = vpop.permute.xlu0 %2758
    %2762 = vset.pattern.permute.xlu0 0
    %2763 = vperm.xlu0 %2762, %v2221
    %v2764 = vpop.permute.xlu0 %2763
    %2767 = vset.pattern.permute.xlu0 0
    %2768 = vperm.xlu0 %2767, %v2222
    %v2769 = vpop.permute.xlu0 %2768
    %2772 = vset.pattern.permute.xlu0 0
    %2773 = vperm.xlu0 %2772, %v2223
    %v2774 = vpop.permute.xlu0 %2773
    %2777 = vset.pattern.permute.xlu0 0
    %2778 = vperm.xlu0 %2777, %v2224
    %v2779 = vpop.permute.xlu0 %2778
    %2782 = vset.pattern.permute.xlu0 0
    %2783 = vperm.xlu0 %2782, %v2225
    %v2784 = vpop.permute.xlu0 %2783
    %2787 = vset.pattern.permute.xlu0 0
    %2788 = vperm.xlu0 %2787, %v2226
    %v2789 = vpop.permute.xlu0 %2788
    %2792 = vset.pattern.permute.xlu0 0
    %2793 = vperm.xlu0 %2792, %v2227
    %v2794 = vpop.permute.xlu0 %2793
    %2797 = vset.pattern.permute.xlu0 0
    %2798 = vperm.xlu0 %2797, %v2228
    %v2799 = vpop.permute.xlu0 %2798
    %2802 = vset.pattern.permute.xlu0 0
    %2803 = vperm.xlu0 %2802, %v2229
    %v2804 = vpop.permute.xlu0 %2803
    %v2806 = vrcp.pop %v2649
    %v2807 = vmul.f32 %v2649, %v2806
    %v2808 = vsub.f32 1.0, %v2807
    %v2809 = vmul.f32 %v2806, %v2808
    %v2810 = vadd.f32 %v2806, %v2809
    %vm2811 = vweird.f32 %v2649
    %vm2812 = vweird.f32 %v2806
    %vm2813 = vmor %vm2811, %vm2812
    %v2814 = vsel %vm2813, %v2806, %v2810
    %v2815 = vand.u32 2147483647, %v2649
    %vm2816 = vcmp.eq.f32.partialorder %v2815, 8.507059e+37
    %v2817 = vand.u32 %v2649, 2147483648
    %v2818 = vor.u32 1.1754944e-38, %v2817
    %v2819 = vsel %vm2816, %v2818, %v2814
    %v2820 = vmul.f32 %v2428, %v2819
    %v2821 = vrcp.pop %v2654
    %v2822 = vmul.f32 %v2654, %v2821
    %v2823 = vsub.f32 1.0, %v2822
    %v2824 = vmul.f32 %v2821, %v2823
    %v2825 = vadd.f32 %v2821, %v2824
    %vm2826 = vweird.f32 %v2654
    %vm2827 = vweird.f32 %v2821
    %vm2828 = vmor %vm2826, %vm2827
    %v2829 = vsel %vm2828, %v2821, %v2825
    %v2830 = vand.u32 2147483647, %v2654
    %vm2831 = vcmp.eq.f32.partialorder %v2830, 8.507059e+37
    %v2832 = vand.u32 %v2654, 2147483648
    %v2833 = vor.u32 1.1754944e-38, %v2832
    %v2834 = vsel %vm2831, %v2833, %v2829
    %v2835 = vmul.f32 %v2435, %v2834
    %v2836 = vrcp.pop %v2659
    %v2837 = vmul.f32 %v2659, %v2836
    %v2838 = vsub.f32 1.0, %v2837
    %v2839 = vmul.f32 %v2836, %v2838
    %v2840 = vadd.f32 %v2836, %v2839
    %vm2841 = vweird.f32 %v2659
    %vm2842 = vweird.f32 %v2836
    %vm2843 = vmor %vm2841, %vm2842
    %v2844 = vsel %vm2843, %v2836, %v2840
    %v2845 = vand.u32 2147483647, %v2659
    %vm2846 = vcmp.eq.f32.partialorder %v2845, 8.507059e+37
    %v2847 = vand.u32 %v2659, 2147483648
    %v2848 = vor.u32 1.1754944e-38, %v2847
    %v2849 = vsel %vm2846, %v2848, %v2844
    %v2850 = vmul.f32 %v2442, %v2849
    %v2851 = vrcp.pop %v2664
    %v2852 = vmul.f32 %v2664, %v2851
    %v2853 = vsub.f32 1.0, %v2852
    %v2854 = vmul.f32 %v2851, %v2853
    %v2855 = vadd.f32 %v2851, %v2854
    %vm2856 = vweird.f32 %v2664
    %vm2857 = vweird.f32 %v2851
    %vm2858 = vmor %vm2856, %vm2857
    %v2859 = vsel %vm2858, %v2851, %v2855
    %v2860 = vand.u32 2147483647, %v2664
    %vm2861 = vcmp.eq.f32.partialorder %v2860, 8.507059e+37
    %v2862 = vand.u32 %v2664, 2147483648
    %v2863 = vor.u32 1.1754944e-38, %v2862
    %v2864 = vsel %vm2861, %v2863, %v2859
    %v2865 = vmul.f32 %v2449, %v2864
    %v2866 = vrcp.pop %v2669
    %v2867 = vmul.f32 %v2669, %v2866
    %v2868 = vsub.f32 1.0, %v2867
    %v2869 = vmul.f32 %v2866, %v2868
    %v2870 = vadd.f32 %v2866, %v2869
    %vm2871 = vweird.f32 %v2669
    %vm2872 = vweird.f32 %v2866
    %vm2873 = vmor %vm2871, %vm2872
    %v2874 = vsel %vm2873, %v2866, %v2870
    %v2875 = vand.u32 2147483647, %v2669
    %vm2876 = vcmp.eq.f32.partialorder %v2875, 8.507059e+37
    %v2877 = vand.u32 %v2669, 2147483648
    %v2878 = vor.u32 1.1754944e-38, %v2877
    %v2879 = vsel %vm2876, %v2878, %v2874
    %v2880 = vmul.f32 %v2456, %v2879
    %v2881 = vrcp.pop %v2674
    %v2882 = vmul.f32 %v2674, %v2881
    %v2883 = vsub.f32 1.0, %v2882
    %v2884 = vmul.f32 %v2881, %v2883
    %v2885 = vadd.f32 %v2881, %v2884
    %vm2886 = vweird.f32 %v2674
    %vm2887 = vweird.f32 %v2881
    %vm2888 = vmor %vm2886, %vm2887
    %v2889 = vsel %vm2888, %v2881, %v2885
    %v2890 = vand.u32 2147483647, %v2674
    %vm2891 = vcmp.eq.f32.partialorder %v2890, 8.507059e+37
    %v2892 = vand.u32 %v2674, 2147483648
    %v2893 = vor.u32 1.1754944e-38, %v2892
    %v2894 = vsel %vm2891, %v2893, %v2889
    %v2895 = vmul.f32 %v2463, %v2894
    %v2896 = vrcp.pop %v2679
    %v2897 = vmul.f32 %v2679, %v2896
    %v2898 = vsub.f32 1.0, %v2897
    %v2899 = vmul.f32 %v2896, %v2898
    %v2900 = vadd.f32 %v2896, %v2899
    %vm2901 = vweird.f32 %v2679
    %vm2902 = vweird.f32 %v2896
    %vm2903 = vmor %vm2901, %vm2902
    %v2904 = vsel %vm2903, %v2896, %v2900
    %v2905 = vand.u32 2147483647, %v2679
    %vm2906 = vcmp.eq.f32.partialorder %v2905, 8.507059e+37
    %v2907 = vand.u32 %v2679, 2147483648
    %v2908 = vor.u32 1.1754944e-38, %v2907
    %v2909 = vsel %vm2906, %v2908, %v2904
    %v2910 = vmul.f32 %v2470, %v2909
    %v2911 = vrcp.pop %v2684
    %v2912 = vmul.f32 %v2684, %v2911
    %v2913 = vsub.f32 1.0, %v2912
    %v2914 = vmul.f32 %v2911, %v2913
    %v2915 = vadd.f32 %v2911, %v2914
    %vm2916 = vweird.f32 %v2684
    %vm2917 = vweird.f32 %v2911
    %vm2918 = vmor %vm2916, %vm2917
    %v2919 = vsel %vm2918, %v2911, %v2915
    %v2920 = vand.u32 2147483647, %v2684
    %vm2921 = vcmp.eq.f32.partialorder %v2920, 8.507059e+37
    %v2922 = vand.u32 %v2684, 2147483648
    %v2923 = vor.u32 1.1754944e-38, %v2922
    %v2924 = vsel %vm2921, %v2923, %v2919
    %v2925 = vmul.f32 %v2477, %v2924
    %v2926 = vrcp.pop %v2689
    %v2927 = vmul.f32 %v2689, %v2926
    %v2928 = vsub.f32 1.0, %v2927
    %v2929 = vmul.f32 %v2926, %v2928
    %v2930 = vadd.f32 %v2926, %v2929
    %vm2931 = vweird.f32 %v2689
    %vm2932 = vweird.f32 %v2926
    %vm2933 = vmor %vm2931, %vm2932
    %v2934 = vsel %vm2933, %v2926, %v2930
    %v2935 = vand.u32 2147483647, %v2689
    %vm2936 = vcmp.eq.f32.partialorder %v2935, 8.507059e+37
    %v2937 = vand.u32 %v2689, 2147483648
    %v2938 = vor.u32 1.1754944e-38, %v2937
    %v2939 = vsel %vm2936, %v2938, %v2934
    %v2940 = vmul.f32 %v2484, %v2939
    %v2941 = vrcp.pop %v2694
    %v2942 = vmul.f32 %v2694, %v2941
    %v2943 = vsub.f32 1.0, %v2942
    %v2944 = vmul.f32 %v2941, %v2943
    %v2945 = vadd.f32 %v2941, %v2944
    %vm2946 = vweird.f32 %v2694
    %vm2947 = vweird.f32 %v2941
    %vm2948 = vmor %vm2946, %vm2947
    %v2949 = vsel %vm2948, %v2941, %v2945
    %v2950 = vand.u32 2147483647, %v2694
    %vm2951 = vcmp.eq.f32.partialorder %v2950, 8.507059e+37
    %v2952 = vand.u32 %v2694, 2147483648
    %v2953 = vor.u32 1.1754944e-38, %v2952
    %v2954 = vsel %vm2951, %v2953, %v2949
    %v2955 = vmul.f32 %v2491, %v2954
    %v2956 = vrcp.pop %v2699
    %v2957 = vmul.f32 %v2699, %v2956
    %v2958 = vsub.f32 1.0, %v2957
    %v2959 = vmul.f32 %v2956, %v2958
    %v2960 = vadd.f32 %v2956, %v2959
    %vm2961 = vweird.f32 %v2699
    %vm2962 = vweird.f32 %v2956
    %vm2963 = vmor %vm2961, %vm2962
    %v2964 = vsel %vm2963, %v2956, %v2960
    %v2965 = vand.u32 2147483647, %v2699
    %vm2966 = vcmp.eq.f32.partialorder %v2965, 8.507059e+37
    %v2967 = vand.u32 %v2699, 2147483648
    %v2968 = vor.u32 1.1754944e-38, %v2967
    %v2969 = vsel %vm2966, %v2968, %v2964
    %v2970 = vmul.f32 %v2498, %v2969
    %v2971 = vrcp.pop %v2704
    %v2972 = vmul.f32 %v2704, %v2971
    %v2973 = vsub.f32 1.0, %v2972
    %v2974 = vmul.f32 %v2971, %v2973
    %v2975 = vadd.f32 %v2971, %v2974
    %vm2976 = vweird.f32 %v2704
    %vm2977 = vweird.f32 %v2971
    %vm2978 = vmor %vm2976, %vm2977
    %v2979 = vsel %vm2978, %v2971, %v2975
    %v2980 = vand.u32 2147483647, %v2704
    %vm2981 = vcmp.eq.f32.partialorder %v2980, 8.507059e+37
    %v2982 = vand.u32 %v2704, 2147483648
    %v2983 = vor.u32 1.1754944e-38, %v2982
    %v2984 = vsel %vm2981, %v2983, %v2979
    %v2985 = vmul.f32 %v2505, %v2984
    %v2986 = vrcp.pop %v2709
    %v2987 = vmul.f32 %v2709, %v2986
    %v2988 = vsub.f32 1.0, %v2987
    %v2989 = vmul.f32 %v2986, %v2988
    %v2990 = vadd.f32 %v2986, %v2989
    %vm2991 = vweird.f32 %v2709
    %vm2992 = vweird.f32 %v2986
    %vm2993 = vmor %vm2991, %vm2992
    %v2994 = vsel %vm2993, %v2986, %v2990
    %v2995 = vand.u32 2147483647, %v2709
    %vm2996 = vcmp.eq.f32.partialorder %v2995, 8.507059e+37
    %v2997 = vand.u32 %v2709, 2147483648
    %v2998 = vor.u32 1.1754944e-38, %v2997
    %v2999 = vsel %vm2996, %v2998, %v2994
    %v3000 = vmul.f32 %v2512, %v2999
    %v3001 = vrcp.pop %v2714
    %v3002 = vmul.f32 %v2714, %v3001
    %v3003 = vsub.f32 1.0, %v3002
    %v3004 = vmul.f32 %v3001, %v3003
    %v3005 = vadd.f32 %v3001, %v3004
    %vm3006 = vweird.f32 %v2714
    %vm3007 = vweird.f32 %v3001
    %vm3008 = vmor %vm3006, %vm3007
    %v3009 = vsel %vm3008, %v3001, %v3005
    %v3010 = vand.u32 2147483647, %v2714
    %vm3011 = vcmp.eq.f32.partialorder %v3010, 8.507059e+37
    %v3012 = vand.u32 %v2714, 2147483648
    %v3013 = vor.u32 1.1754944e-38, %v3012
    %v3014 = vsel %vm3011, %v3013, %v3009
    %v3015 = vmul.f32 %v2519, %v3014
    %v3016 = vrcp.pop %v2719
    %v3017 = vmul.f32 %v2719, %v3016
    %v3018 = vsub.f32 1.0, %v3017
    %v3019 = vmul.f32 %v3016, %v3018
    %v3020 = vadd.f32 %v3016, %v3019
    %vm3021 = vweird.f32 %v2719
    %vm3022 = vweird.f32 %v3016
    %vm3023 = vmor %vm3021, %vm3022
    %v3024 = vsel %vm3023, %v3016, %v3020
    %v3025 = vand.u32 2147483647, %v2719
    %vm3026 = vcmp.eq.f32.partialorder %v3025, 8.507059e+37
    %v3027 = vand.u32 %v2719, 2147483648
    %v3028 = vor.u32 1.1754944e-38, %v3027
    %v3029 = vsel %vm3026, %v3028, %v3024
    %v3030 = vmul.f32 %v2526, %v3029
    %v3031 = vrcp.pop %v2724
    %v3032 = vmul.f32 %v2724, %v3031
    %v3033 = vsub.f32 1.0, %v3032
    %v3034 = vmul.f32 %v3031, %v3033
    %v3035 = vadd.f32 %v3031, %v3034
    %vm3036 = vweird.f32 %v2724
    %vm3037 = vweird.f32 %v3031
    %vm3038 = vmor %vm3036, %vm3037
    %v3039 = vsel %vm3038, %v3031, %v3035
    %v3040 = vand.u32 2147483647, %v2724
    %vm3041 = vcmp.eq.f32.partialorder %v3040, 8.507059e+37
    %v3042 = vand.u32 %v2724, 2147483648
    %v3043 = vor.u32 1.1754944e-38, %v3042
    %v3044 = vsel %vm3041, %v3043, %v3039
    %v3045 = vmul.f32 %v2533, %v3044
    %v3046 = vrcp.pop %v2729
    %v3047 = vmul.f32 %v2729, %v3046
    %v3048 = vsub.f32 1.0, %v3047
    %v3049 = vmul.f32 %v3046, %v3048
    %v3050 = vadd.f32 %v3046, %v3049
    %vm3051 = vweird.f32 %v2729
    %vm3052 = vweird.f32 %v3046
    %vm3053 = vmor %vm3051, %vm3052
    %v3054 = vsel %vm3053, %v3046, %v3050
    %v3055 = vand.u32 2147483647, %v2729
    %vm3056 = vcmp.eq.f32.partialorder %v3055, 8.507059e+37
    %v3057 = vand.u32 %v2729, 2147483648
    %v3058 = vor.u32 1.1754944e-38, %v3057
    %v3059 = vsel %vm3056, %v3058, %v3054
    %v3060 = vmul.f32 %v2540, %v3059
    %v3061 = vrcp.pop %v2734
    %v3062 = vmul.f32 %v2734, %v3061
    %v3063 = vsub.f32 1.0, %v3062
    %v3064 = vmul.f32 %v3061, %v3063
    %v3065 = vadd.f32 %v3061, %v3064
    %vm3066 = vweird.f32 %v2734
    %vm3067 = vweird.f32 %v3061
    %vm3068 = vmor %vm3066, %vm3067
    %v3069 = vsel %vm3068, %v3061, %v3065
    %v3070 = vand.u32 2147483647, %v2734
    %vm3071 = vcmp.eq.f32.partialorder %v3070, 8.507059e+37
    %v3072 = vand.u32 %v2734, 2147483648
    %v3073 = vor.u32 1.1754944e-38, %v3072
    %v3074 = vsel %vm3071, %v3073, %v3069
    %v3075 = vmul.f32 %v2547, %v3074
    %v3076 = vrcp.pop %v2739
    %v3077 = vmul.f32 %v2739, %v3076
    %v3078 = vsub.f32 1.0, %v3077
    %v3079 = vmul.f32 %v3076, %v3078
    %v3080 = vadd.f32 %v3076, %v3079
    %vm3081 = vweird.f32 %v2739
    %vm3082 = vweird.f32 %v3076
    %vm3083 = vmor %vm3081, %vm3082
    %v3084 = vsel %vm3083, %v3076, %v3080
    %v3085 = vand.u32 2147483647, %v2739
    %vm3086 = vcmp.eq.f32.partialorder %v3085, 8.507059e+37
    %v3087 = vand.u32 %v2739, 2147483648
    %v3088 = vor.u32 1.1754944e-38, %v3087
    %v3089 = vsel %vm3086, %v3088, %v3084
    %v3090 = vmul.f32 %v2554, %v3089
    %v3091 = vrcp.pop %v2744
    %v3092 = vmul.f32 %v2744, %v3091
    %v3093 = vsub.f32 1.0, %v3092
    %v3094 = vmul.f32 %v3091, %v3093
    %v3095 = vadd.f32 %v3091, %v3094
    %vm3096 = vweird.f32 %v2744
    %vm3097 = vweird.f32 %v3091
    %vm3098 = vmor %vm3096, %vm3097
    %v3099 = vsel %vm3098, %v3091, %v3095
    %v3100 = vand.u32 2147483647, %v2744
    %vm3101 = vcmp.eq.f32.partialorder %v3100, 8.507059e+37
    %v3102 = vand.u32 %v2744, 2147483648
    %v3103 = vor.u32 1.1754944e-38, %v3102
    %v3104 = vsel %vm3101, %v3103, %v3099
    %v3105 = vmul.f32 %v2561, %v3104
    %v3106 = vrcp.pop %v2749
    %v3107 = vmul.f32 %v2749, %v3106
    %v3108 = vsub.f32 1.0, %v3107
    %v3109 = vmul.f32 %v3106, %v3108
    %v3110 = vadd.f32 %v3106, %v3109
    %vm3111 = vweird.f32 %v2749
    %vm3112 = vweird.f32 %v3106
    %vm3113 = vmor %vm3111, %vm3112
    %v3114 = vsel %vm3113, %v3106, %v3110
    %v3115 = vand.u32 2147483647, %v2749
    %vm3116 = vcmp.eq.f32.partialorder %v3115, 8.507059e+37
    %v3117 = vand.u32 %v2749, 2147483648
    %v3118 = vor.u32 1.1754944e-38, %v3117
    %v3119 = vsel %vm3116, %v3118, %v3114
    %v3120 = vmul.f32 %v2568, %v3119
    %v3121 = vrcp.pop %v2754
    %v3122 = vmul.f32 %v2754, %v3121
    %v3123 = vsub.f32 1.0, %v3122
    %v3124 = vmul.f32 %v3121, %v3123
    %v3125 = vadd.f32 %v3121, %v3124
    %vm3126 = vweird.f32 %v2754
    %vm3127 = vweird.f32 %v3121
    %vm3128 = vmor %vm3126, %vm3127
    %v3129 = vsel %vm3128, %v3121, %v3125
    %v3130 = vand.u32 2147483647, %v2754
    %vm3131 = vcmp.eq.f32.partialorder %v3130, 8.507059e+37
    %v3132 = vand.u32 %v2754, 2147483648
    %v3133 = vor.u32 1.1754944e-38, %v3132
    %v3134 = vsel %vm3131, %v3133, %v3129
    %v3135 = vmul.f32 %v2575, %v3134
    %v3136 = vrcp.pop %v2759
    %v3137 = vmul.f32 %v2759, %v3136
    %v3138 = vsub.f32 1.0, %v3137
    %v3139 = vmul.f32 %v3136, %v3138
    %v3140 = vadd.f32 %v3136, %v3139
    %vm3141 = vweird.f32 %v2759
    %vm3142 = vweird.f32 %v3136
    %vm3143 = vmor %vm3141, %vm3142
    %v3144 = vsel %vm3143, %v3136, %v3140
    %v3145 = vand.u32 2147483647, %v2759
    %vm3146 = vcmp.eq.f32.partialorder %v3145, 8.507059e+37
    %v3147 = vand.u32 %v2759, 2147483648
    %v3148 = vor.u32 1.1754944e-38, %v3147
    %v3149 = vsel %vm3146, %v3148, %v3144
    %v3150 = vmul.f32 %v2582, %v3149
    %v3151 = vrcp.pop %v2764
    %v3152 = vmul.f32 %v2764, %v3151
    %v3153 = vsub.f32 1.0, %v3152
    %v3154 = vmul.f32 %v3151, %v3153
    %v3155 = vadd.f32 %v3151, %v3154
    %vm3156 = vweird.f32 %v2764
    %vm3157 = vweird.f32 %v3151
    %vm3158 = vmor %vm3156, %vm3157
    %v3159 = vsel %vm3158, %v3151, %v3155
    %v3160 = vand.u32 2147483647, %v2764
    %vm3161 = vcmp.eq.f32.partialorder %v3160, 8.507059e+37
    %v3162 = vand.u32 %v2764, 2147483648
    %v3163 = vor.u32 1.1754944e-38, %v3162
    %v3164 = vsel %vm3161, %v3163, %v3159
    %v3165 = vmul.f32 %v2589, %v3164
    %v3166 = vrcp.pop %v2769
    %v3167 = vmul.f32 %v2769, %v3166
    %v3168 = vsub.f32 1.0, %v3167
    %v3169 = vmul.f32 %v3166, %v3168
    %v3170 = vadd.f32 %v3166, %v3169
    %vm3171 = vweird.f32 %v2769
    %vm3172 = vweird.f32 %v3166
    %vm3173 = vmor %vm3171, %vm3172
    %v3174 = vsel %vm3173, %v3166, %v3170
    %v3175 = vand.u32 2147483647, %v2769
    %vm3176 = vcmp.eq.f32.partialorder %v3175, 8.507059e+37
    %v3177 = vand.u32 %v2769, 2147483648
    %v3178 = vor.u32 1.1754944e-38, %v3177
    %v3179 = vsel %vm3176, %v3178, %v3174
    %v3180 = vmul.f32 %v2596, %v3179
    %v3181 = vrcp.pop %v2774
    %v3182 = vmul.f32 %v2774, %v3181
    %v3183 = vsub.f32 1.0, %v3182
    %v3184 = vmul.f32 %v3181, %v3183
    %v3185 = vadd.f32 %v3181, %v3184
    %vm3186 = vweird.f32 %v2774
    %vm3187 = vweird.f32 %v3181
    %vm3188 = vmor %vm3186, %vm3187
    %v3189 = vsel %vm3188, %v3181, %v3185
    %v3190 = vand.u32 2147483647, %v2774
    %vm3191 = vcmp.eq.f32.partialorder %v3190, 8.507059e+37
    %v3192 = vand.u32 %v2774, 2147483648
    %v3193 = vor.u32 1.1754944e-38, %v3192
    %v3194 = vsel %vm3191, %v3193, %v3189
    %v3195 = vmul.f32 %v2603, %v3194
    %v3196 = vrcp.pop %v2779
    %v3197 = vmul.f32 %v2779, %v3196
    %v3198 = vsub.f32 1.0, %v3197
    %v3199 = vmul.f32 %v3196, %v3198
    %v3200 = vadd.f32 %v3196, %v3199
    %vm3201 = vweird.f32 %v2779
    %vm3202 = vweird.f32 %v3196
    %vm3203 = vmor %vm3201, %vm3202
    %v3204 = vsel %vm3203, %v3196, %v3200
    %v3205 = vand.u32 2147483647, %v2779
    %vm3206 = vcmp.eq.f32.partialorder %v3205, 8.507059e+37
    %v3207 = vand.u32 %v2779, 2147483648
    %v3208 = vor.u32 1.1754944e-38, %v3207
    %v3209 = vsel %vm3206, %v3208, %v3204
    %v3210 = vmul.f32 %v2610, %v3209
    %v3211 = vrcp.pop %v2784
    %v3212 = vmul.f32 %v2784, %v3211
    %v3213 = vsub.f32 1.0, %v3212
    %v3214 = vmul.f32 %v3211, %v3213
    %v3215 = vadd.f32 %v3211, %v3214
    %vm3216 = vweird.f32 %v2784
    %vm3217 = vweird.f32 %v3211
    %vm3218 = vmor %vm3216, %vm3217
    %v3219 = vsel %vm3218, %v3211, %v3215
    %v3220 = vand.u32 2147483647, %v2784
    %vm3221 = vcmp.eq.f32.partialorder %v3220, 8.507059e+37
    %v3222 = vand.u32 %v2784, 2147483648
    %v3223 = vor.u32 1.1754944e-38, %v3222
    %v3224 = vsel %vm3221, %v3223, %v3219
    %v3225 = vmul.f32 %v2617, %v3224
    %v3226 = vrcp.pop %v2789
    %v3227 = vmul.f32 %v2789, %v3226
    %v3228 = vsub.f32 1.0, %v3227
    %v3229 = vmul.f32 %v3226, %v3228
    %v3230 = vadd.f32 %v3226, %v3229
    %vm3231 = vweird.f32 %v2789
    %vm3232 = vweird.f32 %v3226
    %vm3233 = vmor %vm3231, %vm3232
    %v3234 = vsel %vm3233, %v3226, %v3230
    %v3235 = vand.u32 2147483647, %v2789
    %vm3236 = vcmp.eq.f32.partialorder %v3235, 8.507059e+37
    %v3237 = vand.u32 %v2789, 2147483648
    %v3238 = vor.u32 1.1754944e-38, %v3237
    %v3239 = vsel %vm3236, %v3238, %v3234
    %v3240 = vmul.f32 %v2624, %v3239
    %v3241 = vrcp.pop %v2794
    %v3242 = vmul.f32 %v2794, %v3241
    %v3243 = vsub.f32 1.0, %v3242
    %v3244 = vmul.f32 %v3241, %v3243
    %v3245 = vadd.f32 %v3241, %v3244
    %vm3246 = vweird.f32 %v2794
    %vm3247 = vweird.f32 %v3241
    %vm3248 = vmor %vm3246, %vm3247
    %v3249 = vsel %vm3248, %v3241, %v3245
    %v3250 = vand.u32 2147483647, %v2794
    %vm3251 = vcmp.eq.f32.partialorder %v3250, 8.507059e+37
    %v3252 = vand.u32 %v2794, 2147483648
    %v3253 = vor.u32 1.1754944e-38, %v3252
    %v3254 = vsel %vm3251, %v3253, %v3249
    %v3255 = vmul.f32 %v2631, %v3254
    %v3256 = vrcp.pop %v2799
    %v3257 = vmul.f32 %v2799, %v3256
    %v3258 = vsub.f32 1.0, %v3257
    %v3259 = vmul.f32 %v3256, %v3258
    %v3260 = vadd.f32 %v3256, %v3259
    %vm3261 = vweird.f32 %v2799
    %vm3262 = vweird.f32 %v3256
    %vm3263 = vmor %vm3261, %vm3262
    %v3264 = vsel %vm3263, %v3256, %v3260
    %v3265 = vand.u32 2147483647, %v2799
    %vm3266 = vcmp.eq.f32.partialorder %v3265, 8.507059e+37
    %v3267 = vand.u32 %v2799, 2147483648
    %v3268 = vor.u32 1.1754944e-38, %v3267
    %v3269 = vsel %vm3266, %v3268, %v3264
    %v3270 = vmul.f32 %v2638, %v3269
    %v3271 = vrcp.pop %v2804
    %v3272 = vmul.f32 %v2804, %v3271
    %v3273 = vsub.f32 1.0, %v3272
    %v3274 = vmul.f32 %v3271, %v3273
    %v3275 = vadd.f32 %v3271, %v3274
    %vm3276 = vweird.f32 %v2804
    %vm3277 = vweird.f32 %v3271
    %vm3278 = vmor %vm3276, %vm3277
    %v3279 = vsel %vm3278, %v3271, %v3275
    %v3280 = vand.u32 2147483647, %v2804
    %vm3281 = vcmp.eq.f32.partialorder %v3280, 8.507059e+37
    %v3282 = vand.u32 %v2804, 2147483648
    %v3283 = vor.u32 1.1754944e-38, %v3282
    %v3284 = vsel %vm3281, %v3283, %v3279
    %v3285 = vmul.f32 %v2645, %v3284
    %v3286 = vperm.slane %v41, 0
    %vm3319 = vcmask 1041409
    %v3320 = vsel %vm3319, %v2835, %v2820
    %vm3321 = vcmask 1042434
    %v3322 = vsel %vm3321, %v2850, %v3320
    %vm3323 = vcmask 1043459
    %v3324 = vsel %vm3323, %v2865, %v3322
    %vm3325 = vcmask 1044484
    %v3326 = vsel %vm3325, %v2880, %v3324
    %vm3327 = vcmask 1045509
    %v3328 = vsel %vm3327, %v2895, %v3326
    %vm3329 = vcmask 1046534
    %v3330 = vsel %vm3329, %v2910, %v3328
    %vm3331 = vcmask 1047559
    %v3332 = vsel %vm3331, %v2925, %v3330
    %v3333 = vsel %vm3319, %v2955, %v2940
    %v3334 = vsel %vm3321, %v2970, %v3333
    %v3335 = vsel %vm3323, %v2985, %v3334
    %v3336 = vsel %vm3325, %v3000, %v3335
    %v3337 = vsel %vm3327, %v3015, %v3336
    %v3338 = vsel %vm3329, %v3030, %v3337
    %v3339 = vsel %vm3331, %v3045, %v3338
    %v3340 = vsel %vm3319, %v3075, %v3060
    %v3341 = vsel %vm3321, %v3090, %v3340
    %v3342 = vsel %vm3323, %v3105, %v3341
    %v3343 = vsel %vm3325, %v3120, %v3342
    %v3344 = vsel %vm3327, %v3135, %v3343
    %v3345 = vsel %vm3329, %v3150, %v3344
    %v3346 = vsel %vm3331, %v3165, %v3345
    %v3347 = vsel %vm3319, %v3195, %v3180
    %v3348 = vsel %vm3321, %v3210, %v3347
    %v3349 = vsel %vm3323, %v3225, %v3348
    %v3350 = vsel %vm3325, %v3240, %v3349
    %v3351 = vsel %vm3327, %v3255, %v3350
    %v3352 = vsel %vm3329, %v3270, %v3351
    %v3353 = vsel %vm3331, %v3285, %v3352
    %v3354 = vsel %vm125, %v3332, 0
    %v3356 = vsel %vm125, %v3339, 0
    %v3358 = vsel %vm125, %v3346, 0
    %v3360 = vsel %vm125, %v3353, 0
    %3362 = vmatpush.msra.mxu0 0.0
    %3363 = vmatpush.msra.mxu0 0.0
    %3364 = vmatpush.msra.mxu0 0.0
    %3365 = vmatpush.msra.mxu0 0.0
    %3366 = vmatpush.msra.mxu0 0.0
    %3367 = vmatpush.msra.mxu0 0.0
    %3368 = vmatpush.msra.mxu0 0.0
    %3369 = vmatpush.msra.mxu0 0.0
    %3370 = vmatpush.msra.mxu0 0.0
    %3371 = vmatpush.msra.mxu0 0.0
    %3372 = vmatpush.msra.mxu0 0.0
    %3373 = vmatpush.msra.mxu0 0.0
    %3374 = vmatpush.msra.mxu0 %v40
    %3375 = vmatpush.msra.mxu0 %v39
    %3376 = vmatpush.msra.mxu0 %v38
    %3377 = vmatpush.msra.mxu0 %v37
    %3378 = vmatmul.f32.gmra.mxu0 %v3354
    %v3379 = vpop.f32.mrf.mxu0
    %v3380 = vadd.f32 %v3286, %v3379
    %3381 = vmatmul.f32.gmra.mxu0 %v3356
    %v3382 = vpop.f32.mrf.mxu0
    %v3383 = vadd.f32 %v3286, %v3382
    %3384 = vmatmul.f32.gmra.mxu0 %v3358
    %v3385 = vpop.f32.mrf.mxu0
    %v3386 = vadd.f32 %v3286, %v3385
    %3387 = vmatmul.f32.gmra.mxu0 %v3360
    %v3388 = vpop.f32.mrf.mxu0
    %v3389 = vadd.f32 %v3286, %v3388
    %3390 = vdwg.mxu0
    %v3391 = vtanh.pop %v3380
    %v3392 = vtanh.pop %v3383
    %v3393 = vtanh.pop %v3386
    %v3394 = vtanh.pop %v3389
    %3396 = vrot.lane.b32.xlu0 %v832, 32
    %v3397 = vpop.permute.xlu0 %3396
    %v3399 = vmul.f32 %v3391, %v3397
    %v3400 = vmul.f32 %v3392, %v3397
    %v3401 = vmul.f32 %v3393, %v3397
    %v3402 = vmul.f32 %v3394, %v3397
    %v3403 = vsel %vm125, %v3399, 0.0
    %3404 = vadd.xlane.f32.xlu0 %v3403
    %v3405 = vpop.xlane.xlu0 %3404
    %v3406 = vsel %vm125, %v3400, 0.0
    %3407 = vadd.xlane.f32.xlu0 %v3406
    %v3408 = vpop.xlane.xlu0 %3407
    %v3409 = vsel %vm125, %v3401, 0.0
    %3410 = vadd.xlane.f32.xlu0 %v3409
    %v3411 = vpop.xlane.xlu0 %3410
    %v3412 = vsel %vm125, %v3402, 0.0
    %3413 = vadd.xlane.f32.xlu0 %v3412
    %v3414 = vpop.xlane.xlu0 %3413
    %3415 = vst [vmem:[#allocation2] sm:$0xff] %v3405
    %3416 = vst [vmem:[#allocation2 + $0x8] sm:$0xff] %v3408
    %3417 = vst [vmem:[#allocation2 + $0x10] sm:$0xff] %v3411
    %3418 = vst [vmem:[#allocation2 + $0x18] sm:$0xff] %v3414
    // Predicated region
    $region14: #{tpu_custom_call.1} parent=1 // pred_check
      _
    $region15: #{tpu_custom_call.1} parent=1 // pred_check_branch
      %3420 = sbr.rel (0) target = $region17
    $region16: #{tpu_custom_call.1} parent=1 // pred_region
      %3422 = vsyncadd [#allocation3], 0
      %s3423 = sshll.u32 [#allocation2], 4
      %s3424 = int_to_ptr.vmem [resolvable:$true] %s3423
      %s3425 = sshll.u32 %s3, 4
      %s3426 = int_to_ptr.hbm [resolvable:$true] %s3425
      %3431 = dma.vmem_to_hbm [thread:$0]  %s3424, 512, %s3426, [#allocation3], 128, 128, 8
    $region17: #{tpu_custom_call.1} parent=1 // pred_fallthru
      _
    // Predicated region
    $region18: #{tpu_custom_call.1} parent=1 // pred_check
      _
    $region19: #{tpu_custom_call.1} parent=1 // pred_check_branch
      %3433 = sbr.rel (0) target = $region21
    $region20: #{tpu_custom_call.1} parent=1 // pred_region
      %3435 = dma.done [#allocation3], 512
    $region21: #{tpu_custom_call.1} parent=1 // pred_fallthru
      _
    %3436 = vsyncpa [#allocation3], 1

</llo_original>
